<compile_context>
chip_gen: v7x
topology: tpu7x:2x2x1
jax: 0.10.0
libtpu: 0.0.40
codegen_flags: <defaults>
</compile_context>

<pallas_src>
import jax
import jax.numpy as jnp
from jax.experimental import pallas as pl
from jax.experimental.pallas import tpu as pltpu

# ---- configuration mirroring `settings` / module __init__ ----
CODE_LEN  = 512          # settings.CODE_LEN (== VIB out_ch = 2 * z_dim)
IMG_DIM   = 512          # VIB_I.fc:  Linear(512, 512)
TXT_DIM   = 768          # VIB_T.fc:  Linear(768, 512)
Z_DIM     = 256
OUT_CH    = 2 * Z_DIM    # 512
CC_HIDDEN = 256          # ChannelCompress hidden width (see TODO above)
H_DIM     = 64           # fcModal.classifier_corre hidden
DOM_HID   = 256          # fcModal.domain_classifier hidden
EVENT     = 8            # settings.event
NUM_CLASS = 2
BN_EPS    = 1e-5
HEAD_PAD  = 128          # lane-dense padding for the small heads
NEG_PAD   = -1e30        # padded-logit bias so padded lanes vanish in softmax

# bias-slab row indices (one (8, 512) f32 slab == one DMA for all small arrays)
ROW_B_FI, ROW_B_CI2, ROW_B_FT, ROW_B_CT2, ROW_W_ATT, ROW_B_D1, ROW_HEADS, ROW_B_ATT = range(8)


def _teacher_kernel(img_ref, txt_ref, w_fi_ref, w_ft_ref, bias_ref,
                    w_ci1_hbm, w_ci2_hbm, w_ct1_hbm, w_ct2_hbm,
                    w_cd1_hbm, w_tail_hbm,
                    label_out, event_out, fa_out, ci_out, ct_out,
                    ci1_buf, ci2_buf, ct1_buf, ct2_buf, cd1_buf, tail_buf,
                    sems):
    f32 = jnp.float32
    bf16 = jnp.bfloat16

    # ---- kick off all later-stage weight DMAs up front (P4-style overlap):
    # only img/txt + w_fi/w_ft + bias slab gate the start of compute; each
    # copy below is waited on right before its matmul.
    cp_ci1 = pltpu.make_async_copy(w_ci1_hbm, ci1_buf, sems.at[0]); cp_ci1.start()
    cp_ct1 = pltpu.make_async_copy(w_ct1_hbm, ct1_buf, sems.at[1]); cp_ct1.start()
    cp_ci2 = pltpu.make_async_copy(w_ci2_hbm, ci2_buf, sems.at[2]); cp_ci2.start()
    cp_ct2 = pltpu.make_async_copy(w_ct2_hbm, ct2_buf, sems.at[3]); cp_ct2.start()
    cp_cd1 = pltpu.make_async_copy(w_cd1_hbm, cd1_buf, sems.at[4]); cp_cd1.start()
    cp_tail = pltpu.make_async_copy(w_tail_hbm, tail_buf, sems.at[5]); cp_tail.start()

    def matmul(x, w):
        # bf16 x bf16 on the MXU, f32 accumulation (one cast per activation).
        return jnp.dot(x.astype(bf16), w, preferred_element_type=f32)

    def bn_train(x):
        # nn.BatchNorm1d in training mode, gamma=1 / beta=0, biased batch
        # statistics.  Single reduction pass: var = E[x^2] - mean^2.
        inv_b = 1.0 / x.shape[0]
        s = jnp.sum(x, axis=0, keepdims=True)
        sq = jnp.sum(x * x, axis=0, keepdims=True)
        mu = s * inv_b
        var = jnp.maximum(sq * inv_b - mu * mu, 0.0)
        return (x - mu) * jax.lax.rsqrt(var + BN_EPS)

    def relu(x):
        return jnp.maximum(x, 0.0)

    def sigmoid(x):
        return 1.0 / (1.0 + jnp.exp(-x))

    def leaky(x):                      # nn.LeakyReLU() default slope
        return jnp.where(x > 0, x, 0.01 * x)

    # ---- bias-slab static slices (lane/sublane aligned) ----
    b_fi  = bias_ref[ROW_B_FI:ROW_B_FI + 1, :]                       # (1, 512)
    b_ci2 = bias_ref[ROW_B_CI2:ROW_B_CI2 + 1, :]
    b_ft  = bias_ref[ROW_B_FT:ROW_B_FT + 1, :]
    b_ct2 = bias_ref[ROW_B_CT2:ROW_B_CT2 + 1, :]
    w_att = bias_ref[ROW_W_ATT:ROW_W_ATT + 1, :]                     # attention weight row
    b_d1  = bias_ref[ROW_B_D1:ROW_B_D1 + 1, 0:DOM_HID]               # (1, 256)
    b_c3  = bias_ref[ROW_HEADS:ROW_HEADS + 1, 0:HEAD_PAD]            # (1, 128)
    b_d2  = bias_ref[ROW_HEADS:ROW_HEADS + 1, HEAD_PAD:2 * HEAD_PAD] # (1, 128), pads = -1e30
    b_att = bias_ref[ROW_B_ATT:ROW_B_ATT + 1, 0:1]                   # (1, 1)

    img = img_ref[...]
    txt = txt_ref[...]

    # ---- VIB_I.fc / VIB_T.fc (weights already VMEM-resident) ----
    v_i = matmul(img, w_fi_ref[...]) + b_fi                          # (B, 512)
    v_t = matmul(txt, w_ft_ref[...]) + b_ft                          # (B, 512)

    # ---- ChannelCompress branches (biases on l1 cancelled by batch-stat BN) ----
    cp_ci1.wait()
    h_i = relu(bn_train(matmul(v_i, ci1_buf[...])))                  # (B, 256)
    cp_ct1.wait()
    h_t = relu(bn_train(matmul(v_t, ct1_buf[...])))                  # (B, 256)
    cp_ci2.wait()
    code_i = matmul(h_i, ci2_buf[...]) + b_ci2                       # (B, 512)
    cp_ct2.wait()
    code_t = matmul(h_t, ct2_buf[...]) + b_ct2                       # (B, 512)
    # (VIB classifier head p_y_given_z is computed in torch but unused/discarded.)

    # ---- Attention_ast + 2-way softmax fusion ----
    # (B,512)@(512,1) replaced by VPU multiply + XLU lane reduction.
    a1 = sigmoid(jnp.sum(code_i * w_att, axis=-1, keepdims=True) + b_att)
    a2 = sigmoid(jnp.sum(code_t * w_att, axis=-1, keepdims=True) + b_att)
    m = jnp.maximum(a1, a2)
    e1 = jnp.exp(a1 - m)
    e2 = jnp.exp(a2 - m)
    inv = 1.0 / (e1 + e2)                                            # exact divide
    f_a = (e1 * inv) * code_i + (e2 * inv) * code_t                  # (B, 512)

    # ---- fused classifier_corre.l1 + domain_classifier.l1 (single F_A matmul) ----
    cp_cd1.wait()
    cd = matmul(f_a, cd1_buf[...])                                   # (B, 128 + 256)
    c1 = relu(bn_train(cd[:, 0:HEAD_PAD]))                           # bias cancelled by BN
    d1 = leaky(cd[:, HEAD_PAD:HEAD_PAD + DOM_HID] + b_d1)            # (B, 256)

    # ---- tail slab: classifier_corre.l2/l3 + domain_classifier.l2 ----
    cp_tail.wait()
    c2 = relu(bn_train(matmul(c1, tail_buf[0:HEAD_PAD, :])))         # (B, 128)
    label_pad = matmul(c2, tail_buf[HEAD_PAD:2 * HEAD_PAD, :]) + b_c3  # (B, 128)

    d2 = matmul(d1, tail_buf[2 * HEAD_PAD:2 * HEAD_PAD + DOM_HID, :]) + b_d2
    d2 = d2 - jnp.max(d2, axis=1, keepdims=True)
    ed = jnp.exp(d2)                                                 # padded lanes -> 0
    event_pad = ed / jnp.sum(ed, axis=1, keepdims=True)              # exact divide

    label_out[...] = label_pad
    event_out[...] = event_pad
    fa_out[...] = f_a
    ci_out[...] = code_i
    ct_out[...] = code_t


def make_params(key):
    """Deterministic parameter init in the consolidated slab layout.

    Weights are (in, out) bf16, zero-padded to lane-dense widths where the
    logical width is < 128.  All small f32 arrays live in one (8, 512) bias
    slab; biases that feed a batch-stats BatchNorm are omitted (cancelled).
    """
    keys = jax.random.split(key, 12)
    f32, bf16 = jnp.float32, jnp.bfloat16

    def dense(k, fi, fo):
        return jax.random.normal(k, (fi, fo), f32) * (float(fi) ** -0.5)

    def pad2(x, rows, cols):
        return jnp.pad(x, ((0, rows - x.shape[0]), (0, cols - x.shape[1])))

    # VIB_I
    w_fi  = dense(keys[0], IMG_DIM, OUT_CH).astype(bf16)
    w_ci1 = dense(keys[1], OUT_CH, CC_HIDDEN).astype(bf16)   # bias dropped (BN)
    w_ci2 = dense(keys[2], CC_HIDDEN, OUT_CH).astype(bf16)
    # VIB_T
    w_ft  = dense(keys[3], TXT_DIM, OUT_CH).astype(bf16)
    w_ct1 = dense(keys[4], OUT_CH, CC_HIDDEN).astype(bf16)   # bias dropped (BN)
    w_ct2 = dense(keys[5], CC_HIDDEN, OUT_CH).astype(bf16)
    # Attention_ast weight stored as a (1, CODE_LEN) f32 row (VPU reduction)
    w_att_row = dense(keys[6], CODE_LEN, 1).reshape(1, CODE_LEN)
    # Fused F_A weight: classifier_corre.l1 (512->64 padded to 128) | domain.l1 (512->256)
    w_c1 = dense(keys[7], CODE_LEN, H_DIM)                   # bias dropped (BN)
    w_d1 = dense(keys[10], CODE_LEN, DOM_HID)
    w_cd1 = jnp.concatenate([pad2(w_c1, CODE_LEN, HEAD_PAD), w_d1], axis=1).astype(bf16)
    # Tail slab: classifier_corre.l2 / l3 and domain.l2 stacked along input dim.
    w_c2 = dense(keys[8], H_DIM, H_DIM)                      # bias dropped (BN)
    w_c3 = dense(keys[9], H_DIM, NUM_CLASS)
    w_d2 = dense(keys[11], DOM_HID, EVENT)
    w_tail = jnp.concatenate([pad2(w_c2, HEAD_PAD, HEAD_PAD),
                              pad2(w_c3, HEAD_PAD, HEAD_PAD),
                              pad2(w_d2, DOM_HID, HEAD_PAD)], axis=0).astype(bf16)

    # ---- bias slab (8, OUT_CH) f32: one DMA for every small f32 array ----
    def row(v):
        v = jnp.asarray(v, f32).reshape(1, -1)
        return jnp.pad(v, ((0, 0), (0, OUT_CH - v.shape[1])))

    b_fi  = jnp.zeros((OUT_CH,), f32)
    b_ci2 = jnp.zeros((OUT_CH,), f32)
    b_ft  = jnp.zeros((OUT_CH,), f32)
    b_ct2 = jnp.zeros((OUT_CH,), f32)
    b_d1  = jnp.zeros((DOM_HID,), f32)
    b_c3  = jnp.zeros((NUM_CLASS,), f32)
    b_att = jnp.zeros((1,), f32)
    # padded event logits get a -1e30 bias so the 128-lane softmax == 8-lane softmax
    b_d2_pad = jnp.concatenate([jnp.zeros((EVENT,), f32),
                                jnp.full((HEAD_PAD - EVENT,), NEG_PAD, f32)])
    heads_row = jnp.concatenate(
        [jnp.pad(b_c3, (0, HEAD_PAD - NUM_CLASS)), b_d2_pad,
         jnp.zeros((OUT_CH - 2 * HEAD_PAD,), f32)]).reshape(1, OUT_CH)

    bias_slab = jnp.concatenate([
        row(b_fi),        # ROW_B_FI
        row(b_ci2),       # ROW_B_CI2
        row(b_ft),        # ROW_B_FT
        row(b_ct2),       # ROW_B_CT2
        w_att_row,        # ROW_W_ATT
        row(b_d1),        # ROW_B_D1
        heads_row,        # ROW_HEADS  [b_c3 | b_d2(+pads) | 0]
        row(b_att),       # ROW_B_ATT
    ], axis=0)

    return (w_fi, w_ft, bias_slab, w_ci1, w_ci2, w_ct1, w_ct2, w_cd1, w_tail)


@jax.jit
def teacher_forward(img, txt, params):
    B = img.shape[0]
    (w_fi, w_ft, bias_slab, w_ci1, w_ci2, w_ct1, w_ct2, w_cd1, w_tail) = params

    vmem = lambda: pl.BlockSpec(memory_space=pltpu.MemorySpace.VMEM)
    hbm = lambda: pl.BlockSpec(memory_space=pl.ANY)   # raw HBM ref, manual DMA in-kernel
    bf16 = jnp.bfloat16

    out_shapes = (
        jax.ShapeDtypeStruct((B, HEAD_PAD), jnp.float32),    # label_pred (lane-padded)
        jax.ShapeDtypeStruct((B, HEAD_PAD), jnp.float32),    # event_pred (lane-padded)
        jax.ShapeDtypeStruct((B, OUT_CH), jnp.float32),      # F_A
        jax.ShapeDtypeStruct((B, OUT_CH), jnp.float32),      # code_I
        jax.ShapeDtypeStruct((B, OUT_CH), jnp.float32),      # code_T
    )

    label_pad, event_pad, f_a, code_i, code_t = pl.pallas_call(
        _teacher_kernel,
        out_shape=out_shapes,
        in_specs=[vmem(), vmem(),                 # img, txt
                  vmem(), vmem(), vmem(),         # w_fi, w_ft, bias_slab (gate compute start)
                  hbm(), hbm(), hbm(), hbm(),     # w_ci1, w_ci2, w_ct1, w_ct2
                  hbm(), hbm()],                  # w_cd1, w_tail
        out_specs=tuple(vmem() for _ in out_shapes),
        scratch_shapes=[
            pltpu.VMEM((OUT_CH, CC_HIDDEN), bf16),                  # ci1_buf
            pltpu.VMEM((CC_HIDDEN, OUT_CH), bf16),                  # ci2_buf
            pltpu.VMEM((OUT_CH, CC_HIDDEN), bf16),                  # ct1_buf
            pltpu.VMEM((CC_HIDDEN, OUT_CH), bf16),                  # ct2_buf
            pltpu.VMEM((CODE_LEN, HEAD_PAD + DOM_HID), bf16),       # cd1_buf
            pltpu.VMEM((2 * HEAD_PAD + DOM_HID, HEAD_PAD), bf16),   # tail_buf
            pltpu.SemaphoreType.DMA((6,)),
        ],
        compiler_params=pltpu.CompilerParams(vmem_limit_bytes=16 * 1024 * 1024),
    )(img, txt, w_fi, w_ft, bias_slab, w_ci1, w_ci2, w_ct1, w_ct2, w_cd1, w_tail)

    # Slice the lane-dense head slabs back to their logical widths (wrapper-side
    # layout plumbing, free relative to the kernel).
    label_pred = label_pad[:, :NUM_CLASS]
    event_pred = event_pad[:, :EVENT]

    # step != 'train' path of teacher_model.forward -> loss = 0
    loss = jnp.float32(0.0)
    # teacher_model returns (loss, label_pred, F_A, code_I, code_T)
    return loss, label_pred, f_a, code_i, code_t, event_pred


if __name__ == "__main__":
    key = jax.random.PRNGKey(0)
    k_img, k_txt, k_par = jax.random.split(key, 3)

    B = 8
    img = jax.random.normal(k_img, (B, IMG_DIM), jnp.float32)
    txt = jax.random.normal(k_txt, (B, TXT_DIM), jnp.float32)
    params = make_params(k_par)

    out = teacher_forward(img, txt, params)
    jax.block_until_ready(out)

    loss, label_pred, f_a, code_i, code_t, event_pred = out
    assert label_pred.shape == (B, NUM_CLASS)
    assert f_a.shape == (B, OUT_CH)
    assert code_i.shape == (B, OUT_CH)
    assert code_t.shape == (B, OUT_CH)
    assert event_pred.shape == (B, EVENT)
    assert bool(jnp.all(jnp.isfinite(label_pred)))
    assert bool(jnp.all(jnp.isfinite(event_pred)))
    assert bool(jnp.all(jnp.isfinite(f_a)))
    # event softmax uses an exact divide now; rows must sum to 1 tightly even
    # though the softmax was computed over the lane-padded 128-wide slab.
    assert bool(jnp.all(jnp.abs(jnp.sum(event_pred, axis=1) - 1.0) < 1e-4))
    print("KERNEL_OK")
</pallas_src>

<mosaic_0001>
module attributes {stable_mosaic.version = 11 : i64} {
  func.func @_teacher_kernel(%arg0: memref<8x512xf32, #tpu.memory_space<vmem>>, %arg1: memref<8x768xf32, #tpu.memory_space<vmem>>, %arg2: memref<512x512xbf16, #tpu.memory_space<vmem>>, %arg3: memref<768x512xbf16, #tpu.memory_space<vmem>>, %arg4: memref<8x512xf32, #tpu.memory_space<vmem>>, %arg5: memref<512x256xbf16, #tpu.memory_space<any>>, %arg6: memref<256x512xbf16, #tpu.memory_space<any>>, %arg7: memref<512x256xbf16, #tpu.memory_space<any>>, %arg8: memref<256x512xbf16, #tpu.memory_space<any>>, %arg9: memref<512x384xbf16, #tpu.memory_space<any>>, %arg10: memref<512x128xbf16, #tpu.memory_space<any>>, %arg11: memref<8x128xf32, #tpu.memory_space<vmem>>, %arg12: memref<8x128xf32, #tpu.memory_space<vmem>>, %arg13: memref<8x512xf32, #tpu.memory_space<vmem>>, %arg14: memref<8x512xf32, #tpu.memory_space<vmem>>, %arg15: memref<8x512xf32, #tpu.memory_space<vmem>>, %arg16: memref<512x256xbf16, #tpu.memory_space<vmem>>, %arg17: memref<256x512xbf16, #tpu.memory_space<vmem>>, %arg18: memref<512x256xbf16, #tpu.memory_space<vmem>>, %arg19: memref<256x512xbf16, #tpu.memory_space<vmem>>, %arg20: memref<512x384xbf16, #tpu.memory_space<vmem>>, %arg21: memref<512x128xbf16, #tpu.memory_space<vmem>>, %arg22: memref<6x!tpu.dma_semaphore, #tpu.memory_space<semaphore_mem>>) attributes {dimension_semantics = [], scalar_prefetch = 0 : i64, scratch_operands = 7 : i64, tpu.core_type = #tpu.core_type<tc>} {
    %c0_i32 = arith.constant 0 : i32
    %0 = tpu.memref_slice %arg22[%c0_i32] : memref<6x!tpu.dma_semaphore, #tpu.memory_space<semaphore_mem>> -> memref<1x!tpu.dma_semaphore, #tpu.memory_space<semaphore_mem>>
    %1 = tpu.memref_squeeze %0 : memref<1x!tpu.dma_semaphore, #tpu.memory_space<semaphore_mem>> -> memref<!tpu.dma_semaphore, #tpu.memory_space<semaphore_mem>>
    tpu.enqueue_dma source(%arg5 : memref<512x256xbf16, #tpu.memory_space<any>>) target(%arg16 : memref<512x256xbf16, #tpu.memory_space<vmem>>) target_semaphore(%1 : memref<!tpu.dma_semaphore, #tpu.memory_space<semaphore_mem>>)
    %c1_i32 = arith.constant 1 : i32
    %2 = tpu.memref_slice %arg22[%c1_i32] : memref<6x!tpu.dma_semaphore, #tpu.memory_space<semaphore_mem>> -> memref<1x!tpu.dma_semaphore, #tpu.memory_space<semaphore_mem>>
    %3 = tpu.memref_squeeze %2 : memref<1x!tpu.dma_semaphore, #tpu.memory_space<semaphore_mem>> -> memref<!tpu.dma_semaphore, #tpu.memory_space<semaphore_mem>>
    tpu.enqueue_dma source(%arg7 : memref<512x256xbf16, #tpu.memory_space<any>>) target(%arg18 : memref<512x256xbf16, #tpu.memory_space<vmem>>) target_semaphore(%3 : memref<!tpu.dma_semaphore, #tpu.memory_space<semaphore_mem>>)
    %c2_i32 = arith.constant 2 : i32
    %4 = tpu.memref_slice %arg22[%c2_i32] : memref<6x!tpu.dma_semaphore, #tpu.memory_space<semaphore_mem>> -> memref<1x!tpu.dma_semaphore, #tpu.memory_space<semaphore_mem>>
    %5 = tpu.memref_squeeze %4 : memref<1x!tpu.dma_semaphore, #tpu.memory_space<semaphore_mem>> -> memref<!tpu.dma_semaphore, #tpu.memory_space<semaphore_mem>>
    tpu.enqueue_dma source(%arg6 : memref<256x512xbf16, #tpu.memory_space<any>>) target(%arg17 : memref<256x512xbf16, #tpu.memory_space<vmem>>) target_semaphore(%5 : memref<!tpu.dma_semaphore, #tpu.memory_space<semaphore_mem>>)
    %c3_i32 = arith.constant 3 : i32
    %6 = tpu.memref_slice %arg22[%c3_i32] : memref<6x!tpu.dma_semaphore, #tpu.memory_space<semaphore_mem>> -> memref<1x!tpu.dma_semaphore, #tpu.memory_space<semaphore_mem>>
    %7 = tpu.memref_squeeze %6 : memref<1x!tpu.dma_semaphore, #tpu.memory_space<semaphore_mem>> -> memref<!tpu.dma_semaphore, #tpu.memory_space<semaphore_mem>>
    tpu.enqueue_dma source(%arg8 : memref<256x512xbf16, #tpu.memory_space<any>>) target(%arg19 : memref<256x512xbf16, #tpu.memory_space<vmem>>) target_semaphore(%7 : memref<!tpu.dma_semaphore, #tpu.memory_space<semaphore_mem>>)
    %c4_i32 = arith.constant 4 : i32
    %8 = tpu.memref_slice %arg22[%c4_i32] : memref<6x!tpu.dma_semaphore, #tpu.memory_space<semaphore_mem>> -> memref<1x!tpu.dma_semaphore, #tpu.memory_space<semaphore_mem>>
    %9 = tpu.memref_squeeze %8 : memref<1x!tpu.dma_semaphore, #tpu.memory_space<semaphore_mem>> -> memref<!tpu.dma_semaphore, #tpu.memory_space<semaphore_mem>>
    tpu.enqueue_dma source(%arg9 : memref<512x384xbf16, #tpu.memory_space<any>>) target(%arg20 : memref<512x384xbf16, #tpu.memory_space<vmem>>) target_semaphore(%9 : memref<!tpu.dma_semaphore, #tpu.memory_space<semaphore_mem>>)
    %c5_i32 = arith.constant 5 : i32
    %10 = tpu.memref_slice %arg22[%c5_i32] : memref<6x!tpu.dma_semaphore, #tpu.memory_space<semaphore_mem>> -> memref<1x!tpu.dma_semaphore, #tpu.memory_space<semaphore_mem>>
    %11 = tpu.memref_squeeze %10 : memref<1x!tpu.dma_semaphore, #tpu.memory_space<semaphore_mem>> -> memref<!tpu.dma_semaphore, #tpu.memory_space<semaphore_mem>>
    tpu.enqueue_dma source(%arg10 : memref<512x128xbf16, #tpu.memory_space<any>>) target(%arg21 : memref<512x128xbf16, #tpu.memory_space<vmem>>) target_semaphore(%11 : memref<!tpu.dma_semaphore, #tpu.memory_space<semaphore_mem>>)
    %c0 = arith.constant 0 : index
    %c0_0 = arith.constant 0 : index
    %12 = vector.load %arg4[%c0, %c0_0] : memref<8x512xf32, #tpu.memory_space<vmem>>, vector<1x512xf32>
    %c1 = arith.constant 1 : index
    %c0_1 = arith.constant 0 : index
    %13 = vector.load %arg4[%c1, %c0_1] : memref<8x512xf32, #tpu.memory_space<vmem>>, vector<1x512xf32>
    %c2 = arith.constant 2 : index
    %c0_2 = arith.constant 0 : index
    %14 = vector.load %arg4[%c2, %c0_2] : memref<8x512xf32, #tpu.memory_space<vmem>>, vector<1x512xf32>
    %c3 = arith.constant 3 : index
    %c0_3 = arith.constant 0 : index
    %15 = vector.load %arg4[%c3, %c0_3] : memref<8x512xf32, #tpu.memory_space<vmem>>, vector<1x512xf32>
    %c4 = arith.constant 4 : index
    %c0_4 = arith.constant 0 : index
    %16 = vector.load %arg4[%c4, %c0_4] : memref<8x512xf32, #tpu.memory_space<vmem>>, vector<1x512xf32>
    %c5 = arith.constant 5 : index
    %c0_5 = arith.constant 0 : index
    %17 = vector.load %arg4[%c5, %c0_5] : memref<8x512xf32, #tpu.memory_space<vmem>>, vector<1x256xf32>
    %c6 = arith.constant 6 : index
    %c0_6 = arith.constant 0 : index
    %18 = vector.load %arg4[%c6, %c0_6] : memref<8x512xf32, #tpu.memory_space<vmem>>, vector<1x128xf32>
    %c6_7 = arith.constant 6 : index
    %c128 = arith.constant 128 : index
    %19 = vector.load %arg4[%c6_7, %c128] : memref<8x512xf32, #tpu.memory_space<vmem>>, vector<1x128xf32>
    %c7 = arith.constant 7 : index
    %c0_8 = arith.constant 0 : index
    %20 = vector.load %arg4[%c7, %c0_8] : memref<8x512xf32, #tpu.memory_space<vmem>>, vector<1x1xf32>
    %c0_9 = arith.constant 0 : index
    %c0_10 = arith.constant 0 : index
    %21 = vector.load %arg0[%c0_9, %c0_10] : memref<8x512xf32, #tpu.memory_space<vmem>>, vector<8x512xf32>
    %c0_11 = arith.constant 0 : index
    %c0_12 = arith.constant 0 : index
    %22 = vector.load %arg1[%c0_11, %c0_12] : memref<8x768xf32, #tpu.memory_space<vmem>>, vector<8x768xf32>
    %c0_13 = arith.constant 0 : index
    %c0_14 = arith.constant 0 : index
    %23 = vector.load %arg2[%c0_13, %c0_14] : memref<512x512xbf16, #tpu.memory_space<vmem>>, vector<512x512xbf16>
    %24 = arith.truncf %21 : vector<8x512xf32> to vector<8x512xbf16>
    %cst = arith.constant dense<0.000000e+00> : vector<8x512xf32>
    %25 = tpu.matmul %24, %23, %cst {dimension_numbers = #tpu.dot_dimension_numbers<[1], [0], [0], [1], [0, 0, 1, 1], [], []>} : vector<8x512xbf16>, vector<512x512xbf16>, vector<8x512xf32> -> vector<8x512xf32>
    %26 = vector.broadcast %12 : vector<1x512xf32> to vector<8x512xf32>
    %27 = arith.addf %25, %26 : vector<8x512xf32>
    %c0_15 = arith.constant 0 : index
    %c0_16 = arith.constant 0 : index
    %28 = vector.load %arg3[%c0_15, %c0_16] : memref<768x512xbf16, #tpu.memory_space<vmem>>, vector<768x512xbf16>
    %29 = arith.truncf %22 : vector<8x768xf32> to vector<8x768xbf16>
    %cst_17 = arith.constant dense<0.000000e+00> : vector<8x512xf32>
    %30 = tpu.matmul %29, %28, %cst_17 {dimension_numbers = #tpu.dot_dimension_numbers<[1], [0], [0], [1], [0, 0, 1, 1], [], []>} : vector<8x768xbf16>, vector<768x512xbf16>, vector<8x512xf32> -> vector<8x512xf32>
    %31 = vector.broadcast %14 : vector<1x512xf32> to vector<8x512xf32>
    %32 = arith.addf %30, %31 : vector<8x512xf32>
    %c0_i32_18 = arith.constant 0 : i32
    %33 = tpu.memref_slice %arg22[%c0_i32_18] : memref<6x!tpu.dma_semaphore, #tpu.memory_space<semaphore_mem>> -> memref<1x!tpu.dma_semaphore, #tpu.memory_space<semaphore_mem>>
    %34 = tpu.memref_squeeze %33 : memref<1x!tpu.dma_semaphore, #tpu.memory_space<semaphore_mem>> -> memref<!tpu.dma_semaphore, #tpu.memory_space<semaphore_mem>>
    tpu.wait_dma2 semaphore(%34 : memref<!tpu.dma_semaphore, #tpu.memory_space<semaphore_mem>>) src(%arg5 : memref<512x256xbf16, #tpu.memory_space<any>>) dst(%arg16 : memref<512x256xbf16, #tpu.memory_space<vmem>>)
    %c0_19 = arith.constant 0 : index
    %c0_20 = arith.constant 0 : index
    %35 = vector.load %arg16[%c0_19, %c0_20] : memref<512x256xbf16, #tpu.memory_space<vmem>>, vector<512x256xbf16>
    %36 = arith.truncf %27 : vector<8x512xf32> to vector<8x512xbf16>
    %cst_21 = arith.constant dense<0.000000e+00> : vector<8x256xf32>
    %37 = tpu.matmul %36, %35, %cst_21 {dimension_numbers = #tpu.dot_dimension_numbers<[1], [0], [0], [1], [0, 0, 1, 1], [], []>} : vector<8x512xbf16>, vector<512x256xbf16>, vector<8x256xf32> -> vector<8x256xf32>
    %cst_22 = arith.constant dense<0.000000e+00> : vector<256xf32>
    %38 = vector.multi_reduction <add>, %37, %cst_22 [0] : vector<8x256xf32> to vector<256xf32>
    %39 = vector.shape_cast %38 : vector<256xf32> to vector<1x256xf32>
    %40 = arith.mulf %37, %37 : vector<8x256xf32>
    %cst_23 = arith.constant dense<0.000000e+00> : vector<256xf32>
    %41 = vector.multi_reduction <add>, %40, %cst_23 [0] : vector<8x256xf32> to vector<256xf32>
    %42 = vector.shape_cast %41 : vector<256xf32> to vector<1x256xf32>
    %cst_24 = arith.constant 1.250000e-01 : f32
    %43 = vector.broadcast %cst_24 : f32 to vector<1x256xf32>
    %44 = arith.mulf %39, %43 : vector<1x256xf32>
    %cst_25 = arith.constant 1.250000e-01 : f32
    %45 = vector.broadcast %cst_25 : f32 to vector<1x256xf32>
    %46 = arith.mulf %42, %45 : vector<1x256xf32>
    %47 = arith.mulf %44, %44 : vector<1x256xf32>
    %48 = arith.subf %46, %47 : vector<1x256xf32>
    %cst_26 = arith.constant 0.000000e+00 : f32
    %49 = vector.broadcast %cst_26 : f32 to vector<1x256xf32>
    %50 = arith.maximumf %48, %49 : vector<1x256xf32>
    %51 = vector.broadcast %44 : vector<1x256xf32> to vector<8x256xf32>
    %52 = arith.subf %37, %51 : vector<8x256xf32>
    %cst_27 = arith.constant 9.99999974E-6 : f32
    %53 = vector.broadcast %cst_27 : f32 to vector<1x256xf32>
    %54 = arith.addf %50, %53 : vector<1x256xf32>
    %55 = math.rsqrt %54 : vector<1x256xf32>
    %56 = vector.broadcast %55 : vector<1x256xf32> to vector<8x256xf32>
    %57 = arith.mulf %52, %56 : vector<8x256xf32>
    %cst_28 = arith.constant 0.000000e+00 : f32
    %58 = vector.broadcast %cst_28 : f32 to vector<8x256xf32>
    %59 = arith.maximumf %57, %58 : vector<8x256xf32>
    %c1_i32_29 = arith.constant 1 : i32
    %60 = tpu.memref_slice %arg22[%c1_i32_29] : memref<6x!tpu.dma_semaphore, #tpu.memory_space<semaphore_mem>> -> memref<1x!tpu.dma_semaphore, #tpu.memory_space<semaphore_mem>>
    %61 = tpu.memref_squeeze %60 : memref<1x!tpu.dma_semaphore, #tpu.memory_space<semaphore_mem>> -> memref<!tpu.dma_semaphore, #tpu.memory_space<semaphore_mem>>
    tpu.wait_dma2 semaphore(%61 : memref<!tpu.dma_semaphore, #tpu.memory_space<semaphore_mem>>) src(%arg7 : memref<512x256xbf16, #tpu.memory_space<any>>) dst(%arg18 : memref<512x256xbf16, #tpu.memory_space<vmem>>)
    %c0_30 = arith.constant 0 : index
    %c0_31 = arith.constant 0 : index
    %62 = vector.load %arg18[%c0_30, %c0_31] : memref<512x256xbf16, #tpu.memory_space<vmem>>, vector<512x256xbf16>
    %63 = arith.truncf %32 : vector<8x512xf32> to vector<8x512xbf16>
    %cst_32 = arith.constant dense<0.000000e+00> : vector<8x256xf32>
    %64 = tpu.matmul %63, %62, %cst_32 {dimension_numbers = #tpu.dot_dimension_numbers<[1], [0], [0], [1], [0, 0, 1, 1], [], []>} : vector<8x512xbf16>, vector<512x256xbf16>, vector<8x256xf32> -> vector<8x256xf32>
    %cst_33 = arith.constant dense<0.000000e+00> : vector<256xf32>
    %65 = vector.multi_reduction <add>, %64, %cst_33 [0] : vector<8x256xf32> to vector<256xf32>
    %66 = vector.shape_cast %65 : vector<256xf32> to vector<1x256xf32>
    %67 = arith.mulf %64, %64 : vector<8x256xf32>
    %cst_34 = arith.constant dense<0.000000e+00> : vector<256xf32>
    %68 = vector.multi_reduction <add>, %67, %cst_34 [0] : vector<8x256xf32> to vector<256xf32>
    %69 = vector.shape_cast %68 : vector<256xf32> to vector<1x256xf32>
    %cst_35 = arith.constant 1.250000e-01 : f32
    %70 = vector.broadcast %cst_35 : f32 to vector<1x256xf32>
    %71 = arith.mulf %66, %70 : vector<1x256xf32>
    %cst_36 = arith.constant 1.250000e-01 : f32
    %72 = vector.broadcast %cst_36 : f32 to vector<1x256xf32>
    %73 = arith.mulf %69, %72 : vector<1x256xf32>
    %74 = arith.mulf %71, %71 : vector<1x256xf32>
    %75 = arith.subf %73, %74 : vector<1x256xf32>
    %cst_37 = arith.constant 0.000000e+00 : f32
    %76 = vector.broadcast %cst_37 : f32 to vector<1x256xf32>
    %77 = arith.maximumf %75, %76 : vector<1x256xf32>
    %78 = vector.broadcast %71 : vector<1x256xf32> to vector<8x256xf32>
    %79 = arith.subf %64, %78 : vector<8x256xf32>
    %cst_38 = arith.constant 9.99999974E-6 : f32
    %80 = vector.broadcast %cst_38 : f32 to vector<1x256xf32>
    %81 = arith.addf %77, %80 : vector<1x256xf32>
    %82 = math.rsqrt %81 : vector<1x256xf32>
    %83 = vector.broadcast %82 : vector<1x256xf32> to vector<8x256xf32>
    %84 = arith.mulf %79, %83 : vector<8x256xf32>
    %cst_39 = arith.constant 0.000000e+00 : f32
    %85 = vector.broadcast %cst_39 : f32 to vector<8x256xf32>
    %86 = arith.maximumf %84, %85 : vector<8x256xf32>
    %c2_i32_40 = arith.constant 2 : i32
    %87 = tpu.memref_slice %arg22[%c2_i32_40] : memref<6x!tpu.dma_semaphore, #tpu.memory_space<semaphore_mem>> -> memref<1x!tpu.dma_semaphore, #tpu.memory_space<semaphore_mem>>
    %88 = tpu.memref_squeeze %87 : memref<1x!tpu.dma_semaphore, #tpu.memory_space<semaphore_mem>> -> memref<!tpu.dma_semaphore, #tpu.memory_space<semaphore_mem>>
    tpu.wait_dma2 semaphore(%88 : memref<!tpu.dma_semaphore, #tpu.memory_space<semaphore_mem>>) src(%arg6 : memref<256x512xbf16, #tpu.memory_space<any>>) dst(%arg17 : memref<256x512xbf16, #tpu.memory_space<vmem>>)
    %c0_41 = arith.constant 0 : index
    %c0_42 = arith.constant 0 : index
    %89 = vector.load %arg17[%c0_41, %c0_42] : memref<256x512xbf16, #tpu.memory_space<vmem>>, vector<256x512xbf16>
    %90 = arith.truncf %59 : vector<8x256xf32> to vector<8x256xbf16>
    %cst_43 = arith.constant dense<0.000000e+00> : vector<8x512xf32>
    %91 = tpu.matmul %90, %89, %cst_43 {dimension_numbers = #tpu.dot_dimension_numbers<[1], [0], [0], [1], [0, 0, 1, 1], [], []>} : vector<8x256xbf16>, vector<256x512xbf16>, vector<8x512xf32> -> vector<8x512xf32>
    %92 = vector.broadcast %13 : vector<1x512xf32> to vector<8x512xf32>
    %93 = arith.addf %91, %92 : vector<8x512xf32>
    %c3_i32_44 = arith.constant 3 : i32
    %94 = tpu.memref_slice %arg22[%c3_i32_44] : memref<6x!tpu.dma_semaphore, #tpu.memory_space<semaphore_mem>> -> memref<1x!tpu.dma_semaphore, #tpu.memory_space<semaphore_mem>>
    %95 = tpu.memref_squeeze %94 : memref<1x!tpu.dma_semaphore, #tpu.memory_space<semaphore_mem>> -> memref<!tpu.dma_semaphore, #tpu.memory_space<semaphore_mem>>
    tpu.wait_dma2 semaphore(%95 : memref<!tpu.dma_semaphore, #tpu.memory_space<semaphore_mem>>) src(%arg8 : memref<256x512xbf16, #tpu.memory_space<any>>) dst(%arg19 : memref<256x512xbf16, #tpu.memory_space<vmem>>)
    %c0_45 = arith.constant 0 : index
    %c0_46 = arith.constant 0 : index
    %96 = vector.load %arg19[%c0_45, %c0_46] : memref<256x512xbf16, #tpu.memory_space<vmem>>, vector<256x512xbf16>
    %97 = arith.truncf %86 : vector<8x256xf32> to vector<8x256xbf16>
    %cst_47 = arith.constant dense<0.000000e+00> : vector<8x512xf32>
    %98 = tpu.matmul %97, %96, %cst_47 {dimension_numbers = #tpu.dot_dimension_numbers<[1], [0], [0], [1], [0, 0, 1, 1], [], []>} : vector<8x256xbf16>, vector<256x512xbf16>, vector<8x512xf32> -> vector<8x512xf32>
    %99 = vector.broadcast %15 : vector<1x512xf32> to vector<8x512xf32>
    %100 = arith.addf %98, %99 : vector<8x512xf32>
    %101 = vector.broadcast %16 : vector<1x512xf32> to vector<8x512xf32>
    %102 = arith.mulf %93, %101 : vector<8x512xf32>
    %cst_48 = arith.constant dense<0.000000e+00> : vector<8xf32>
    %103 = vector.multi_reduction <add>, %102, %cst_48 [1] : vector<8x512xf32> to vector<8xf32>
    %104 = vector.shape_cast %103 : vector<8xf32> to vector<8x1xf32>
    %105 = vector.broadcast %20 : vector<1x1xf32> to vector<8x1xf32>
    %106 = arith.addf %104, %105 : vector<8x1xf32>
    %cst_49 = arith.constant 0.000000e+00 : f32
    %107 = vector.broadcast %cst_49 : f32 to vector<8x1xf32>
    %108 = arith.subf %107, %106 : vector<8x1xf32>
    %109 = math.exp %108 : vector<8x1xf32>
    %cst_50 = arith.constant 1.000000e+00 : f32
    %110 = vector.broadcast %cst_50 : f32 to vector<8x1xf32>
    %111 = arith.addf %110, %109 : vector<8x1xf32>
    %cst_51 = arith.constant 1.000000e+00 : f32
    %112 = vector.broadcast %cst_51 : f32 to vector<8x1xf32>
    %113 = arith.divf %112, %111 : vector<8x1xf32>
    %114 = vector.broadcast %16 : vector<1x512xf32> to vector<8x512xf32>
    %115 = arith.mulf %100, %114 : vector<8x512xf32>
    %cst_52 = arith.constant dense<0.000000e+00> : vector<8xf32>
    %116 = vector.multi_reduction <add>, %115, %cst_52 [1] : vector<8x512xf32> to vector<8xf32>
    %117 = vector.shape_cast %116 : vector<8xf32> to vector<8x1xf32>
    %118 = vector.broadcast %20 : vector<1x1xf32> to vector<8x1xf32>
    %119 = arith.addf %117, %118 : vector<8x1xf32>
    %cst_53 = arith.constant 0.000000e+00 : f32
    %120 = vector.broadcast %cst_53 : f32 to vector<8x1xf32>
    %121 = arith.subf %120, %119 : vector<8x1xf32>
    %122 = math.exp %121 : vector<8x1xf32>
    %cst_54 = arith.constant 1.000000e+00 : f32
    %123 = vector.broadcast %cst_54 : f32 to vector<8x1xf32>
    %124 = arith.addf %123, %122 : vector<8x1xf32>
    %cst_55 = arith.constant 1.000000e+00 : f32
    %125 = vector.broadcast %cst_55 : f32 to vector<8x1xf32>
    %126 = arith.divf %125, %124 : vector<8x1xf32>
    %127 = arith.maximumf %113, %126 : vector<8x1xf32>
    %128 = arith.subf %113, %127 : vector<8x1xf32>
    %129 = math.exp %128 : vector<8x1xf32>
    %130 = arith.subf %126, %127 : vector<8x1xf32>
    %131 = math.exp %130 : vector<8x1xf32>
    %132 = arith.addf %129, %131 : vector<8x1xf32>
    %cst_56 = arith.constant 1.000000e+00 : f32
    %133 = vector.broadcast %cst_56 : f32 to vector<8x1xf32>
    %134 = arith.divf %133, %132 : vector<8x1xf32>
    %135 = arith.mulf %129, %134 : vector<8x1xf32>
    %136 = vector.broadcast %135 : vector<8x1xf32> to vector<8x512xf32>
    %137 = arith.mulf %136, %93 : vector<8x512xf32>
    %138 = arith.mulf %131, %134 : vector<8x1xf32>
    %139 = vector.broadcast %138 : vector<8x1xf32> to vector<8x512xf32>
    %140 = arith.mulf %139, %100 : vector<8x512xf32>
    %141 = arith.addf %137, %140 : vector<8x512xf32>
    %c4_i32_57 = arith.constant 4 : i32
    %142 = tpu.memref_slice %arg22[%c4_i32_57] : memref<6x!tpu.dma_semaphore, #tpu.memory_space<semaphore_mem>> -> memref<1x!tpu.dma_semaphore, #tpu.memory_space<semaphore_mem>>
    %143 = tpu.memref_squeeze %142 : memref<1x!tpu.dma_semaphore, #tpu.memory_space<semaphore_mem>> -> memref<!tpu.dma_semaphore, #tpu.memory_space<semaphore_mem>>
    tpu.wait_dma2 semaphore(%143 : memref<!tpu.dma_semaphore, #tpu.memory_space<semaphore_mem>>) src(%arg9 : memref<512x384xbf16, #tpu.memory_space<any>>) dst(%arg20 : memref<512x384xbf16, #tpu.memory_space<vmem>>)
    %c0_58 = arith.constant 0 : index
    %c0_59 = arith.constant 0 : index
    %144 = vector.load %arg20[%c0_58, %c0_59] : memref<512x384xbf16, #tpu.memory_space<vmem>>, vector<512x384xbf16>
    %145 = arith.truncf %141 : vector<8x512xf32> to vector<8x512xbf16>
    %cst_60 = arith.constant dense<0.000000e+00> : vector<8x384xf32>
    %146 = tpu.matmul %145, %144, %cst_60 {dimension_numbers = #tpu.dot_dimension_numbers<[1], [0], [0], [1], [0, 0, 1, 1], [], []>} : vector<8x512xbf16>, vector<512x384xbf16>, vector<8x384xf32> -> vector<8x384xf32>
    %147 = vector.extract_strided_slice %146 {offsets = [0, 0], sizes = [8, 128], strides = [1, 1]} : vector<8x384xf32> to vector<8x128xf32>
    %cst_61 = arith.constant dense<0.000000e+00> : vector<128xf32>
    %148 = vector.multi_reduction <add>, %147, %cst_61 [0] : vector<8x128xf32> to vector<128xf32>
    %149 = vector.shape_cast %148 : vector<128xf32> to vector<1x128xf32>
    %150 = arith.mulf %147, %147 : vector<8x128xf32>
    %cst_62 = arith.constant dense<0.000000e+00> : vector<128xf32>
    %151 = vector.multi_reduction <add>, %150, %cst_62 [0] : vector<8x128xf32> to vector<128xf32>
    %152 = vector.shape_cast %151 : vector<128xf32> to vector<1x128xf32>
    %cst_63 = arith.constant 1.250000e-01 : f32
    %153 = vector.broadcast %cst_63 : f32 to vector<1x128xf32>
    %154 = arith.mulf %149, %153 : vector<1x128xf32>
    %cst_64 = arith.constant 1.250000e-01 : f32
    %155 = vector.broadcast %cst_64 : f32 to vector<1x128xf32>
    %156 = arith.mulf %152, %155 : vector<1x128xf32>
    %157 = arith.mulf %154, %154 : vector<1x128xf32>
    %158 = arith.subf %156, %157 : vector<1x128xf32>
    %cst_65 = arith.constant 0.000000e+00 : f32
    %159 = vector.broadcast %cst_65 : f32 to vector<1x128xf32>
    %160 = arith.maximumf %158, %159 : vector<1x128xf32>
    %161 = vector.broadcast %154 : vector<1x128xf32> to vector<8x128xf32>
    %162 = arith.subf %147, %161 : vector<8x128xf32>
    %cst_66 = arith.constant 9.99999974E-6 : f32
    %163 = vector.broadcast %cst_66 : f32 to vector<1x128xf32>
    %164 = arith.addf %160, %163 : vector<1x128xf32>
    %165 = math.rsqrt %164 : vector<1x128xf32>
    %166 = vector.broadcast %165 : vector<1x128xf32> to vector<8x128xf32>
    %167 = arith.mulf %162, %166 : vector<8x128xf32>
    %cst_67 = arith.constant 0.000000e+00 : f32
    %168 = vector.broadcast %cst_67 : f32 to vector<8x128xf32>
    %169 = arith.maximumf %167, %168 : vector<8x128xf32>
    %170 = vector.extract_strided_slice %146 {offsets = [0, 128], sizes = [8, 256], strides = [1, 1]} : vector<8x384xf32> to vector<8x256xf32>
    %171 = vector.broadcast %17 : vector<1x256xf32> to vector<8x256xf32>
    %172 = arith.addf %170, %171 : vector<8x256xf32>
    %cst_68 = arith.constant 0.000000e+00 : f32
    %173 = vector.broadcast %cst_68 : f32 to vector<8x256xf32>
    %174 = arith.cmpf ogt, %172, %173 : vector<8x256xf32>
    %cst_69 = arith.constant 0.00999999977 : f32
    %175 = vector.broadcast %cst_69 : f32 to vector<8x256xf32>
    %176 = arith.mulf %175, %172 : vector<8x256xf32>
    %177 = arith.select %174, %172, %176 : vector<8x256xi1>, vector<8x256xf32>
    %c5_i32_70 = arith.constant 5 : i32
    %178 = tpu.memref_slice %arg22[%c5_i32_70] : memref<6x!tpu.dma_semaphore, #tpu.memory_space<semaphore_mem>> -> memref<1x!tpu.dma_semaphore, #tpu.memory_space<semaphore_mem>>
    %179 = tpu.memref_squeeze %178 : memref<1x!tpu.dma_semaphore, #tpu.memory_space<semaphore_mem>> -> memref<!tpu.dma_semaphore, #tpu.memory_space<semaphore_mem>>
    tpu.wait_dma2 semaphore(%179 : memref<!tpu.dma_semaphore, #tpu.memory_space<semaphore_mem>>) src(%arg10 : memref<512x128xbf16, #tpu.memory_space<any>>) dst(%arg21 : memref<512x128xbf16, #tpu.memory_space<vmem>>)
    %c0_71 = arith.constant 0 : index
    %c0_72 = arith.constant 0 : index
    %180 = vector.load %arg21[%c0_71, %c0_72] : memref<512x128xbf16, #tpu.memory_space<vmem>>, vector<128x128xbf16>
    %181 = arith.truncf %169 : vector<8x128xf32> to vector<8x128xbf16>
    %cst_73 = arith.constant dense<0.000000e+00> : vector<8x128xf32>
    %182 = tpu.matmul %181, %180, %cst_73 {dimension_numbers = #tpu.dot_dimension_numbers<[1], [0], [0], [1], [0, 0, 1, 1], [], []>} : vector<8x128xbf16>, vector<128x128xbf16>, vector<8x128xf32> -> vector<8x128xf32>
    %cst_74 = arith.constant dense<0.000000e+00> : vector<128xf32>
    %183 = vector.multi_reduction <add>, %182, %cst_74 [0] : vector<8x128xf32> to vector<128xf32>
    %184 = vector.shape_cast %183 : vector<128xf32> to vector<1x128xf32>
    %185 = arith.mulf %182, %182 : vector<8x128xf32>
    %cst_75 = arith.constant dense<0.000000e+00> : vector<128xf32>
    %186 = vector.multi_reduction <add>, %185, %cst_75 [0] : vector<8x128xf32> to vector<128xf32>
    %187 = vector.shape_cast %186 : vector<128xf32> to vector<1x128xf32>
    %cst_76 = arith.constant 1.250000e-01 : f32
    %188 = vector.broadcast %cst_76 : f32 to vector<1x128xf32>
    %189 = arith.mulf %184, %188 : vector<1x128xf32>
    %cst_77 = arith.constant 1.250000e-01 : f32
    %190 = vector.broadcast %cst_77 : f32 to vector<1x128xf32>
    %191 = arith.mulf %187, %190 : vector<1x128xf32>
    %192 = arith.mulf %189, %189 : vector<1x128xf32>
    %193 = arith.subf %191, %192 : vector<1x128xf32>
    %cst_78 = arith.constant 0.000000e+00 : f32
    %194 = vector.broadcast %cst_78 : f32 to vector<1x128xf32>
    %195 = arith.maximumf %193, %194 : vector<1x128xf32>
    %196 = vector.broadcast %189 : vector<1x128xf32> to vector<8x128xf32>
    %197 = arith.subf %182, %196 : vector<8x128xf32>
    %cst_79 = arith.constant 9.99999974E-6 : f32
    %198 = vector.broadcast %cst_79 : f32 to vector<1x128xf32>
    %199 = arith.addf %195, %198 : vector<1x128xf32>
    %200 = math.rsqrt %199 : vector<1x128xf32>
    %201 = vector.broadcast %200 : vector<1x128xf32> to vector<8x128xf32>
    %202 = arith.mulf %197, %201 : vector<8x128xf32>
    %cst_80 = arith.constant 0.000000e+00 : f32
    %203 = vector.broadcast %cst_80 : f32 to vector<8x128xf32>
    %204 = arith.maximumf %202, %203 : vector<8x128xf32>
    %c128_81 = arith.constant 128 : index
    %c0_82 = arith.constant 0 : index
    %205 = vector.load %arg21[%c128_81, %c0_82] : memref<512x128xbf16, #tpu.memory_space<vmem>>, vector<128x128xbf16>
    %206 = arith.truncf %204 : vector<8x128xf32> to vector<8x128xbf16>
    %cst_83 = arith.constant dense<0.000000e+00> : vector<8x128xf32>
    %207 = tpu.matmul %206, %205, %cst_83 {dimension_numbers = #tpu.dot_dimension_numbers<[1], [0], [0], [1], [0, 0, 1, 1], [], []>} : vector<8x128xbf16>, vector<128x128xbf16>, vector<8x128xf32> -> vector<8x128xf32>
    %208 = vector.broadcast %18 : vector<1x128xf32> to vector<8x128xf32>
    %209 = arith.addf %207, %208 : vector<8x128xf32>
    %c256 = arith.constant 256 : index
    %c0_84 = arith.constant 0 : index
    %210 = vector.load %arg21[%c256, %c0_84] : memref<512x128xbf16, #tpu.memory_space<vmem>>, vector<256x128xbf16>
    %211 = arith.truncf %177 : vector<8x256xf32> to vector<8x256xbf16>
    %cst_85 = arith.constant dense<0.000000e+00> : vector<8x128xf32>
    %212 = tpu.matmul %211, %210, %cst_85 {dimension_numbers = #tpu.dot_dimension_numbers<[1], [0], [0], [1], [0, 0, 1, 1], [], []>} : vector<8x256xbf16>, vector<256x128xbf16>, vector<8x128xf32> -> vector<8x128xf32>
    %213 = vector.broadcast %19 : vector<1x128xf32> to vector<8x128xf32>
    %214 = arith.addf %212, %213 : vector<8x128xf32>
    %cst_86 = arith.constant dense<0xFF800000> : vector<8xf32>
    %215 = vector.multi_reduction <maximumf>, %214, %cst_86 [1] : vector<8x128xf32> to vector<8xf32>
    %216 = vector.shape_cast %215 : vector<8xf32> to vector<8x1xf32>
    %217 = vector.broadcast %216 : vector<8x1xf32> to vector<8x128xf32>
    %218 = arith.subf %214, %217 : vector<8x128xf32>
    %219 = math.exp %218 : vector<8x128xf32>
    %cst_87 = arith.constant dense<0.000000e+00> : vector<8xf32>
    %220 = vector.multi_reduction <add>, %219, %cst_87 [1] : vector<8x128xf32> to vector<8xf32>
    %221 = vector.shape_cast %220 : vector<8xf32> to vector<8x1xf32>
    %222 = vector.broadcast %221 : vector<8x1xf32> to vector<8x128xf32>
    %223 = arith.divf %219, %222 : vector<8x128xf32>
    %c0_88 = arith.constant 0 : index
    %c0_89 = arith.constant 0 : index
    %224 = vector.load %arg11[%c0_88, %c0_89] : memref<8x128xf32, #tpu.memory_space<vmem>>, vector<8x128xf32>
    tpu.vector_store %arg11[%c0_88, %c0_89], %209 {strides = array<i32>} : memref<8x128xf32, #tpu.memory_space<vmem>>, vector<8x128xf32>,
    %c0_90 = arith.constant 0 : index
    %c0_91 = arith.constant 0 : index
    %225 = vector.load %arg12[%c0_90, %c0_91] : memref<8x128xf32, #tpu.memory_space<vmem>>, vector<8x128xf32>
    tpu.vector_store %arg12[%c0_90, %c0_91], %223 {strides = array<i32>} : memref<8x128xf32, #tpu.memory_space<vmem>>, vector<8x128xf32>,
    %c0_92 = arith.constant 0 : index
    %c0_93 = arith.constant 0 : index
    %226 = vector.load %arg13[%c0_92, %c0_93] : memref<8x512xf32, #tpu.memory_space<vmem>>, vector<8x512xf32>
    tpu.vector_store %arg13[%c0_92, %c0_93], %141 {strides = array<i32>} : memref<8x512xf32, #tpu.memory_space<vmem>>, vector<8x512xf32>,
    %c0_94 = arith.constant 0 : index
    %c0_95 = arith.constant 0 : index
    %227 = vector.load %arg14[%c0_94, %c0_95] : memref<8x512xf32, #tpu.memory_space<vmem>>, vector<8x512xf32>
    tpu.vector_store %arg14[%c0_94, %c0_95], %93 {strides = array<i32>} : memref<8x512xf32, #tpu.memory_space<vmem>>, vector<8x512xf32>,
    %c0_96 = arith.constant 0 : index
    %c0_97 = arith.constant 0 : index
    %228 = vector.load %arg15[%c0_96, %c0_97] : memref<8x512xf32, #tpu.memory_space<vmem>>, vector<8x512xf32>
    tpu.vector_store %arg15[%c0_96, %c0_97], %100 {strides = array<i32>} : memref<8x512xf32, #tpu.memory_space<vmem>>, vector<8x512xf32>,
    return
  }
}

</mosaic_0001>

<llo_original>
// kernel: teacher_forward.1
$region0: #{teacher_forward.1}
  #allocation0 [shape = 'u32[]', space=smem, size = 0x4, offset = 0x4, fixed_abs, tag = 'smem constant byte address 0x4 - core index']
  #allocation1 [shape = 'u32[144,128]{1,0:T(1,128)}', space=vmem, size = 0x12000, scoped, tag = 'internal scratch']
  #allocation2 [shape = 'bf16[512,256]{1,0:T(16,128)(2,1)}', space=vmem, size = 0x40000, scoped, tag = 'scratch operand']
  #allocation3 [shape = 'bf16[256,512]{1,0:T(16,128)(2,1)}', space=vmem, size = 0x40000, scoped, tag = 'scratch operand']
  #allocation4 [shape = 'bf16[512,256]{1,0:T(16,128)(2,1)}', space=vmem, size = 0x40000, scoped, tag = 'scratch operand']
  #allocation5 [shape = 'bf16[256,512]{1,0:T(16,128)(2,1)}', space=vmem, size = 0x40000, scoped, tag = 'scratch operand']
  #allocation6 [shape = 'bf16[512,384]{1,0:T(16,128)(2,1)}', space=vmem, size = 0x60000, scoped, tag = 'scratch operand']
  #allocation7 [shape = 'bf16[512,128]{1,0:T(16,128)(2,1)}', space=vmem, size = 0x20000, scoped, tag = 'scratch operand']
  #allocation8 [shape = 's32[6]{0}', space=sflag, size = 0x18, scoped, tag = 'scratch operand']
  #allocation23 [shape = 's32[]', space=sflag, size = 0x4, offset = 0, fixed_abs, tag = 'sflag constant byte address 0x0 - dummy sync flag']
  #allocation25 [shape = 's32[]', space=sflag, size = 0x4, offset = 0, fixed_abs, tag = 'sflag constant byte address 0x0 - dummy sync flag']
  #allocation27 [shape = 's32[]', space=sflag, size = 0x4, offset = 0, fixed_abs, tag = 'sflag constant byte address 0x0 - dummy sync flag']
  #allocation29 [shape = 's32[]', space=sflag, size = 0x4, offset = 0, fixed_abs, tag = 'sflag constant byte address 0x0 - dummy sync flag']
  #allocation31 [shape = 's32[]', space=sflag, size = 0x4, offset = 0, fixed_abs, tag = 'sflag constant byte address 0x0 - dummy sync flag']
  #allocation33 [shape = 's32[]', space=sflag, size = 0x4, offset = 0, fixed_abs, tag = 'sflag constant byte address 0x0 - dummy sync flag']
  #allocation34 [shape = 's32[]', space=sflag, size = 0x4, offset = 0, fixed_abs, tag = 'sflag constant byte address 0x0 - dummy sync flag']
  #allocation35 [shape = 'u32[]', space=smem, size = 0x4, offset = 0x44, fixed_abs, tag = 'smem constant byte address 0x44 - assertion arg 0']
  #allocation36 [shape = 'u32[]', space=smem, size = 0x4, offset = 0x48, fixed_abs, tag = 'smem constant byte address 0x48 - assertion arg 1']
  %s0 = inlined_call_operand.vmem [shape: f32[8,512], index: 0, kind: input, shape index: {}]
  %s1 = inlined_call_operand.hbm [shape: f32[8,768], index: 1, kind: input, shape index: {}]
  %s2 = inlined_call_operand.hbm [shape: bf16[512,512], index: 2, kind: input, shape index: {}]
  %s3 = inlined_call_operand.hbm [shape: bf16[768,512], index: 3, kind: input, shape index: {}]
  %s4 = inlined_call_operand.hbm [shape: f32[8,512], index: 4, kind: input, shape index: {}]
  %s5 = inlined_call_operand.hbm [shape: bf16[512,256], index: 5, kind: input, shape index: {}]
  %s6 = inlined_call_operand.hbm [shape: bf16[256,512], index: 6, kind: input, shape index: {}]
  %s7 = inlined_call_operand.hbm [shape: bf16[512,256], index: 7, kind: input, shape index: {}]
  %s8 = inlined_call_operand.hbm [shape: bf16[256,512], index: 8, kind: input, shape index: {}]
  %s9 = inlined_call_operand.hbm [shape: bf16[512,384], index: 9, kind: input, shape index: {}]
  %s10 = inlined_call_operand.hbm [shape: bf16[512,128], index: 10, kind: input, shape index: {}]
  %s11 = inlined_call_operand.vmem [shape: f32[8,128], index: 11, kind: output, shape index: {0}]
  %s12 = inlined_call_operand.hbm [shape: f32[8,128], index: 12, kind: output, shape index: {1}]
  %s13 = inlined_call_operand.hbm [shape: f32[8,512], index: 13, kind: output, shape index: {2}]
  %s14 = inlined_call_operand.hbm [shape: f32[8,512], index: 14, kind: output, shape index: {3}]
  %s15 = inlined_call_operand.hbm [shape: f32[8,512], index: 15, kind: output, shape index: {4}]
  %16 = xla_tuple %s11, %s12, %s13, %s14, %s15
  %s17 = sld [smem:[#allocation0]]
  $region82: #{teacher_forward.1} parent=0
    _
  %s19 = ssub.s32 1, %s17
  %s20 = scalar_select 0, %s19, %s17
  $region1: #{teacher_forward.1} parent=0
    #allocation9 [shape = 'u8[24576]{0}', space=vmem, size = 0x6000, scoped, tag = 'input window, operand 1, single buffered']
    #allocation10 [shape = 's32[1]{0}', space=sflag, size = 0x4, scoped, tag = 'scoped memory for teacher_forward.1']
    #allocation11 [shape = 's32[1]{0}', space=sflag, size = 0x4, scoped, tag = 'scoped memory for teacher_forward.1']
    #allocation12 [shape = 'u8[524288]{0}', space=vmem, size = 0x80000, scoped, tag = 'input window, operand 2, single buffered']
    #allocation13 [shape = 's32[1]{0}', space=sflag, size = 0x4, scoped, tag = 'scoped memory for teacher_forward.1']
    #allocation14 [shape = 'u8[786432]{0}', space=vmem, size = 0xc0000, scoped, tag = 'input window, operand 3, single buffered']
    #allocation15 [shape = 'u8[16384]{0}', space=vmem, size = 0x4000, scoped, tag = 'input window, operand 4, single buffered']
    #allocation16 [shape = 's32[1]{0}', space=sflag, size = 0x4, scoped, tag = 'scoped memory for teacher_forward.1']
    #allocation17 [shape = 'u8[4096]{0}', space=vmem, size = 0x1000, scoped, tag = 'output window, operand 1, single buffered']
    #allocation18 [shape = 'u8[16384]{0}', space=vmem, size = 0x4000, scoped, tag = 'output window, operand 2, single buffered']
    #allocation19 [shape = 's32[1]{0}', space=sflag, size = 0x4, scoped, tag = 'scoped memory for teacher_forward.1']
    #allocation20 [shape = 'u8[16384]{0}', space=vmem, size = 0x4000, scoped, tag = 'output window, operand 3, single buffered']
    #allocation21 [shape = 'u8[16384]{0}', space=vmem, size = 0x4000, scoped, tag = 'output window, operand 4, single buffered']
    #allocation22 [shape = 's32[1]{0}', space=sflag, size = 0x4, scoped, tag = 'scoped memory for teacher_forward.1']
    #allocation24 [shape = 'u32[9]{0}', space=smem, size = 0x24, scoped, tag = 'DMA stride descriptor']
    #allocation26 [shape = 'u32[9]{0}', space=smem, size = 0x24, scoped, tag = 'DMA stride descriptor']
    #allocation28 [shape = 'u32[9]{0}', space=smem, size = 0x24, scoped, tag = 'DMA stride descriptor']
    #allocation30 [shape = 'u32[9]{0}', space=smem, size = 0x24, scoped, tag = 'DMA stride descriptor']
    #allocation32 [shape = 'u32[9]{0}', space=smem, size = 0x24, scoped, tag = 'DMA stride descriptor']
    %21 = vsyncpa [#allocation10], 0
    %22 = vsyncpa [#allocation13], 0
    %23 = vsyncpa [#allocation16], 0
    %24 = vsyncpa [#allocation11], 0
    %25 = vsyncpa [#allocation19], 0
    %26 = vsyncpa [#allocation22], 0
    // Predicated region
    $region2: #{teacher_forward.1} parent=1 // pred_check
      _
    $region3: #{teacher_forward.1} parent=1 // pred_check_branch
      %28 = sbr.rel (0) target = $region5
    $region4: #{teacher_forward.1} parent=1 // pred_region
      _
    $region5: #{teacher_forward.1} parent=1 // pred_fallthru
      _
    // Predicated region
    $region6: #{teacher_forward.1} parent=1 // pred_check
      _
    $region7: #{teacher_forward.1} parent=1 // pred_check_branch
      %30 = sbr.rel (0) target = $region9
    $region8: #{teacher_forward.1} parent=1 // pred_region
      %s32 = ssub.s32 768, 768
      %33 = vsyncadd [#allocation10], %s32
      %s35 = sshll.u32 [#allocation9], 4
      %s36 = int_to_ptr.vmem [resolvable:$true] %s35
      %38 = dma.hbm_to_vmem [thread:$0]  %s1, 768, %s36, [#allocation10]
    $region9: #{teacher_forward.1} parent=1 // pred_fallthru
      _
    // Predicated region
    $region10: #{teacher_forward.1} parent=1 // pred_check
      _
    $region11: #{teacher_forward.1} parent=1 // pred_check_branch
      %40 = sbr.rel (0) target = $region13
    $region12: #{teacher_forward.1} parent=1 // pred_region
      %s42 = ssub.s32 16384, 16384
      %43 = vsyncadd [#allocation13], %s42
      %s44 = sshll.u32 [#allocation12], 4
      %s45 = int_to_ptr.vmem [resolvable:$true] %s44
      %50 = dma.hbm_to_vmem [thread:$0]  %s2, 16384, %s45, [#allocation13], 256, 256, 16
    $region13: #{teacher_forward.1} parent=1 // pred_fallthru
      _
    // Predicated region
    $region14: #{teacher_forward.1} parent=1 // pred_check
      _
    $region15: #{teacher_forward.1} parent=1 // pred_check_branch
      %52 = sbr.rel (0) target = $region17
    $region16: #{teacher_forward.1} parent=1 // pred_region
      %s54 = ssub.s32 24576, 24576
      %55 = vsyncadd [#allocation13], %s54
      %s56 = sshll.u32 [#allocation14], 4
      %s57 = int_to_ptr.vmem [resolvable:$true] %s56
      %62 = dma.hbm_to_vmem [thread:$0]  %s3, 24576, %s57, [#allocation13], 256, 256, 16
    $region17: #{teacher_forward.1} parent=1 // pred_fallthru
      _
    // Predicated region
    $region18: #{teacher_forward.1} parent=1 // pred_check
      _
    $region19: #{teacher_forward.1} parent=1 // pred_check_branch
      %64 = sbr.rel (0) target = $region21
    $region20: #{teacher_forward.1} parent=1 // pred_region
      %s66 = ssub.s32 512, 512
      %67 = vsyncadd [#allocation16], %s66
      %s69 = sshll.u32 [#allocation15], 4
      %s70 = int_to_ptr.vmem [resolvable:$true] %s69
      %72 = dma.hbm_to_vmem [thread:$0]  %s4, 512, %s70, [#allocation16]
    $region21: #{teacher_forward.1} parent=1 // pred_fallthru
      _
    // Predicated region
    $region22: #{teacher_forward.1} parent=1 // pred_check
      _
    $region23: #{teacher_forward.1} parent=1 // pred_check_branch
      %74 = sbr.rel (0) target = $region25
    $region24: #{teacher_forward.1} parent=1 // pred_region
      %75 = dma.done [#allocation10], 768
    $region25: #{teacher_forward.1} parent=1 // pred_fallthru
      _
    // Predicated region
    $region26: #{teacher_forward.1} parent=1 // pred_check
      _
    $region27: #{teacher_forward.1} parent=1 // pred_check_branch
      %77 = sbr.rel (0) target = $region29
    $region28: #{teacher_forward.1} parent=1 // pred_region
      %78 = dma.done [#allocation13], 16384
    $region29: #{teacher_forward.1} parent=1 // pred_fallthru
      _
    // Predicated region
    $region30: #{teacher_forward.1} parent=1 // pred_check
      _
    $region31: #{teacher_forward.1} parent=1 // pred_check_branch
      %80 = sbr.rel (0) target = $region33
    $region32: #{teacher_forward.1} parent=1 // pred_region
      %81 = dma.done [#allocation13], 24576
    $region33: #{teacher_forward.1} parent=1 // pred_fallthru
      _
    // Predicated region
    $region34: #{teacher_forward.1} parent=1 // pred_check
      _
    $region35: #{teacher_forward.1} parent=1 // pred_check_branch
      %83 = sbr.rel (0) target = $region37
    $region36: #{teacher_forward.1} parent=1 // pred_region
      %84 = dma.done [#allocation16], 512
    $region37: #{teacher_forward.1} parent=1 // pred_fallthru
      _
    %s87 = sshll.u32 1, 14
    %s88 = sxor.u32 4294967295, %s87
    %s90 = sld [smem:[#allocation0]]
    %s91 = sadd.s32 2, %s90
    %s93 = sshll.u32 7, 26
    %s94 = sxor.u32 4294967295, %s93
    %s95 = sand.u32 0, %s94
    %s96 = sshll.u32 %s91, 26
    %s97 = sor.u32 %s95, %s96
    %s98 = sshll.u32 [#allocation2], 4
    %s99 = int_to_ptr.vmem [resolvable:$true] %s98
    %102 = sst [smem:[#allocation24]] 256
    %s103 = scalar_lea.smem [#allocation24], 1
    %104 = sst [smem:[%s103]] 256
    %s105 = scalar_lea.smem [#allocation24], 2
    %106 = sst [smem:[%s105]] 2
    %s107 = scalar_lea.smem [#allocation24], 3
    %108 = sst [smem:[%s107]] 64
    %s109 = scalar_lea.smem [#allocation24], 4
    %110 = sst [smem:[%s109]] 128
    %s111 = scalar_lea.smem [#allocation24], 5
    %112 = sst [smem:[%s111]] 2
    %s113 = scalar_lea.smem [#allocation24], 6
    %114 = sst [smem:[%s113]] 128
    %s115 = scalar_lea.smem [#allocation24], 7
    %116 = sst [smem:[%s115]] 64
    %s117 = scalar_lea.smem [#allocation24], 8
    %118 = sst [smem:[%s117]] 4
    %120 = dma.general %s5, 8192, %s99, [#allocation8], [#allocation23], [#allocation24], %s97, 0
    %s121 = scalar_lea.sflag [#allocation8], 1
    %s123 = sshll.u32 1, 14
    %s124 = sxor.u32 4294967295, %s123
    %s126 = sadd.s32 2, %s90
    %s128 = sshll.u32 7, 26
    %s129 = sxor.u32 4294967295, %s128
    %s130 = sand.u32 0, %s129
    %s131 = sshll.u32 %s126, 26
    %s132 = sor.u32 %s130, %s131
    %s133 = sshll.u32 [#allocation4], 4
    %s134 = int_to_ptr.vmem [resolvable:$true] %s133
    %137 = sst [smem:[#allocation26]] 256
    %s138 = scalar_lea.smem [#allocation26], 1
    %139 = sst [smem:[%s138]] 256
    %s140 = scalar_lea.smem [#allocation26], 2
    %141 = sst [smem:[%s140]] 2
    %s142 = scalar_lea.smem [#allocation26], 3
    %143 = sst [smem:[%s142]] 64
    %s144 = scalar_lea.smem [#allocation26], 4
    %145 = sst [smem:[%s144]] 128
    %s146 = scalar_lea.smem [#allocation26], 5
    %147 = sst [smem:[%s146]] 2
    %s148 = scalar_lea.smem [#allocation26], 6
    %149 = sst [smem:[%s148]] 128
    %s150 = scalar_lea.smem [#allocation26], 7
    %151 = sst [smem:[%s150]] 64
    %s152 = scalar_lea.smem [#allocation26], 8
    %153 = sst [smem:[%s152]] 4
    %155 = dma.general %s7, 8192, %s134, %s121, [#allocation25], [#allocation26], %s132, 0
    %s156 = scalar_lea.sflag [#allocation8], 2
    %s158 = sshll.u32 1, 14
    %s159 = sxor.u32 4294967295, %s158
    %s161 = sadd.s32 2, %s90
    %s163 = sshll.u32 7, 26
    %s164 = sxor.u32 4294967295, %s163
    %s165 = sand.u32 0, %s164
    %s166 = sshll.u32 %s161, 26
    %s167 = sor.u32 %s165, %s166
    %s168 = sshll.u32 [#allocation3], 4
    %s169 = int_to_ptr.vmem [resolvable:$true] %s168
    %172 = sst [smem:[#allocation28]] 512
    %s173 = scalar_lea.smem [#allocation28], 1
    %174 = sst [smem:[%s173]] 512
    %s175 = scalar_lea.smem [#allocation28], 2
    %176 = sst [smem:[%s175]] 4
    %s177 = scalar_lea.smem [#allocation28], 3
    %178 = sst [smem:[%s177]] 64
    %s179 = scalar_lea.smem [#allocation28], 4
    %180 = sst [smem:[%s179]] 128
    %s181 = scalar_lea.smem [#allocation28], 5
    %182 = sst [smem:[%s181]] 2
    %s183 = scalar_lea.smem [#allocation28], 6
    %184 = sst [smem:[%s183]] 256
    %s185 = scalar_lea.smem [#allocation28], 7
    %186 = sst [smem:[%s185]] 64
    %s187 = scalar_lea.smem [#allocation28], 8
    %188 = sst [smem:[%s187]] 4
    %190 = dma.general %s6, 8192, %s169, %s156, [#allocation27], [#allocation28], %s167, 0
    %s191 = scalar_lea.sflag [#allocation8], 3
    %s193 = sshll.u32 1, 14
    %s194 = sxor.u32 4294967295, %s193
    %s196 = sadd.s32 2, %s90
    %s198 = sshll.u32 7, 26
    %s199 = sxor.u32 4294967295, %s198
    %s200 = sand.u32 0, %s199
    %s201 = sshll.u32 %s196, 26
    %s202 = sor.u32 %s200, %s201
    %s203 = sshll.u32 [#allocation5], 4
    %s204 = int_to_ptr.vmem [resolvable:$true] %s203
    %207 = sst [smem:[#allocation30]] 512
    %s208 = scalar_lea.smem [#allocation30], 1
    %209 = sst [smem:[%s208]] 512
    %s210 = scalar_lea.smem [#allocation30], 2
    %211 = sst [smem:[%s210]] 4
    %s212 = scalar_lea.smem [#allocation30], 3
    %213 = sst [smem:[%s212]] 64
    %s214 = scalar_lea.smem [#allocation30], 4
    %215 = sst [smem:[%s214]] 128
    %s216 = scalar_lea.smem [#allocation30], 5
    %217 = sst [smem:[%s216]] 2
    %s218 = scalar_lea.smem [#allocation30], 6
    %219 = sst [smem:[%s218]] 256
    %s220 = scalar_lea.smem [#allocation30], 7
    %221 = sst [smem:[%s220]] 64
    %s222 = scalar_lea.smem [#allocation30], 8
    %223 = sst [smem:[%s222]] 4
    %225 = dma.general %s8, 8192, %s204, %s191, [#allocation29], [#allocation30], %s202, 0
    %s226 = scalar_lea.sflag [#allocation8], 4
    %s228 = sshll.u32 1, 14
    %s229 = sxor.u32 4294967295, %s228
    %s231 = sadd.s32 2, %s90
    %s233 = sshll.u32 7, 26
    %s234 = sxor.u32 4294967295, %s233
    %s235 = sand.u32 0, %s234
    %s236 = sshll.u32 %s231, 26
    %s237 = sor.u32 %s235, %s236
    %s238 = sshll.u32 [#allocation6], 4
    %s239 = int_to_ptr.vmem [resolvable:$true] %s238
    %242 = sst [smem:[#allocation32]] 384
    %s243 = scalar_lea.smem [#allocation32], 1
    %244 = sst [smem:[%s243]] 384
    %s245 = scalar_lea.smem [#allocation32], 2
    %246 = sst [smem:[%s245]] 3
    %s247 = scalar_lea.smem [#allocation32], 3
    %248 = sst [smem:[%s247]] 64
    %s249 = scalar_lea.smem [#allocation32], 4
    %250 = sst [smem:[%s249]] 128
    %s251 = scalar_lea.smem [#allocation32], 5
    %252 = sst [smem:[%s251]] 2
    %s253 = scalar_lea.smem [#allocation32], 6
    %254 = sst [smem:[%s253]] 192
    %s255 = scalar_lea.smem [#allocation32], 7
    %256 = sst [smem:[%s255]] 64
    %s257 = scalar_lea.smem [#allocation32], 8
    %258 = sst [smem:[%s257]] 4
    %260 = dma.general %s9, 12288, %s239, %s226, [#allocation31], [#allocation32], %s237, 0
    %s261 = scalar_lea.sflag [#allocation8], 5
    // Predicated region
    $region38: #{teacher_forward.1} parent=1 // pred_check
      _
    $region39: #{teacher_forward.1} parent=1 // pred_check_branch
      %263 = sbr.rel target = $region41
    $region40: #{teacher_forward.1} parent=1 // pred_region
      %264 = sst [smem:[#allocation35]] [#allocation34]
      %265 = sst [smem:[#allocation36]] [#allocation33]
    $region41: #{teacher_forward.1} parent=1 // pred_fallthru
      _
    %267 = shalt.err (0)
    %s269 = sshll.u32 [#allocation7], 4
    %s270 = int_to_ptr.vmem [resolvable:$true] %s269
    %272 = dma.hbm_to_vmem [thread:$0]  %s10, 4096, %s270, %s261
    %v273 = vld [vmem:[#allocation15] ss:$8 sm:$0xf]
    %s274 = scalar_lea.vmem [#allocation15], 1
    %v275 = vld [vmem:[%s274] ss:$8 sm:$0xf]
    %s276 = scalar_lea.vmem [#allocation15], 2
    %v277 = vld [vmem:[%s276] ss:$8 sm:$0xf]
    %s278 = scalar_lea.vmem [#allocation15], 3
    %v279 = vld [vmem:[%s278] ss:$8 sm:$0xf]
    %s280 = scalar_lea.vmem [#allocation15], 4
    %v281 = vld [vmem:[%s280] ss:$8 sm:$0xf]
    %s282 = scalar_lea.vmem [#allocation15], 5
    %v283 = vld [vmem:[%s282] ss:$8 sm:$0x3]
    %v284 = vld [vmem:[#allocation15 + $0x6] ss:$0 sm:$0xff]
    %v285 = vld [vmem:[#allocation15 + $0xe] ss:$0 sm:$0xff]
    %v286 = vld [vmem:[#allocation15 + $0x7] ss:$0 sm:$0xff]
    %v287 = vld [vmem:[%s0] sm:$0xff]
    %v288 = vld [vmem:[%s0 + $0x8] sm:$0xff]
    %v289 = vld [vmem:[%s0 + $0x10] sm:$0xff]
    %v290 = vld [vmem:[%s0 + $0x18] sm:$0xff]
    %v291 = vld [vmem:[#allocation9] sm:$0xff]
    %v292 = vld [vmem:[#allocation9 + $0x8] sm:$0xff]
    %v293 = vld [vmem:[#allocation9 + $0x10] sm:$0xff]
    %v294 = vld [vmem:[#allocation9 + $0x18] sm:$0xff]
    %v295 = vld [vmem:[#allocation9 + $0x20] sm:$0xff]
    %v296 = vld [vmem:[#allocation9 + $0x28] sm:$0xff]
    %v297 = vld [vmem:[#allocation12] sm:$0xff]
    %v298 = vld [vmem:[#allocation12 + $0x8] sm:$0xff]
    %v299 = vld [vmem:[#allocation12 + $0x10] sm:$0xff]
    %v300 = vld [vmem:[#allocation12 + $0x18] sm:$0xff]
    %v301 = vld [vmem:[#allocation12 + $0x20] sm:$0xff]
    %v302 = vld [vmem:[#allocation12 + $0x28] sm:$0xff]
    %v303 = vld [vmem:[#allocation12 + $0x30] sm:$0xff]
    %v304 = vld [vmem:[#allocation12 + $0x38] sm:$0xff]
    %v305 = vld [vmem:[#allocation12 + $0x40] sm:$0xff]
    %v306 = vld [vmem:[#allocation12 + $0x48] sm:$0xff]
    %v307 = vld [vmem:[#allocation12 + $0x50] sm:$0xff]
    %v308 = vld [vmem:[#allocation12 + $0x58] sm:$0xff]
    %v309 = vld [vmem:[#allocation12 + $0x60] sm:$0xff]
    %v310 = vld [vmem:[#allocation12 + $0x68] sm:$0xff]
    %v311 = vld [vmem:[#allocation12 + $0x70] sm:$0xff]
    %v312 = vld [vmem:[#allocation12 + $0x78] sm:$0xff]
    %v313 = vld [vmem:[#allocation12 + $0x80] sm:$0xff]
    %v314 = vld [vmem:[#allocation12 + $0x88] sm:$0xff]
    %v315 = vld [vmem:[#allocation12 + $0x90] sm:$0xff]
    %v316 = vld [vmem:[#allocation12 + $0x98] sm:$0xff]
    %v317 = vld [vmem:[#allocation12 + $0xa0] sm:$0xff]
    %v318 = vld [vmem:[#allocation12 + $0xa8] sm:$0xff]
    %v319 = vld [vmem:[#allocation12 + $0xb0] sm:$0xff]
    %v320 = vld [vmem:[#allocation12 + $0xb8] sm:$0xff]
    %v321 = vld [vmem:[#allocation12 + $0xc0] sm:$0xff]
    %v322 = vld [vmem:[#allocation12 + $0xc8] sm:$0xff]
    %v323 = vld [vmem:[#allocation12 + $0xd0] sm:$0xff]
    %v324 = vld [vmem:[#allocation12 + $0xd8] sm:$0xff]
    %v325 = vld [vmem:[#allocation12 + $0xe0] sm:$0xff]
    %v326 = vld [vmem:[#allocation12 + $0xe8] sm:$0xff]
    %v327 = vld [vmem:[#allocation12 + $0xf0] sm:$0xff]
    %v328 = vld [vmem:[#allocation12 + $0xf8] sm:$0xff]
    %v329 = vld [vmem:[#allocation12 + $0x100] sm:$0xff]
    %v330 = vld [vmem:[#allocation12 + $0x108] sm:$0xff]
    %v331 = vld [vmem:[#allocation12 + $0x110] sm:$0xff]
    %v332 = vld [vmem:[#allocation12 + $0x118] sm:$0xff]
    %v333 = vld [vmem:[#allocation12 + $0x120] sm:$0xff]
    %v334 = vld [vmem:[#allocation12 + $0x128] sm:$0xff]
    %v335 = vld [vmem:[#allocation12 + $0x130] sm:$0xff]
    %v336 = vld [vmem:[#allocation12 + $0x138] sm:$0xff]
    %v337 = vld [vmem:[#allocation12 + $0x140] sm:$0xff]
    %v338 = vld [vmem:[#allocation12 + $0x148] sm:$0xff]
    %v339 = vld [vmem:[#allocation12 + $0x150] sm:$0xff]
    %v340 = vld [vmem:[#allocation12 + $0x158] sm:$0xff]
    %v341 = vld [vmem:[#allocation12 + $0x160] sm:$0xff]
    %v342 = vld [vmem:[#allocation12 + $0x168] sm:$0xff]
    %v343 = vld [vmem:[#allocation12 + $0x170] sm:$0xff]
    %v344 = vld [vmem:[#allocation12 + $0x178] sm:$0xff]
    %v345 = vld [vmem:[#allocation12 + $0x180] sm:$0xff]
    %v346 = vld [vmem:[#allocation12 + $0x188] sm:$0xff]
    %v347 = vld [vmem:[#allocation12 + $0x190] sm:$0xff]
    %v348 = vld [vmem:[#allocation12 + $0x198] sm:$0xff]
    %v349 = vld [vmem:[#allocation12 + $0x1a0] sm:$0xff]
    %v350 = vld [vmem:[#allocation12 + $0x1a8] sm:$0xff]
    %v351 = vld [vmem:[#allocation12 + $0x1b0] sm:$0xff]
    %v352 = vld [vmem:[#allocation12 + $0x1b8] sm:$0xff]
    %v353 = vld [vmem:[#allocation12 + $0x1c0] sm:$0xff]
    %v354 = vld [vmem:[#allocation12 + $0x1c8] sm:$0xff]
    %v355 = vld [vmem:[#allocation12 + $0x1d0] sm:$0xff]
    %v356 = vld [vmem:[#allocation12 + $0x1d8] sm:$0xff]
    %v357 = vld [vmem:[#allocation12 + $0x1e0] sm:$0xff]
    %v358 = vld [vmem:[#allocation12 + $0x1e8] sm:$0xff]
    %v359 = vld [vmem:[#allocation12 + $0x1f0] sm:$0xff]
    %v360 = vld [vmem:[#allocation12 + $0x1f8] sm:$0xff]
    %v361 = vld [vmem:[#allocation12 + $0x200] sm:$0xff]
    %v362 = vld [vmem:[#allocation12 + $0x208] sm:$0xff]
    %v363 = vld [vmem:[#allocation12 + $0x210] sm:$0xff]
    %v364 = vld [vmem:[#allocation12 + $0x218] sm:$0xff]
    %v365 = vld [vmem:[#allocation12 + $0x220] sm:$0xff]
    %v366 = vld [vmem:[#allocation12 + $0x228] sm:$0xff]
    %v367 = vld [vmem:[#allocation12 + $0x230] sm:$0xff]
    %v368 = vld [vmem:[#allocation12 + $0x238] sm:$0xff]
    %v369 = vld [vmem:[#allocation12 + $0x240] sm:$0xff]
    %v370 = vld [vmem:[#allocation12 + $0x248] sm:$0xff]
    %v371 = vld [vmem:[#allocation12 + $0x250] sm:$0xff]
    %v372 = vld [vmem:[#allocation12 + $0x258] sm:$0xff]
    %v373 = vld [vmem:[#allocation12 + $0x260] sm:$0xff]
    %v374 = vld [vmem:[#allocation12 + $0x268] sm:$0xff]
    %v375 = vld [vmem:[#allocation12 + $0x270] sm:$0xff]
    %v376 = vld [vmem:[#allocation12 + $0x278] sm:$0xff]
    %v377 = vld [vmem:[#allocation12 + $0x280] sm:$0xff]
    %v378 = vld [vmem:[#allocation12 + $0x288] sm:$0xff]
    %v379 = vld [vmem:[#allocation12 + $0x290] sm:$0xff]
    %v380 = vld [vmem:[#allocation12 + $0x298] sm:$0xff]
    %v381 = vld [vmem:[#allocation12 + $0x2a0] sm:$0xff]
    %v382 = vld [vmem:[#allocation12 + $0x2a8] sm:$0xff]
    %v383 = vld [vmem:[#allocation12 + $0x2b0] sm:$0xff]
    %v384 = vld [vmem:[#allocation12 + $0x2b8] sm:$0xff]
    %v385 = vld [vmem:[#allocation12 + $0x2c0] sm:$0xff]
    %v386 = vld [vmem:[#allocation12 + $0x2c8] sm:$0xff]
    %v387 = vld [vmem:[#allocation12 + $0x2d0] sm:$0xff]
    %v388 = vld [vmem:[#allocation12 + $0x2d8] sm:$0xff]
    %v389 = vld [vmem:[#allocation12 + $0x2e0] sm:$0xff]
    %v390 = vld [vmem:[#allocation12 + $0x2e8] sm:$0xff]
    %v391 = vld [vmem:[#allocation12 + $0x2f0] sm:$0xff]
    %v392 = vld [vmem:[#allocation12 + $0x2f8] sm:$0xff]
    %v393 = vld [vmem:[#allocation12 + $0x300] sm:$0xff]
    %v394 = vld [vmem:[#allocation12 + $0x308] sm:$0xff]
    %v395 = vld [vmem:[#allocation12 + $0x310] sm:$0xff]
    %v396 = vld [vmem:[#allocation12 + $0x318] sm:$0xff]
    %v397 = vld [vmem:[#allocation12 + $0x320] sm:$0xff]
    %v398 = vld [vmem:[#allocation12 + $0x328] sm:$0xff]
    %v399 = vld [vmem:[#allocation12 + $0x330] sm:$0xff]
    %v400 = vld [vmem:[#allocation12 + $0x338] sm:$0xff]
    %v401 = vld [vmem:[#allocation12 + $0x340] sm:$0xff]
    %v402 = vld [vmem:[#allocation12 + $0x348] sm:$0xff]
    %v403 = vld [vmem:[#allocation12 + $0x350] sm:$0xff]
    %v404 = vld [vmem:[#allocation12 + $0x358] sm:$0xff]
    %v405 = vld [vmem:[#allocation12 + $0x360] sm:$0xff]
    %v406 = vld [vmem:[#allocation12 + $0x368] sm:$0xff]
    %v407 = vld [vmem:[#allocation12 + $0x370] sm:$0xff]
    %v408 = vld [vmem:[#allocation12 + $0x378] sm:$0xff]
    %v409 = vld [vmem:[#allocation12 + $0x380] sm:$0xff]
    %v410 = vld [vmem:[#allocation12 + $0x388] sm:$0xff]
    %v411 = vld [vmem:[#allocation12 + $0x390] sm:$0xff]
    %v412 = vld [vmem:[#allocation12 + $0x398] sm:$0xff]
    %v413 = vld [vmem:[#allocation12 + $0x3a0] sm:$0xff]
    %v414 = vld [vmem:[#allocation12 + $0x3a8] sm:$0xff]
    %v415 = vld [vmem:[#allocation12 + $0x3b0] sm:$0xff]
    %v416 = vld [vmem:[#allocation12 + $0x3b8] sm:$0xff]
    %v417 = vld [vmem:[#allocation12 + $0x3c0] sm:$0xff]
    %v418 = vld [vmem:[#allocation12 + $0x3c8] sm:$0xff]
    %v419 = vld [vmem:[#allocation12 + $0x3d0] sm:$0xff]
    %v420 = vld [vmem:[#allocation12 + $0x3d8] sm:$0xff]
    %v421 = vld [vmem:[#allocation12 + $0x3e0] sm:$0xff]
    %v422 = vld [vmem:[#allocation12 + $0x3e8] sm:$0xff]
    %v423 = vld [vmem:[#allocation12 + $0x3f0] sm:$0xff]
    %v424 = vld [vmem:[#allocation12 + $0x3f8] sm:$0xff]
    %v425 = vpack.c.bf16 %v287, %v287
    %v426 = vpack.c.bf16 %v288, %v288
    %v427 = vpack.c.bf16 %v289, %v289
    %v428 = vpack.c.bf16 %v290, %v290
    %v430 = vlaneseq
    %v431 = vshrl.u32 %v430, 7
    %v432 = vsub.s32 0, %v431
    %v433 = vrot.slane %v273, %v432
    %v434 = vlaneseq
    %v435 = vshrl.u32 %v434, 7
    %v436 = vsub.s32 1, %v435
    %v437 = vrot.slane %v273, %v436
    %v438 = vlaneseq
    %v439 = vshrl.u32 %v438, 7
    %v440 = vsub.s32 2, %v439
    %v441 = vrot.slane %v273, %v440
    %v442 = vlaneseq
    %v443 = vshrl.u32 %v442, 7
    %v444 = vsub.s32 3, %v443
    %v445 = vrot.slane %v273, %v444
    %v578 = vunpack.c.l.b16 %v297
    %v579 = vunpack.c.h.b16 %v297
    %v580 = vunpack.c.l.b16 %v298
    %v581 = vunpack.c.h.b16 %v298
    %v582 = vunpack.c.l.b16 %v299
    %v583 = vunpack.c.h.b16 %v299
    %v584 = vunpack.c.l.b16 %v300
    %v585 = vunpack.c.h.b16 %v300
    %v586 = vunpack.c.l.b16 %v301
    %v587 = vunpack.c.h.b16 %v301
    %v588 = vunpack.c.l.b16 %v302
    %v589 = vunpack.c.h.b16 %v302
    %v590 = vunpack.c.l.b16 %v303
    %v591 = vunpack.c.h.b16 %v303
    %v592 = vunpack.c.l.b16 %v304
    %v593 = vunpack.c.h.b16 %v304
    %v594 = vunpack.c.l.b16 %v305
    %v595 = vunpack.c.h.b16 %v305
    %v596 = vunpack.c.l.b16 %v306
    %v597 = vunpack.c.h.b16 %v306
    %v598 = vunpack.c.l.b16 %v307
    %v599 = vunpack.c.h.b16 %v307
    %v600 = vunpack.c.l.b16 %v308
    %v601 = vunpack.c.h.b16 %v308
    %v602 = vunpack.c.l.b16 %v309
    %v603 = vunpack.c.h.b16 %v309
    %v604 = vunpack.c.l.b16 %v310
    %v605 = vunpack.c.h.b16 %v310
    %v606 = vunpack.c.l.b16 %v311
    %v607 = vunpack.c.h.b16 %v311
    %v608 = vunpack.c.l.b16 %v312
    %v609 = vunpack.c.h.b16 %v312
    %v610 = vunpack.c.l.b16 %v313
    %v611 = vunpack.c.h.b16 %v313
    %v612 = vunpack.c.l.b16 %v314
    %v613 = vunpack.c.h.b16 %v314
    %v614 = vunpack.c.l.b16 %v315
    %v615 = vunpack.c.h.b16 %v315
    %v616 = vunpack.c.l.b16 %v316
    %v617 = vunpack.c.h.b16 %v316
    %v618 = vunpack.c.l.b16 %v317
    %v619 = vunpack.c.h.b16 %v317
    %v620 = vunpack.c.l.b16 %v318
    %v621 = vunpack.c.h.b16 %v318
    %v622 = vunpack.c.l.b16 %v319
    %v623 = vunpack.c.h.b16 %v319
    %v624 = vunpack.c.l.b16 %v320
    %v625 = vunpack.c.h.b16 %v320
    %v626 = vunpack.c.l.b16 %v321
    %v627 = vunpack.c.h.b16 %v321
    %v628 = vunpack.c.l.b16 %v322
    %v629 = vunpack.c.h.b16 %v322
    %v630 = vunpack.c.l.b16 %v323
    %v631 = vunpack.c.h.b16 %v323
    %v632 = vunpack.c.l.b16 %v324
    %v633 = vunpack.c.h.b16 %v324
    %v634 = vunpack.c.l.b16 %v325
    %v635 = vunpack.c.h.b16 %v325
    %v636 = vunpack.c.l.b16 %v326
    %v637 = vunpack.c.h.b16 %v326
    %v638 = vunpack.c.l.b16 %v327
    %v639 = vunpack.c.h.b16 %v327
    %v640 = vunpack.c.l.b16 %v328
    %v641 = vunpack.c.h.b16 %v328
    %v642 = vunpack.c.l.b16 %v329
    %v643 = vunpack.c.h.b16 %v329
    %v644 = vunpack.c.l.b16 %v330
    %v645 = vunpack.c.h.b16 %v330
    %v646 = vunpack.c.l.b16 %v331
    %v647 = vunpack.c.h.b16 %v331
    %v648 = vunpack.c.l.b16 %v332
    %v649 = vunpack.c.h.b16 %v332
    %v650 = vunpack.c.l.b16 %v333
    %v651 = vunpack.c.h.b16 %v333
    %v652 = vunpack.c.l.b16 %v334
    %v653 = vunpack.c.h.b16 %v334
    %v654 = vunpack.c.l.b16 %v335
    %v655 = vunpack.c.h.b16 %v335
    %v656 = vunpack.c.l.b16 %v336
    %v657 = vunpack.c.h.b16 %v336
    %v658 = vunpack.c.l.b16 %v337
    %v659 = vunpack.c.h.b16 %v337
    %v660 = vunpack.c.l.b16 %v338
    %v661 = vunpack.c.h.b16 %v338
    %v662 = vunpack.c.l.b16 %v339
    %v663 = vunpack.c.h.b16 %v339
    %v664 = vunpack.c.l.b16 %v340
    %v665 = vunpack.c.h.b16 %v340
    %v666 = vunpack.c.l.b16 %v341
    %v667 = vunpack.c.h.b16 %v341
    %v668 = vunpack.c.l.b16 %v342
    %v669 = vunpack.c.h.b16 %v342
    %v670 = vunpack.c.l.b16 %v343
    %v671 = vunpack.c.h.b16 %v343
    %v672 = vunpack.c.l.b16 %v344
    %v673 = vunpack.c.h.b16 %v344
    %v674 = vunpack.c.l.b16 %v345
    %v675 = vunpack.c.h.b16 %v345
    %v676 = vunpack.c.l.b16 %v346
    %v677 = vunpack.c.h.b16 %v346
    %v678 = vunpack.c.l.b16 %v347
    %v679 = vunpack.c.h.b16 %v347
    %v680 = vunpack.c.l.b16 %v348
    %v681 = vunpack.c.h.b16 %v348
    %v682 = vunpack.c.l.b16 %v349
    %v683 = vunpack.c.h.b16 %v349
    %v684 = vunpack.c.l.b16 %v350
    %v685 = vunpack.c.h.b16 %v350
    %v686 = vunpack.c.l.b16 %v351
    %v687 = vunpack.c.h.b16 %v351
    %v688 = vunpack.c.l.b16 %v352
    %v689 = vunpack.c.h.b16 %v352
    %v690 = vunpack.c.l.b16 %v353
    %v691 = vunpack.c.h.b16 %v353
    %v692 = vunpack.c.l.b16 %v354
    %v693 = vunpack.c.h.b16 %v354
    %v694 = vunpack.c.l.b16 %v355
    %v695 = vunpack.c.h.b16 %v355
    %v696 = vunpack.c.l.b16 %v356
    %v697 = vunpack.c.h.b16 %v356
    %v698 = vunpack.c.l.b16 %v357
    %v699 = vunpack.c.h.b16 %v357
    %v700 = vunpack.c.l.b16 %v358
    %v701 = vunpack.c.h.b16 %v358
    %v702 = vunpack.c.l.b16 %v359
    %v703 = vunpack.c.h.b16 %v359
    %v704 = vunpack.c.l.b16 %v360
    %v705 = vunpack.c.h.b16 %v360
    %v706 = vunpack.c.l.b16 %v361
    %v707 = vunpack.c.h.b16 %v361
    %v708 = vunpack.c.l.b16 %v362
    %v709 = vunpack.c.h.b16 %v362
    %v710 = vunpack.c.l.b16 %v363
    %v711 = vunpack.c.h.b16 %v363
    %v712 = vunpack.c.l.b16 %v364
    %v713 = vunpack.c.h.b16 %v364
    %v714 = vunpack.c.l.b16 %v365
    %v715 = vunpack.c.h.b16 %v365
    %v716 = vunpack.c.l.b16 %v366
    %v717 = vunpack.c.h.b16 %v366
    %v718 = vunpack.c.l.b16 %v367
    %v719 = vunpack.c.h.b16 %v367
    %v720 = vunpack.c.l.b16 %v368
    %v721 = vunpack.c.h.b16 %v368
    %v722 = vunpack.c.l.b16 %v369
    %v723 = vunpack.c.h.b16 %v369
    %v724 = vunpack.c.l.b16 %v370
    %v725 = vunpack.c.h.b16 %v370
    %v726 = vunpack.c.l.b16 %v371
    %v727 = vunpack.c.h.b16 %v371
    %v728 = vunpack.c.l.b16 %v372
    %v729 = vunpack.c.h.b16 %v372
    %v730 = vunpack.c.l.b16 %v373
    %v731 = vunpack.c.h.b16 %v373
    %v732 = vunpack.c.l.b16 %v374
    %v733 = vunpack.c.h.b16 %v374
    %v734 = vunpack.c.l.b16 %v375
    %v735 = vunpack.c.h.b16 %v375
    %v736 = vunpack.c.l.b16 %v376
    %v737 = vunpack.c.h.b16 %v376
    %v738 = vunpack.c.l.b16 %v377
    %v739 = vunpack.c.h.b16 %v377
    %v740 = vunpack.c.l.b16 %v378
    %v741 = vunpack.c.h.b16 %v378
    %v742 = vunpack.c.l.b16 %v379
    %v743 = vunpack.c.h.b16 %v379
    %v744 = vunpack.c.l.b16 %v380
    %v745 = vunpack.c.h.b16 %v380
    %v746 = vunpack.c.l.b16 %v381
    %v747 = vunpack.c.h.b16 %v381
    %v748 = vunpack.c.l.b16 %v382
    %v749 = vunpack.c.h.b16 %v382
    %v750 = vunpack.c.l.b16 %v383
    %v751 = vunpack.c.h.b16 %v383
    %v752 = vunpack.c.l.b16 %v384
    %v753 = vunpack.c.h.b16 %v384
    %v754 = vunpack.c.l.b16 %v385
    %v755 = vunpack.c.h.b16 %v385
    %v756 = vunpack.c.l.b16 %v386
    %v757 = vunpack.c.h.b16 %v386
    %v758 = vunpack.c.l.b16 %v387
    %v759 = vunpack.c.h.b16 %v387
    %v760 = vunpack.c.l.b16 %v388
    %v761 = vunpack.c.h.b16 %v388
    %v762 = vunpack.c.l.b16 %v389
    %v763 = vunpack.c.h.b16 %v389
    %v764 = vunpack.c.l.b16 %v390
    %v765 = vunpack.c.h.b16 %v390
    %v766 = vunpack.c.l.b16 %v391
    %v767 = vunpack.c.h.b16 %v391
    %v768 = vunpack.c.l.b16 %v392
    %v769 = vunpack.c.h.b16 %v392
    %v770 = vunpack.c.l.b16 %v393
    %v771 = vunpack.c.h.b16 %v393
    %v772 = vunpack.c.l.b16 %v394
    %v773 = vunpack.c.h.b16 %v394
    %v774 = vunpack.c.l.b16 %v395
    %v775 = vunpack.c.h.b16 %v395
    %v776 = vunpack.c.l.b16 %v396
    %v777 = vunpack.c.h.b16 %v396
    %v778 = vunpack.c.l.b16 %v397
    %v779 = vunpack.c.h.b16 %v397
    %v780 = vunpack.c.l.b16 %v398
    %v781 = vunpack.c.h.b16 %v398
    %v782 = vunpack.c.l.b16 %v399
    %v783 = vunpack.c.h.b16 %v399
    %v784 = vunpack.c.l.b16 %v400
    %v785 = vunpack.c.h.b16 %v400
    %v786 = vunpack.c.l.b16 %v401
    %v787 = vunpack.c.h.b16 %v401
    %v788 = vunpack.c.l.b16 %v402
    %v789 = vunpack.c.h.b16 %v402
    %v790 = vunpack.c.l.b16 %v403
    %v791 = vunpack.c.h.b16 %v403
    %v792 = vunpack.c.l.b16 %v404
    %v793 = vunpack.c.h.b16 %v404
    %v794 = vunpack.c.l.b16 %v405
    %v795 = vunpack.c.h.b16 %v405
    %v796 = vunpack.c.l.b16 %v406
    %v797 = vunpack.c.h.b16 %v406
    %v798 = vunpack.c.l.b16 %v407
    %v799 = vunpack.c.h.b16 %v407
    %v800 = vunpack.c.l.b16 %v408
    %v801 = vunpack.c.h.b16 %v408
    %v802 = vunpack.c.l.b16 %v409
    %v803 = vunpack.c.h.b16 %v409
    %v804 = vunpack.c.l.b16 %v410
    %v805 = vunpack.c.h.b16 %v410
    %v806 = vunpack.c.l.b16 %v411
    %v807 = vunpack.c.h.b16 %v411
    %v808 = vunpack.c.l.b16 %v412
    %v809 = vunpack.c.h.b16 %v412
    %v810 = vunpack.c.l.b16 %v413
    %v811 = vunpack.c.h.b16 %v413
    %v812 = vunpack.c.l.b16 %v414
    %v813 = vunpack.c.h.b16 %v414
    %v814 = vunpack.c.l.b16 %v415
    %v815 = vunpack.c.h.b16 %v415
    %v816 = vunpack.c.l.b16 %v416
    %v817 = vunpack.c.h.b16 %v416
    %v818 = vunpack.c.l.b16 %v417
    %v819 = vunpack.c.h.b16 %v417
    %v820 = vunpack.c.l.b16 %v418
    %v821 = vunpack.c.h.b16 %v418
    %v822 = vunpack.c.l.b16 %v419
    %v823 = vunpack.c.h.b16 %v419
    %v824 = vunpack.c.l.b16 %v420
    %v825 = vunpack.c.h.b16 %v420
    %v826 = vunpack.c.l.b16 %v421
    %v827 = vunpack.c.h.b16 %v421
    %v828 = vunpack.c.l.b16 %v422
    %v829 = vunpack.c.h.b16 %v422
    %v830 = vunpack.c.l.b16 %v423
    %v831 = vunpack.c.h.b16 %v423
    %v832 = vunpack.c.l.b16 %v424
    %v833 = vunpack.c.h.b16 %v424
    %v834 = vpack.c.b16 %v582, %v578
    %v835 = vpack.c.b16 %v583, %v579
    %v836 = vpack.c.b16 %v584, %v580
    %v837 = vpack.c.b16 %v585, %v581
    %v838 = vpack.c.b16 %v590, %v586
    %v839 = vpack.c.b16 %v591, %v587
    %v840 = vpack.c.b16 %v592, %v588
    %v841 = vpack.c.b16 %v593, %v589
    %v842 = vpack.c.b16 %v598, %v594
    %v843 = vpack.c.b16 %v599, %v595
    %v844 = vpack.c.b16 %v600, %v596
    %v845 = vpack.c.b16 %v601, %v597
    %v846 = vpack.c.b16 %v606, %v602
    %v847 = vpack.c.b16 %v607, %v603
    %v848 = vpack.c.b16 %v608, %v604
    %v849 = vpack.c.b16 %v609, %v605
    %v850 = vpack.c.b16 %v614, %v610
    %v851 = vpack.c.b16 %v615, %v611
    %v852 = vpack.c.b16 %v616, %v612
    %v853 = vpack.c.b16 %v617, %v613
    %v854 = vpack.c.b16 %v622, %v618
    %v855 = vpack.c.b16 %v623, %v619
    %v856 = vpack.c.b16 %v624, %v620
    %v857 = vpack.c.b16 %v625, %v621
    %v858 = vpack.c.b16 %v630, %v626
    %v859 = vpack.c.b16 %v631, %v627
    %v860 = vpack.c.b16 %v632, %v628
    %v861 = vpack.c.b16 %v633, %v629
    %v862 = vpack.c.b16 %v638, %v634
    %v863 = vpack.c.b16 %v639, %v635
    %v864 = vpack.c.b16 %v640, %v636
    %v865 = vpack.c.b16 %v641, %v637
    %v866 = vpack.c.b16 %v646, %v642
    %v867 = vpack.c.b16 %v647, %v643
    %v868 = vpack.c.b16 %v648, %v644
    %v869 = vpack.c.b16 %v649, %v645
    %v870 = vpack.c.b16 %v654, %v650
    %v871 = vpack.c.b16 %v655, %v651
    %v872 = vpack.c.b16 %v656, %v652
    %v873 = vpack.c.b16 %v657, %v653
    %v874 = vpack.c.b16 %v662, %v658
    %v875 = vpack.c.b16 %v663, %v659
    %v876 = vpack.c.b16 %v664, %v660
    %v877 = vpack.c.b16 %v665, %v661
    %v878 = vpack.c.b16 %v670, %v666
    %v879 = vpack.c.b16 %v671, %v667
    %v880 = vpack.c.b16 %v672, %v668
    %v881 = vpack.c.b16 %v673, %v669
    %v882 = vpack.c.b16 %v678, %v674
    %v883 = vpack.c.b16 %v679, %v675
    %v884 = vpack.c.b16 %v680, %v676
    %v885 = vpack.c.b16 %v681, %v677
    %v886 = vpack.c.b16 %v686, %v682
    %v887 = vpack.c.b16 %v687, %v683
    %v888 = vpack.c.b16 %v688, %v684
    %v889 = vpack.c.b16 %v689, %v685
    %v890 = vpack.c.b16 %v694, %v690
    %v891 = vpack.c.b16 %v695, %v691
    %v892 = vpack.c.b16 %v696, %v692
    %v893 = vpack.c.b16 %v697, %v693
    %v894 = vpack.c.b16 %v702, %v698
    %v895 = vpack.c.b16 %v703, %v699
    %v896 = vpack.c.b16 %v704, %v700
    %v897 = vpack.c.b16 %v705, %v701
    %v898 = vpack.c.b16 %v710, %v706
    %v899 = vpack.c.b16 %v711, %v707
    %v900 = vpack.c.b16 %v712, %v708
    %v901 = vpack.c.b16 %v713, %v709
    %v902 = vpack.c.b16 %v718, %v714
    %v903 = vpack.c.b16 %v719, %v715
    %v904 = vpack.c.b16 %v720, %v716
    %v905 = vpack.c.b16 %v721, %v717
    %v906 = vpack.c.b16 %v726, %v722
    %v907 = vpack.c.b16 %v727, %v723
    %v908 = vpack.c.b16 %v728, %v724
    %v909 = vpack.c.b16 %v729, %v725
    %v910 = vpack.c.b16 %v734, %v730
    %v911 = vpack.c.b16 %v735, %v731
    %v912 = vpack.c.b16 %v736, %v732
    %v913 = vpack.c.b16 %v737, %v733
    %v914 = vpack.c.b16 %v742, %v738
    %v915 = vpack.c.b16 %v743, %v739
    %v916 = vpack.c.b16 %v744, %v740
    %v917 = vpack.c.b16 %v745, %v741
    %v918 = vpack.c.b16 %v750, %v746
    %v919 = vpack.c.b16 %v751, %v747
    %v920 = vpack.c.b16 %v752, %v748
    %v921 = vpack.c.b16 %v753, %v749
    %v922 = vpack.c.b16 %v758, %v754
    %v923 = vpack.c.b16 %v759, %v755
    %v924 = vpack.c.b16 %v760, %v756
    %v925 = vpack.c.b16 %v761, %v757
    %v926 = vpack.c.b16 %v766, %v762
    %v927 = vpack.c.b16 %v767, %v763
    %v928 = vpack.c.b16 %v768, %v764
    %v929 = vpack.c.b16 %v769, %v765
    %v930 = vpack.c.b16 %v774, %v770
    %v931 = vpack.c.b16 %v775, %v771
    %v932 = vpack.c.b16 %v776, %v772
    %v933 = vpack.c.b16 %v777, %v773
    %v934 = vpack.c.b16 %v782, %v778
    %v935 = vpack.c.b16 %v783, %v779
    %v936 = vpack.c.b16 %v784, %v780
    %v937 = vpack.c.b16 %v785, %v781
    %v938 = vpack.c.b16 %v790, %v786
    %v939 = vpack.c.b16 %v791, %v787
    %v940 = vpack.c.b16 %v792, %v788
    %v941 = vpack.c.b16 %v793, %v789
    %v942 = vpack.c.b16 %v798, %v794
    %v943 = vpack.c.b16 %v799, %v795
    %v944 = vpack.c.b16 %v800, %v796
    %v945 = vpack.c.b16 %v801, %v797
    %v946 = vpack.c.b16 %v806, %v802
    %v947 = vpack.c.b16 %v807, %v803
    %v948 = vpack.c.b16 %v808, %v804
    %v949 = vpack.c.b16 %v809, %v805
    %v950 = vpack.c.b16 %v814, %v810
    %v951 = vpack.c.b16 %v815, %v811
    %v952 = vpack.c.b16 %v816, %v812
    %v953 = vpack.c.b16 %v817, %v813
    %v954 = vpack.c.b16 %v822, %v818
    %v955 = vpack.c.b16 %v823, %v819
    %v956 = vpack.c.b16 %v824, %v820
    %v957 = vpack.c.b16 %v825, %v821
    %v958 = vpack.c.b16 %v830, %v826
    %v959 = vpack.c.b16 %v831, %v827
    %v960 = vpack.c.b16 %v832, %v828
    %v961 = vpack.c.b16 %v833, %v829
    %1090 = vmatprep.subr.bf16.mxu0 %v835
    %1091 = vmatpush1.bf16.msra.mxu0 %v834
    %1092 = vmatprep.subr.bf16.mxu0 %v839
    %1093 = vmatpush1.bf16.msra.mxu0 %v838
    %1094 = vmatprep.subr.bf16.mxu0 %v843
    %1095 = vmatpush1.bf16.msra.mxu0 %v842
    %1096 = vmatprep.subr.bf16.mxu0 %v847
    %1097 = vmatpush1.bf16.msra.mxu0 %v846
    %1098 = vmatprep.subr.bf16.mxu0 %v851
    %1099 = vmatpush1.bf16.msra.mxu0 %v850
    %1100 = vmatprep.subr.bf16.mxu0 %v855
    %1101 = vmatpush1.bf16.msra.mxu0 %v854
    %1102 = vmatprep.subr.bf16.mxu0 %v859
    %1103 = vmatpush1.bf16.msra.mxu0 %v858
    %1104 = vmatprep.subr.bf16.mxu0 %v863
    %1105 = vmatpush1.bf16.msra.mxu0 %v862
    %1106 = vmatprep.subr.bf16.mxu0 %v867
    %1107 = vmatpush1.bf16.msra.mxu0 %v866
    %1108 = vmatprep.subr.bf16.mxu0 %v871
    %1109 = vmatpush1.bf16.msra.mxu0 %v870
    %1110 = vmatprep.subr.bf16.mxu0 %v875
    %1111 = vmatpush1.bf16.msra.mxu0 %v874
    %1112 = vmatprep.subr.bf16.mxu0 %v879
    %1113 = vmatpush1.bf16.msra.mxu0 %v878
    %1114 = vmatprep.subr.bf16.mxu0 %v883
    %1115 = vmatpush1.bf16.msra.mxu0 %v882
    %1116 = vmatprep.subr.bf16.mxu0 %v887
    %1117 = vmatpush1.bf16.msra.mxu0 %v886
    %1118 = vmatprep.subr.bf16.mxu0 %v891
    %1119 = vmatpush1.bf16.msra.mxu0 %v890
    %1120 = vmatprep.subr.bf16.mxu0 %v895
    %1121 = vmatpush1.bf16.msra.mxu0 %v894
    %1122 = vmatprep.mubr.bf16.mxu0 %v426
    %1123 = vmatmul.mubr.bf16.gmra.mrb[0].mxu0 %v425
    %v1124 = vpop.f32.mrb[0].mxu0
    %v1125 = vadd.f32 %v433, %v1124
    %v1126 = vpop.f32.mrb[0].mxu0
    %v1127 = vadd.f32 %v437, %v1126
    %v1128 = vpop.f32.mrb[0].mxu0
    %v1129 = vpop.f32.mrb[0].mxu0
    %1130 = vdwg.mxu0
    %1131 = vmatprep.subr.bf16.mxu0 %v899
    %1132 = vmatpush1.bf16.msra.mxu0 %v898
    %1133 = vmatprep.subr.bf16.mxu0 %v903
    %1134 = vmatpush1.bf16.msra.mxu0 %v902
    %1135 = vmatprep.subr.bf16.mxu0 %v907
    %1136 = vmatpush1.bf16.msra.mxu0 %v906
    %1137 = vmatprep.subr.bf16.mxu0 %v911
    %1138 = vmatpush1.bf16.msra.mxu0 %v910
    %1139 = vmatprep.subr.bf16.mxu0 %v915
    %1140 = vmatpush1.bf16.msra.mxu0 %v914
    %1141 = vmatprep.subr.bf16.mxu0 %v919
    %1142 = vmatpush1.bf16.msra.mxu0 %v918
    %1143 = vmatprep.subr.bf16.mxu0 %v923
    %1144 = vmatpush1.bf16.msra.mxu0 %v922
    %1145 = vmatprep.subr.bf16.mxu0 %v927
    %1146 = vmatpush1.bf16.msra.mxu0 %v926
    %1147 = vmatprep.subr.bf16.mxu0 %v931
    %1148 = vmatpush1.bf16.msra.mxu0 %v930
    %1149 = vmatprep.subr.bf16.mxu0 %v935
    %1150 = vmatpush1.bf16.msra.mxu0 %v934
    %1151 = vmatprep.subr.bf16.mxu0 %v939
    %1152 = vmatpush1.bf16.msra.mxu0 %v938
    %1153 = vmatprep.subr.bf16.mxu0 %v943
    %1154 = vmatpush1.bf16.msra.mxu0 %v942
    %1155 = vmatprep.subr.bf16.mxu0 %v947
    %1156 = vmatpush1.bf16.msra.mxu0 %v946
    %1157 = vmatprep.subr.bf16.mxu0 %v951
    %1158 = vmatpush1.bf16.msra.mxu0 %v950
    %1159 = vmatprep.subr.bf16.mxu0 %v955
    %1160 = vmatpush1.bf16.msra.mxu0 %v954
    %1161 = vmatprep.subr.bf16.mxu0 %v959
    %1162 = vmatpush1.bf16.msra.mxu0 %v958
    %1163 = vmatprep.mubr.bf16.mxu0 %v428
    %1164 = vmatmul.mubr.bf16.gmra.mrb[0].mxu0 %v427
    %v1165 = vpop.f32.mrb[0].mxu0
    %v1166 = vadd.f32 %v1125, %v1165
    %v1167 = vpop.f32.mrb[0].mxu0
    %v1168 = vadd.f32 %v1127, %v1167
    %v1169 = vpop.f32.mrb[0].mxu0
    %v1170 = vpop.f32.mrb[0].mxu0
    %1171 = vdwg.mxu0
    %1172 = vmatprep.subr.bf16.mxu0 %v837
    %1173 = vmatpush1.bf16.msra.mxu0 %v836
    %1174 = vmatprep.subr.bf16.mxu0 %v841
    %1175 = vmatpush1.bf16.msra.mxu0 %v840
    %1176 = vmatprep.subr.bf16.mxu0 %v845
    %1177 = vmatpush1.bf16.msra.mxu0 %v844
    %1178 = vmatprep.subr.bf16.mxu0 %v849
    %1179 = vmatpush1.bf16.msra.mxu0 %v848
    %1180 = vmatprep.subr.bf16.mxu0 %v853
    %1181 = vmatpush1.bf16.msra.mxu0 %v852
    %1182 = vmatprep.subr.bf16.mxu0 %v857
    %1183 = vmatpush1.bf16.msra.mxu0 %v856
    %1184 = vmatprep.subr.bf16.mxu0 %v861
    %1185 = vmatpush1.bf16.msra.mxu0 %v860
    %1186 = vmatprep.subr.bf16.mxu0 %v865
    %1187 = vmatpush1.bf16.msra.mxu0 %v864
    %1188 = vmatprep.subr.bf16.mxu0 %v869
    %1189 = vmatpush1.bf16.msra.mxu0 %v868
    %1190 = vmatprep.subr.bf16.mxu0 %v873
    %1191 = vmatpush1.bf16.msra.mxu0 %v872
    %1192 = vmatprep.subr.bf16.mxu0 %v877
    %1193 = vmatpush1.bf16.msra.mxu0 %v876
    %1194 = vmatprep.subr.bf16.mxu0 %v881
    %1195 = vmatpush1.bf16.msra.mxu0 %v880
    %1196 = vmatprep.subr.bf16.mxu0 %v885
    %1197 = vmatpush1.bf16.msra.mxu0 %v884
    %1198 = vmatprep.subr.bf16.mxu0 %v889
    %1199 = vmatpush1.bf16.msra.mxu0 %v888
    %1200 = vmatprep.subr.bf16.mxu0 %v893
    %1201 = vmatpush1.bf16.msra.mxu0 %v892
    %1202 = vmatprep.subr.bf16.mxu0 %v897
    %1203 = vmatpush1.bf16.msra.mxu0 %v896
    %1204 = vmatprep.mubr.bf16.mxu0 %v426
    %1205 = vmatmul.mubr.bf16.gmra.mrb[0].mxu0 %v425
    %v1206 = vpop.f32.mrb[0].mxu0
    %v1207 = vadd.f32 %v441, %v1206
    %v1208 = vpop.f32.mrb[0].mxu0
    %v1209 = vadd.f32 %v445, %v1208
    %v1210 = vpop.f32.mrb[0].mxu0
    %v1211 = vpop.f32.mrb[0].mxu0
    %1212 = vdwg.mxu0
    %1213 = vmatprep.subr.bf16.mxu0 %v901
    %1214 = vmatpush1.bf16.msra.mxu0 %v900
    %1215 = vmatprep.subr.bf16.mxu0 %v905
    %1216 = vmatpush1.bf16.msra.mxu0 %v904
    %1217 = vmatprep.subr.bf16.mxu0 %v909
    %1218 = vmatpush1.bf16.msra.mxu0 %v908
    %1219 = vmatprep.subr.bf16.mxu0 %v913
    %1220 = vmatpush1.bf16.msra.mxu0 %v912
    %1221 = vmatprep.subr.bf16.mxu0 %v917
    %1222 = vmatpush1.bf16.msra.mxu0 %v916
    %1223 = vmatprep.subr.bf16.mxu0 %v921
    %1224 = vmatpush1.bf16.msra.mxu0 %v920
    %1225 = vmatprep.subr.bf16.mxu0 %v925
    %1226 = vmatpush1.bf16.msra.mxu0 %v924
    %1227 = vmatprep.subr.bf16.mxu0 %v929
    %1228 = vmatpush1.bf16.msra.mxu0 %v928
    %1229 = vmatprep.subr.bf16.mxu0 %v933
    %1230 = vmatpush1.bf16.msra.mxu0 %v932
    %1231 = vmatprep.subr.bf16.mxu0 %v937
    %1232 = vmatpush1.bf16.msra.mxu0 %v936
    %1233 = vmatprep.subr.bf16.mxu0 %v941
    %1234 = vmatpush1.bf16.msra.mxu0 %v940
    %1235 = vmatprep.subr.bf16.mxu0 %v945
    %1236 = vmatpush1.bf16.msra.mxu0 %v944
    %1237 = vmatprep.subr.bf16.mxu0 %v949
    %1238 = vmatpush1.bf16.msra.mxu0 %v948
    %1239 = vmatprep.subr.bf16.mxu0 %v953
    %1240 = vmatpush1.bf16.msra.mxu0 %v952
    %1241 = vmatprep.subr.bf16.mxu0 %v957
    %1242 = vmatpush1.bf16.msra.mxu0 %v956
    %1243 = vmatprep.subr.bf16.mxu0 %v961
    %1244 = vmatpush1.bf16.msra.mxu0 %v960
    %1245 = vmatprep.mubr.bf16.mxu0 %v428
    %1246 = vmatmul.mubr.bf16.gmra.mrb[0].mxu0 %v427
    %v1247 = vpop.f32.mrb[0].mxu0
    %v1248 = vadd.f32 %v1207, %v1247
    %v1249 = vpop.f32.mrb[0].mxu0
    %v1250 = vadd.f32 %v1209, %v1249
    %v1251 = vpop.f32.mrb[0].mxu0
    %v1252 = vpop.f32.mrb[0].mxu0
    %1253 = vdwg.mxu0
    %v1254 = vld [vmem:[#allocation14] sm:$0xff]
    %v1255 = vld [vmem:[#allocation14 + $0x8] sm:$0xff]
    %v1256 = vld [vmem:[#allocation14 + $0x10] sm:$0xff]
    %v1257 = vld [vmem:[#allocation14 + $0x18] sm:$0xff]
    %v1258 = vld [vmem:[#allocation14 + $0x20] sm:$0xff]
    %v1259 = vld [vmem:[#allocation14 + $0x28] sm:$0xff]
    %v1260 = vld [vmem:[#allocation14 + $0x30] sm:$0xff]
    %v1261 = vld [vmem:[#allocation14 + $0x38] sm:$0xff]
    %v1262 = vld [vmem:[#allocation14 + $0x40] sm:$0xff]
    %v1263 = vld [vmem:[#allocation14 + $0x48] sm:$0xff]
    %v1264 = vld [vmem:[#allocation14 + $0x50] sm:$0xff]
    %v1265 = vld [vmem:[#allocation14 + $0x58] sm:$0xff]
    %v1266 = vld [vmem:[#allocation14 + $0x60] sm:$0xff]
    %v1267 = vld [vmem:[#allocation14 + $0x68] sm:$0xff]
    %v1268 = vld [vmem:[#allocation14 + $0x70] sm:$0xff]
    %v1269 = vld [vmem:[#allocation14 + $0x78] sm:$0xff]
    %v1270 = vld [vmem:[#allocation14 + $0x80] sm:$0xff]
    %v1271 = vld [vmem:[#allocation14 + $0x88] sm:$0xff]
    %v1272 = vld [vmem:[#allocation14 + $0x90] sm:$0xff]
    %v1273 = vld [vmem:[#allocation14 + $0x98] sm:$0xff]
    %v1274 = vld [vmem:[#allocation14 + $0xa0] sm:$0xff]
    %v1275 = vld [vmem:[#allocation14 + $0xa8] sm:$0xff]
    %v1276 = vld [vmem:[#allocation14 + $0xb0] sm:$0xff]
    %v1277 = vld [vmem:[#allocation14 + $0xb8] sm:$0xff]
    %v1278 = vld [vmem:[#allocation14 + $0xc0] sm:$0xff]
    %v1279 = vld [vmem:[#allocation14 + $0xc8] sm:$0xff]
    %v1280 = vld [vmem:[#allocation14 + $0xd0] sm:$0xff]
    %v1281 = vld [vmem:[#allocation14 + $0xd8] sm:$0xff]
    %v1282 = vld [vmem:[#allocation14 + $0xe0] sm:$0xff]
    %v1283 = vld [vmem:[#allocation14 + $0xe8] sm:$0xff]
    %v1284 = vld [vmem:[#allocation14 + $0xf0] sm:$0xff]
    %v1285 = vld [vmem:[#allocation14 + $0xf8] sm:$0xff]
    %v1286 = vld [vmem:[#allocation14 + $0x100] sm:$0xff]
    %v1287 = vld [vmem:[#allocation14 + $0x108] sm:$0xff]
    %v1288 = vld [vmem:[#allocation14 + $0x110] sm:$0xff]
    %v1289 = vld [vmem:[#allocation14 + $0x118] sm:$0xff]
    %v1290 = vld [vmem:[#allocation14 + $0x120] sm:$0xff]
    %v1291 = vld [vmem:[#allocation14 + $0x128] sm:$0xff]
    %v1292 = vld [vmem:[#allocation14 + $0x130] sm:$0xff]
    %v1293 = vld [vmem:[#allocation14 + $0x138] sm:$0xff]
    %v1294 = vld [vmem:[#allocation14 + $0x140] sm:$0xff]
    %v1295 = vld [vmem:[#allocation14 + $0x148] sm:$0xff]
    %v1296 = vld [vmem:[#allocation14 + $0x150] sm:$0xff]
    %v1297 = vld [vmem:[#allocation14 + $0x158] sm:$0xff]
    %v1298 = vld [vmem:[#allocation14 + $0x160] sm:$0xff]
    %v1299 = vld [vmem:[#allocation14 + $0x168] sm:$0xff]
    %v1300 = vld [vmem:[#allocation14 + $0x170] sm:$0xff]
    %v1301 = vld [vmem:[#allocation14 + $0x178] sm:$0xff]
    %v1302 = vld [vmem:[#allocation14 + $0x180] sm:$0xff]
    %v1303 = vld [vmem:[#allocation14 + $0x188] sm:$0xff]
    %v1304 = vld [vmem:[#allocation14 + $0x190] sm:$0xff]
    %v1305 = vld [vmem:[#allocation14 + $0x198] sm:$0xff]
    %v1306 = vld [vmem:[#allocation14 + $0x1a0] sm:$0xff]
    %v1307 = vld [vmem:[#allocation14 + $0x1a8] sm:$0xff]
    %v1308 = vld [vmem:[#allocation14 + $0x1b0] sm:$0xff]
    %v1309 = vld [vmem:[#allocation14 + $0x1b8] sm:$0xff]
    %v1310 = vld [vmem:[#allocation14 + $0x1c0] sm:$0xff]
    %v1311 = vld [vmem:[#allocation14 + $0x1c8] sm:$0xff]
    %v1312 = vld [vmem:[#allocation14 + $0x1d0] sm:$0xff]
    %v1313 = vld [vmem:[#allocation14 + $0x1d8] sm:$0xff]
    %v1314 = vld [vmem:[#allocation14 + $0x1e0] sm:$0xff]
    %v1315 = vld [vmem:[#allocation14 + $0x1e8] sm:$0xff]
    %v1316 = vld [vmem:[#allocation14 + $0x1f0] sm:$0xff]
    %v1317 = vld [vmem:[#allocation14 + $0x1f8] sm:$0xff]
    %v1318 = vld [vmem:[#allocation14 + $0x200] sm:$0xff]
    %v1319 = vld [vmem:[#allocation14 + $0x208] sm:$0xff]
    %v1320 = vld [vmem:[#allocation14 + $0x210] sm:$0xff]
    %v1321 = vld [vmem:[#allocation14 + $0x218] sm:$0xff]
    %v1322 = vld [vmem:[#allocation14 + $0x220] sm:$0xff]
    %v1323 = vld [vmem:[#allocation14 + $0x228] sm:$0xff]
    %v1324 = vld [vmem:[#allocation14 + $0x230] sm:$0xff]
    %v1325 = vld [vmem:[#allocation14 + $0x238] sm:$0xff]
    %v1326 = vld [vmem:[#allocation14 + $0x240] sm:$0xff]
    %v1327 = vld [vmem:[#allocation14 + $0x248] sm:$0xff]
    %v1328 = vld [vmem:[#allocation14 + $0x250] sm:$0xff]
    %v1329 = vld [vmem:[#allocation14 + $0x258] sm:$0xff]
    %v1330 = vld [vmem:[#allocation14 + $0x260] sm:$0xff]
    %v1331 = vld [vmem:[#allocation14 + $0x268] sm:$0xff]
    %v1332 = vld [vmem:[#allocation14 + $0x270] sm:$0xff]
    %v1333 = vld [vmem:[#allocation14 + $0x278] sm:$0xff]
    %v1334 = vld [vmem:[#allocation14 + $0x280] sm:$0xff]
    %v1335 = vld [vmem:[#allocation14 + $0x288] sm:$0xff]
    %v1336 = vld [vmem:[#allocation14 + $0x290] sm:$0xff]
    %v1337 = vld [vmem:[#allocation14 + $0x298] sm:$0xff]
    %v1338 = vld [vmem:[#allocation14 + $0x2a0] sm:$0xff]
    %v1339 = vld [vmem:[#allocation14 + $0x2a8] sm:$0xff]
    %v1340 = vld [vmem:[#allocation14 + $0x2b0] sm:$0xff]
    %v1341 = vld [vmem:[#allocation14 + $0x2b8] sm:$0xff]
    %v1342 = vld [vmem:[#allocation14 + $0x2c0] sm:$0xff]
    %v1343 = vld [vmem:[#allocation14 + $0x2c8] sm:$0xff]
    %v1344 = vld [vmem:[#allocation14 + $0x2d0] sm:$0xff]
    %v1345 = vld [vmem:[#allocation14 + $0x2d8] sm:$0xff]
    %v1346 = vld [vmem:[#allocation14 + $0x2e0] sm:$0xff]
    %v1347 = vld [vmem:[#allocation14 + $0x2e8] sm:$0xff]
    %v1348 = vld [vmem:[#allocation14 + $0x2f0] sm:$0xff]
    %v1349 = vld [vmem:[#allocation14 + $0x2f8] sm:$0xff]
    %v1350 = vld [vmem:[#allocation14 + $0x300] sm:$0xff]
    %v1351 = vld [vmem:[#allocation14 + $0x308] sm:$0xff]
    %v1352 = vld [vmem:[#allocation14 + $0x310] sm:$0xff]
    %v1353 = vld [vmem:[#allocation14 + $0x318] sm:$0xff]
    %v1354 = vld [vmem:[#allocation14 + $0x320] sm:$0xff]
    %v1355 = vld [vmem:[#allocation14 + $0x328] sm:$0xff]
    %v1356 = vld [vmem:[#allocation14 + $0x330] sm:$0xff]
    %v1357 = vld [vmem:[#allocation14 + $0x338] sm:$0xff]
    %v1358 = vld [vmem:[#allocation14 + $0x340] sm:$0xff]
    %v1359 = vld [vmem:[#allocation14 + $0x348] sm:$0xff]
    %v1360 = vld [vmem:[#allocation14 + $0x350] sm:$0xff]
    %v1361 = vld [vmem:[#allocation14 + $0x358] sm:$0xff]
    %v1362 = vld [vmem:[#allocation14 + $0x360] sm:$0xff]
    %v1363 = vld [vmem:[#allocation14 + $0x368] sm:$0xff]
    %v1364 = vld [vmem:[#allocation14 + $0x370] sm:$0xff]
    %v1365 = vld [vmem:[#allocation14 + $0x378] sm:$0xff]
    %v1366 = vld [vmem:[#allocation14 + $0x380] sm:$0xff]
    %v1367 = vld [vmem:[#allocation14 + $0x388] sm:$0xff]
    %v1368 = vld [vmem:[#allocation14 + $0x390] sm:$0xff]
    %v1369 = vld [vmem:[#allocation14 + $0x398] sm:$0xff]
    %v1370 = vld [vmem:[#allocation14 + $0x3a0] sm:$0xff]
    %v1371 = vld [vmem:[#allocation14 + $0x3a8] sm:$0xff]
    %v1372 = vld [vmem:[#allocation14 + $0x3b0] sm:$0xff]
    %v1373 = vld [vmem:[#allocation14 + $0x3b8] sm:$0xff]
    %v1374 = vld [vmem:[#allocation14 + $0x3c0] sm:$0xff]
    %v1375 = vld [vmem:[#allocation14 + $0x3c8] sm:$0xff]
    %v1376 = vld [vmem:[#allocation14 + $0x3d0] sm:$0xff]
    %v1377 = vld [vmem:[#allocation14 + $0x3d8] sm:$0xff]
    %v1378 = vld [vmem:[#allocation14 + $0x3e0] sm:$0xff]
    %v1379 = vld [vmem:[#allocation14 + $0x3e8] sm:$0xff]
    %v1380 = vld [vmem:[#allocation14 + $0x3f0] sm:$0xff]
    %v1381 = vld [vmem:[#allocation14 + $0x3f8] sm:$0xff]
    %v1382 = vld [vmem:[#allocation14 + $0x400] sm:$0xff]
    %v1383 = vld [vmem:[#allocation14 + $0x408] sm:$0xff]
    %v1384 = vld [vmem:[#allocation14 + $0x410] sm:$0xff]
    %v1385 = vld [vmem:[#allocation14 + $0x418] sm:$0xff]
    %v1386 = vld [vmem:[#allocation14 + $0x420] sm:$0xff]
    %v1387 = vld [vmem:[#allocation14 + $0x428] sm:$0xff]
    %v1388 = vld [vmem:[#allocation14 + $0x430] sm:$0xff]
    %v1389 = vld [vmem:[#allocation14 + $0x438] sm:$0xff]
    %v1390 = vld [vmem:[#allocation14 + $0x440] sm:$0xff]
    %v1391 = vld [vmem:[#allocation14 + $0x448] sm:$0xff]
    %v1392 = vld [vmem:[#allocation14 + $0x450] sm:$0xff]
    %v1393 = vld [vmem:[#allocation14 + $0x458] sm:$0xff]
    %v1394 = vld [vmem:[#allocation14 + $0x460] sm:$0xff]
    %v1395 = vld [vmem:[#allocation14 + $0x468] sm:$0xff]
    %v1396 = vld [vmem:[#allocation14 + $0x470] sm:$0xff]
    %v1397 = vld [vmem:[#allocation14 + $0x478] sm:$0xff]
    %v1398 = vld [vmem:[#allocation14 + $0x480] sm:$0xff]
    %v1399 = vld [vmem:[#allocation14 + $0x488] sm:$0xff]
    %v1400 = vld [vmem:[#allocation14 + $0x490] sm:$0xff]
    %v1401 = vld [vmem:[#allocation14 + $0x498] sm:$0xff]
    %v1402 = vld [vmem:[#allocation14 + $0x4a0] sm:$0xff]
    %v1403 = vld [vmem:[#allocation14 + $0x4a8] sm:$0xff]
    %v1404 = vld [vmem:[#allocation14 + $0x4b0] sm:$0xff]
    %v1405 = vld [vmem:[#allocation14 + $0x4b8] sm:$0xff]
    %v1406 = vld [vmem:[#allocation14 + $0x4c0] sm:$0xff]
    %v1407 = vld [vmem:[#allocation14 + $0x4c8] sm:$0xff]
    %v1408 = vld [vmem:[#allocation14 + $0x4d0] sm:$0xff]
    %v1409 = vld [vmem:[#allocation14 + $0x4d8] sm:$0xff]
    %v1410 = vld [vmem:[#allocation14 + $0x4e0] sm:$0xff]
    %v1411 = vld [vmem:[#allocation14 + $0x4e8] sm:$0xff]
    %v1412 = vld [vmem:[#allocation14 + $0x4f0] sm:$0xff]
    %v1413 = vld [vmem:[#allocation14 + $0x4f8] sm:$0xff]
    %v1414 = vld [vmem:[#allocation14 + $0x500] sm:$0xff]
    %v1415 = vld [vmem:[#allocation14 + $0x508] sm:$0xff]
    %v1416 = vld [vmem:[#allocation14 + $0x510] sm:$0xff]
    %v1417 = vld [vmem:[#allocation14 + $0x518] sm:$0xff]
    %v1418 = vld [vmem:[#allocation14 + $0x520] sm:$0xff]
    %v1419 = vld [vmem:[#allocation14 + $0x528] sm:$0xff]
    %v1420 = vld [vmem:[#allocation14 + $0x530] sm:$0xff]
    %v1421 = vld [vmem:[#allocation14 + $0x538] sm:$0xff]
    %v1422 = vld [vmem:[#allocation14 + $0x540] sm:$0xff]
    %v1423 = vld [vmem:[#allocation14 + $0x548] sm:$0xff]
    %v1424 = vld [vmem:[#allocation14 + $0x550] sm:$0xff]
    %v1425 = vld [vmem:[#allocation14 + $0x558] sm:$0xff]
    %v1426 = vld [vmem:[#allocation14 + $0x560] sm:$0xff]
    %v1427 = vld [vmem:[#allocation14 + $0x568] sm:$0xff]
    %v1428 = vld [vmem:[#allocation14 + $0x570] sm:$0xff]
    %v1429 = vld [vmem:[#allocation14 + $0x578] sm:$0xff]
    %v1430 = vld [vmem:[#allocation14 + $0x580] sm:$0xff]
    %v1431 = vld [vmem:[#allocation14 + $0x588] sm:$0xff]
    %v1432 = vld [vmem:[#allocation14 + $0x590] sm:$0xff]
    %v1433 = vld [vmem:[#allocation14 + $0x598] sm:$0xff]
    %v1434 = vld [vmem:[#allocation14 + $0x5a0] sm:$0xff]
    %v1435 = vld [vmem:[#allocation14 + $0x5a8] sm:$0xff]
    %v1436 = vld [vmem:[#allocation14 + $0x5b0] sm:$0xff]
    %v1437 = vld [vmem:[#allocation14 + $0x5b8] sm:$0xff]
    %v1438 = vld [vmem:[#allocation14 + $0x5c0] sm:$0xff]
    %v1439 = vld [vmem:[#allocation14 + $0x5c8] sm:$0xff]
    %v1440 = vld [vmem:[#allocation14 + $0x5d0] sm:$0xff]
    %v1441 = vld [vmem:[#allocation14 + $0x5d8] sm:$0xff]
    %v1442 = vld [vmem:[#allocation14 + $0x5e0] sm:$0xff]
    %v1443 = vld [vmem:[#allocation14 + $0x5e8] sm:$0xff]
    %v1444 = vld [vmem:[#allocation14 + $0x5f0] sm:$0xff]
    %v1445 = vld [vmem:[#allocation14 + $0x5f8] sm:$0xff]
    %v1446 = vpack.c.bf16 %v291, %v291
    %v1447 = vpack.c.bf16 %v292, %v292
    %v1448 = vpack.c.bf16 %v293, %v293
    %v1449 = vpack.c.bf16 %v294, %v294
    %v1450 = vpack.c.bf16 %v295, %v295
    %v1451 = vpack.c.bf16 %v296, %v296
    %v1453 = vlaneseq
    %v1454 = vshrl.u32 %v1453, 7
    %v1455 = vsub.s32 0, %v1454
    %v1456 = vrot.slane %v277, %v1455
    %v1457 = vlaneseq
    %v1458 = vshrl.u32 %v1457, 7
    %v1459 = vsub.s32 1, %v1458
    %v1460 = vrot.slane %v277, %v1459
    %v1461 = vlaneseq
    %v1462 = vshrl.u32 %v1461, 7
    %v1463 = vsub.s32 2, %v1462
    %v1464 = vrot.slane %v277, %v1463
    %v1465 = vlaneseq
    %v1466 = vshrl.u32 %v1465, 7
    %v1467 = vsub.s32 3, %v1466
    %v1468 = vrot.slane %v277, %v1467
    %v1665 = vunpack.c.l.b16 %v1254
    %v1666 = vunpack.c.h.b16 %v1254
    %v1667 = vunpack.c.l.b16 %v1255
    %v1668 = vunpack.c.h.b16 %v1255
    %v1669 = vunpack.c.l.b16 %v1256
    %v1670 = vunpack.c.h.b16 %v1256
    %v1671 = vunpack.c.l.b16 %v1257
    %v1672 = vunpack.c.h.b16 %v1257
    %v1673 = vunpack.c.l.b16 %v1258
    %v1674 = vunpack.c.h.b16 %v1258
    %v1675 = vunpack.c.l.b16 %v1259
    %v1676 = vunpack.c.h.b16 %v1259
    %v1677 = vunpack.c.l.b16 %v1260
    %v1678 = vunpack.c.h.b16 %v1260
    %v1679 = vunpack.c.l.b16 %v1261
    %v1680 = vunpack.c.h.b16 %v1261
    %v1681 = vunpack.c.l.b16 %v1262
    %v1682 = vunpack.c.h.b16 %v1262
    %v1683 = vunpack.c.l.b16 %v1263
    %v1684 = vunpack.c.h.b16 %v1263
    %v1685 = vunpack.c.l.b16 %v1264
    %v1686 = vunpack.c.h.b16 %v1264
    %v1687 = vunpack.c.l.b16 %v1265
    %v1688 = vunpack.c.h.b16 %v1265
    %v1689 = vunpack.c.l.b16 %v1266
    %v1690 = vunpack.c.h.b16 %v1266
    %v1691 = vunpack.c.l.b16 %v1267
    %v1692 = vunpack.c.h.b16 %v1267
    %v1693 = vunpack.c.l.b16 %v1268
    %v1694 = vunpack.c.h.b16 %v1268
    %v1695 = vunpack.c.l.b16 %v1269
    %v1696 = vunpack.c.h.b16 %v1269
    %v1697 = vunpack.c.l.b16 %v1270
    %v1698 = vunpack.c.h.b16 %v1270
    %v1699 = vunpack.c.l.b16 %v1271
    %v1700 = vunpack.c.h.b16 %v1271
    %v1701 = vunpack.c.l.b16 %v1272
    %v1702 = vunpack.c.h.b16 %v1272
    %v1703 = vunpack.c.l.b16 %v1273
    %v1704 = vunpack.c.h.b16 %v1273
    %v1705 = vunpack.c.l.b16 %v1274
    %v1706 = vunpack.c.h.b16 %v1274
    %v1707 = vunpack.c.l.b16 %v1275
    %v1708 = vunpack.c.h.b16 %v1275
    %v1709 = vunpack.c.l.b16 %v1276
    %v1710 = vunpack.c.h.b16 %v1276
    %v1711 = vunpack.c.l.b16 %v1277
    %v1712 = vunpack.c.h.b16 %v1277
    %v1713 = vunpack.c.l.b16 %v1278
    %v1714 = vunpack.c.h.b16 %v1278
    %v1715 = vunpack.c.l.b16 %v1279
    %v1716 = vunpack.c.h.b16 %v1279
    %v1717 = vunpack.c.l.b16 %v1280
    %v1718 = vunpack.c.h.b16 %v1280
    %v1719 = vunpack.c.l.b16 %v1281
    %v1720 = vunpack.c.h.b16 %v1281
    %v1721 = vunpack.c.l.b16 %v1282
    %v1722 = vunpack.c.h.b16 %v1282
    %v1723 = vunpack.c.l.b16 %v1283
    %v1724 = vunpack.c.h.b16 %v1283
    %v1725 = vunpack.c.l.b16 %v1284
    %v1726 = vunpack.c.h.b16 %v1284
    %v1727 = vunpack.c.l.b16 %v1285
    %v1728 = vunpack.c.h.b16 %v1285
    %v1729 = vunpack.c.l.b16 %v1286
    %v1730 = vunpack.c.h.b16 %v1286
    %v1731 = vunpack.c.l.b16 %v1287
    %v1732 = vunpack.c.h.b16 %v1287
    %v1733 = vunpack.c.l.b16 %v1288
    %v1734 = vunpack.c.h.b16 %v1288
    %v1735 = vunpack.c.l.b16 %v1289
    %v1736 = vunpack.c.h.b16 %v1289
    %v1737 = vunpack.c.l.b16 %v1290
    %v1738 = vunpack.c.h.b16 %v1290
    %v1739 = vunpack.c.l.b16 %v1291
    %v1740 = vunpack.c.h.b16 %v1291
    %v1741 = vunpack.c.l.b16 %v1292
    %v1742 = vunpack.c.h.b16 %v1292
    %v1743 = vunpack.c.l.b16 %v1293
    %v1744 = vunpack.c.h.b16 %v1293
    %v1745 = vunpack.c.l.b16 %v1294
    %v1746 = vunpack.c.h.b16 %v1294
    %v1747 = vunpack.c.l.b16 %v1295
    %v1748 = vunpack.c.h.b16 %v1295
    %v1749 = vunpack.c.l.b16 %v1296
    %v1750 = vunpack.c.h.b16 %v1296
    %v1751 = vunpack.c.l.b16 %v1297
    %v1752 = vunpack.c.h.b16 %v1297
    %v1753 = vunpack.c.l.b16 %v1298
    %v1754 = vunpack.c.h.b16 %v1298
    %v1755 = vunpack.c.l.b16 %v1299
    %v1756 = vunpack.c.h.b16 %v1299
    %v1757 = vunpack.c.l.b16 %v1300
    %v1758 = vunpack.c.h.b16 %v1300
    %v1759 = vunpack.c.l.b16 %v1301
    %v1760 = vunpack.c.h.b16 %v1301
    %v1761 = vunpack.c.l.b16 %v1302
    %v1762 = vunpack.c.h.b16 %v1302
    %v1763 = vunpack.c.l.b16 %v1303
    %v1764 = vunpack.c.h.b16 %v1303
    %v1765 = vunpack.c.l.b16 %v1304
    %v1766 = vunpack.c.h.b16 %v1304
    %v1767 = vunpack.c.l.b16 %v1305
    %v1768 = vunpack.c.h.b16 %v1305
    %v1769 = vunpack.c.l.b16 %v1306
    %v1770 = vunpack.c.h.b16 %v1306
    %v1771 = vunpack.c.l.b16 %v1307
    %v1772 = vunpack.c.h.b16 %v1307
    %v1773 = vunpack.c.l.b16 %v1308
    %v1774 = vunpack.c.h.b16 %v1308
    %v1775 = vunpack.c.l.b16 %v1309
    %v1776 = vunpack.c.h.b16 %v1309
    %v1777 = vunpack.c.l.b16 %v1310
    %v1778 = vunpack.c.h.b16 %v1310
    %v1779 = vunpack.c.l.b16 %v1311
    %v1780 = vunpack.c.h.b16 %v1311
    %v1781 = vunpack.c.l.b16 %v1312
    %v1782 = vunpack.c.h.b16 %v1312
    %v1783 = vunpack.c.l.b16 %v1313
    %v1784 = vunpack.c.h.b16 %v1313
    %v1785 = vunpack.c.l.b16 %v1314
    %v1786 = vunpack.c.h.b16 %v1314
    %v1787 = vunpack.c.l.b16 %v1315
    %v1788 = vunpack.c.h.b16 %v1315
    %v1789 = vunpack.c.l.b16 %v1316
    %v1790 = vunpack.c.h.b16 %v1316
    %v1791 = vunpack.c.l.b16 %v1317
    %v1792 = vunpack.c.h.b16 %v1317
    %v1793 = vunpack.c.l.b16 %v1318
    %v1794 = vunpack.c.h.b16 %v1318
    %v1795 = vunpack.c.l.b16 %v1319
    %v1796 = vunpack.c.h.b16 %v1319
    %v1797 = vunpack.c.l.b16 %v1320
    %v1798 = vunpack.c.h.b16 %v1320
    %v1799 = vunpack.c.l.b16 %v1321
    %v1800 = vunpack.c.h.b16 %v1321
    %v1801 = vunpack.c.l.b16 %v1322
    %v1802 = vunpack.c.h.b16 %v1322
    %v1803 = vunpack.c.l.b16 %v1323
    %v1804 = vunpack.c.h.b16 %v1323
    %v1805 = vunpack.c.l.b16 %v1324
    %v1806 = vunpack.c.h.b16 %v1324
    %v1807 = vunpack.c.l.b16 %v1325
    %v1808 = vunpack.c.h.b16 %v1325
    %v1809 = vunpack.c.l.b16 %v1326
    %v1810 = vunpack.c.h.b16 %v1326
    %v1811 = vunpack.c.l.b16 %v1327
    %v1812 = vunpack.c.h.b16 %v1327
    %v1813 = vunpack.c.l.b16 %v1328
    %v1814 = vunpack.c.h.b16 %v1328
    %v1815 = vunpack.c.l.b16 %v1329
    %v1816 = vunpack.c.h.b16 %v1329
    %v1817 = vunpack.c.l.b16 %v1330
    %v1818 = vunpack.c.h.b16 %v1330
    %v1819 = vunpack.c.l.b16 %v1331
    %v1820 = vunpack.c.h.b16 %v1331
    %v1821 = vunpack.c.l.b16 %v1332
    %v1822 = vunpack.c.h.b16 %v1332
    %v1823 = vunpack.c.l.b16 %v1333
    %v1824 = vunpack.c.h.b16 %v1333
    %v1825 = vunpack.c.l.b16 %v1334
    %v1826 = vunpack.c.h.b16 %v1334
    %v1827 = vunpack.c.l.b16 %v1335
    %v1828 = vunpack.c.h.b16 %v1335
    %v1829 = vunpack.c.l.b16 %v1336
    %v1830 = vunpack.c.h.b16 %v1336
    %v1831 = vunpack.c.l.b16 %v1337
    %v1832 = vunpack.c.h.b16 %v1337
    %v1833 = vunpack.c.l.b16 %v1338
    %v1834 = vunpack.c.h.b16 %v1338
    %v1835 = vunpack.c.l.b16 %v1339
    %v1836 = vunpack.c.h.b16 %v1339
    %v1837 = vunpack.c.l.b16 %v1340
    %v1838 = vunpack.c.h.b16 %v1340
    %v1839 = vunpack.c.l.b16 %v1341
    %v1840 = vunpack.c.h.b16 %v1341
    %v1841 = vunpack.c.l.b16 %v1342
    %v1842 = vunpack.c.h.b16 %v1342
    %v1843 = vunpack.c.l.b16 %v1343
    %v1844 = vunpack.c.h.b16 %v1343
    %v1845 = vunpack.c.l.b16 %v1344
    %v1846 = vunpack.c.h.b16 %v1344
    %v1847 = vunpack.c.l.b16 %v1345
    %v1848 = vunpack.c.h.b16 %v1345
    %v1849 = vunpack.c.l.b16 %v1346
    %v1850 = vunpack.c.h.b16 %v1346
    %v1851 = vunpack.c.l.b16 %v1347
    %v1852 = vunpack.c.h.b16 %v1347
    %v1853 = vunpack.c.l.b16 %v1348
    %v1854 = vunpack.c.h.b16 %v1348
    %v1855 = vunpack.c.l.b16 %v1349
    %v1856 = vunpack.c.h.b16 %v1349
    %v1857 = vunpack.c.l.b16 %v1350
    %v1858 = vunpack.c.h.b16 %v1350
    %v1859 = vunpack.c.l.b16 %v1351
    %v1860 = vunpack.c.h.b16 %v1351
    %v1861 = vunpack.c.l.b16 %v1352
    %v1862 = vunpack.c.h.b16 %v1352
    %v1863 = vunpack.c.l.b16 %v1353
    %v1864 = vunpack.c.h.b16 %v1353
    %v1865 = vunpack.c.l.b16 %v1354
    %v1866 = vunpack.c.h.b16 %v1354
    %v1867 = vunpack.c.l.b16 %v1355
    %v1868 = vunpack.c.h.b16 %v1355
    %v1869 = vunpack.c.l.b16 %v1356
    %v1870 = vunpack.c.h.b16 %v1356
    %v1871 = vunpack.c.l.b16 %v1357
    %v1872 = vunpack.c.h.b16 %v1357
    %v1873 = vunpack.c.l.b16 %v1358
    %v1874 = vunpack.c.h.b16 %v1358
    %v1875 = vunpack.c.l.b16 %v1359
    %v1876 = vunpack.c.h.b16 %v1359
    %v1877 = vunpack.c.l.b16 %v1360
    %v1878 = vunpack.c.h.b16 %v1360
    %v1879 = vunpack.c.l.b16 %v1361
    %v1880 = vunpack.c.h.b16 %v1361
    %v1881 = vunpack.c.l.b16 %v1362
    %v1882 = vunpack.c.h.b16 %v1362
    %v1883 = vunpack.c.l.b16 %v1363
    %v1884 = vunpack.c.h.b16 %v1363
    %v1885 = vunpack.c.l.b16 %v1364
    %v1886 = vunpack.c.h.b16 %v1364
    %v1887 = vunpack.c.l.b16 %v1365
    %v1888 = vunpack.c.h.b16 %v1365
    %v1889 = vunpack.c.l.b16 %v1366
    %v1890 = vunpack.c.h.b16 %v1366
    %v1891 = vunpack.c.l.b16 %v1367
    %v1892 = vunpack.c.h.b16 %v1367
    %v1893 = vunpack.c.l.b16 %v1368
    %v1894 = vunpack.c.h.b16 %v1368
    %v1895 = vunpack.c.l.b16 %v1369
    %v1896 = vunpack.c.h.b16 %v1369
    %v1897 = vunpack.c.l.b16 %v1370
    %v1898 = vunpack.c.h.b16 %v1370
    %v1899 = vunpack.c.l.b16 %v1371
    %v1900 = vunpack.c.h.b16 %v1371
    %v1901 = vunpack.c.l.b16 %v1372
    %v1902 = vunpack.c.h.b16 %v1372
    %v1903 = vunpack.c.l.b16 %v1373
    %v1904 = vunpack.c.h.b16 %v1373
    %v1905 = vunpack.c.l.b16 %v1374
    %v1906 = vunpack.c.h.b16 %v1374
    %v1907 = vunpack.c.l.b16 %v1375
    %v1908 = vunpack.c.h.b16 %v1375
    %v1909 = vunpack.c.l.b16 %v1376
    %v1910 = vunpack.c.h.b16 %v1376
    %v1911 = vunpack.c.l.b16 %v1377
    %v1912 = vunpack.c.h.b16 %v1377
    %v1913 = vunpack.c.l.b16 %v1378
    %v1914 = vunpack.c.h.b16 %v1378
    %v1915 = vunpack.c.l.b16 %v1379
    %v1916 = vunpack.c.h.b16 %v1379
    %v1917 = vunpack.c.l.b16 %v1380
    %v1918 = vunpack.c.h.b16 %v1380
    %v1919 = vunpack.c.l.b16 %v1381
    %v1920 = vunpack.c.h.b16 %v1381
    %v1921 = vunpack.c.l.b16 %v1382
    %v1922 = vunpack.c.h.b16 %v1382
    %v1923 = vunpack.c.l.b16 %v1383
    %v1924 = vunpack.c.h.b16 %v1383
    %v1925 = vunpack.c.l.b16 %v1384
    %v1926 = vunpack.c.h.b16 %v1384
    %v1927 = vunpack.c.l.b16 %v1385
    %v1928 = vunpack.c.h.b16 %v1385
    %v1929 = vunpack.c.l.b16 %v1386
    %v1930 = vunpack.c.h.b16 %v1386
    %v1931 = vunpack.c.l.b16 %v1387
    %v1932 = vunpack.c.h.b16 %v1387
    %v1933 = vunpack.c.l.b16 %v1388
    %v1934 = vunpack.c.h.b16 %v1388
    %v1935 = vunpack.c.l.b16 %v1389
    %v1936 = vunpack.c.h.b16 %v1389
    %v1937 = vunpack.c.l.b16 %v1390
    %v1938 = vunpack.c.h.b16 %v1390
    %v1939 = vunpack.c.l.b16 %v1391
    %v1940 = vunpack.c.h.b16 %v1391
    %v1941 = vunpack.c.l.b16 %v1392
    %v1942 = vunpack.c.h.b16 %v1392
    %v1943 = vunpack.c.l.b16 %v1393
    %v1944 = vunpack.c.h.b16 %v1393
    %v1945 = vunpack.c.l.b16 %v1394
    %v1946 = vunpack.c.h.b16 %v1394
    %v1947 = vunpack.c.l.b16 %v1395
    %v1948 = vunpack.c.h.b16 %v1395
    %v1949 = vunpack.c.l.b16 %v1396
    %v1950 = vunpack.c.h.b16 %v1396
    %v1951 = vunpack.c.l.b16 %v1397
    %v1952 = vunpack.c.h.b16 %v1397
    %v1953 = vunpack.c.l.b16 %v1398
    %v1954 = vunpack.c.h.b16 %v1398
    %v1955 = vunpack.c.l.b16 %v1399
    %v1956 = vunpack.c.h.b16 %v1399
    %v1957 = vunpack.c.l.b16 %v1400
    %v1958 = vunpack.c.h.b16 %v1400
    %v1959 = vunpack.c.l.b16 %v1401
    %v1960 = vunpack.c.h.b16 %v1401
    %v1961 = vunpack.c.l.b16 %v1402
    %v1962 = vunpack.c.h.b16 %v1402
    %v1963 = vunpack.c.l.b16 %v1403
    %v1964 = vunpack.c.h.b16 %v1403
    %v1965 = vunpack.c.l.b16 %v1404
    %v1966 = vunpack.c.h.b16 %v1404
    %v1967 = vunpack.c.l.b16 %v1405
    %v1968 = vunpack.c.h.b16 %v1405
    %v1969 = vunpack.c.l.b16 %v1406
    %v1970 = vunpack.c.h.b16 %v1406
    %v1971 = vunpack.c.l.b16 %v1407
    %v1972 = vunpack.c.h.b16 %v1407
    %v1973 = vunpack.c.l.b16 %v1408
    %v1974 = vunpack.c.h.b16 %v1408
    %v1975 = vunpack.c.l.b16 %v1409
    %v1976 = vunpack.c.h.b16 %v1409
    %v1977 = vunpack.c.l.b16 %v1410
    %v1978 = vunpack.c.h.b16 %v1410
    %v1979 = vunpack.c.l.b16 %v1411
    %v1980 = vunpack.c.h.b16 %v1411
    %v1981 = vunpack.c.l.b16 %v1412
    %v1982 = vunpack.c.h.b16 %v1412
    %v1983 = vunpack.c.l.b16 %v1413
    %v1984 = vunpack.c.h.b16 %v1413
    %v1985 = vunpack.c.l.b16 %v1414
    %v1986 = vunpack.c.h.b16 %v1414
    %v1987 = vunpack.c.l.b16 %v1415
    %v1988 = vunpack.c.h.b16 %v1415
    %v1989 = vunpack.c.l.b16 %v1416
    %v1990 = vunpack.c.h.b16 %v1416
    %v1991 = vunpack.c.l.b16 %v1417
    %v1992 = vunpack.c.h.b16 %v1417
    %v1993 = vunpack.c.l.b16 %v1418
    %v1994 = vunpack.c.h.b16 %v1418
    %v1995 = vunpack.c.l.b16 %v1419
    %v1996 = vunpack.c.h.b16 %v1419
    %v1997 = vunpack.c.l.b16 %v1420
    %v1998 = vunpack.c.h.b16 %v1420
    %v1999 = vunpack.c.l.b16 %v1421
    %v2000 = vunpack.c.h.b16 %v1421
    %v2001 = vunpack.c.l.b16 %v1422
    %v2002 = vunpack.c.h.b16 %v1422
    %v2003 = vunpack.c.l.b16 %v1423
    %v2004 = vunpack.c.h.b16 %v1423
    %v2005 = vunpack.c.l.b16 %v1424
    %v2006 = vunpack.c.h.b16 %v1424
    %v2007 = vunpack.c.l.b16 %v1425
    %v2008 = vunpack.c.h.b16 %v1425
    %v2009 = vunpack.c.l.b16 %v1426
    %v2010 = vunpack.c.h.b16 %v1426
    %v2011 = vunpack.c.l.b16 %v1427
    %v2012 = vunpack.c.h.b16 %v1427
    %v2013 = vunpack.c.l.b16 %v1428
    %v2014 = vunpack.c.h.b16 %v1428
    %v2015 = vunpack.c.l.b16 %v1429
    %v2016 = vunpack.c.h.b16 %v1429
    %v2017 = vunpack.c.l.b16 %v1430
    %v2018 = vunpack.c.h.b16 %v1430
    %v2019 = vunpack.c.l.b16 %v1431
    %v2020 = vunpack.c.h.b16 %v1431
    %v2021 = vunpack.c.l.b16 %v1432
    %v2022 = vunpack.c.h.b16 %v1432
    %v2023 = vunpack.c.l.b16 %v1433
    %v2024 = vunpack.c.h.b16 %v1433
    %v2025 = vunpack.c.l.b16 %v1434
    %v2026 = vunpack.c.h.b16 %v1434
    %v2027 = vunpack.c.l.b16 %v1435
    %v2028 = vunpack.c.h.b16 %v1435
    %v2029 = vunpack.c.l.b16 %v1436
    %v2030 = vunpack.c.h.b16 %v1436
    %v2031 = vunpack.c.l.b16 %v1437
    %v2032 = vunpack.c.h.b16 %v1437
    %v2033 = vunpack.c.l.b16 %v1438
    %v2034 = vunpack.c.h.b16 %v1438
    %v2035 = vunpack.c.l.b16 %v1439
    %v2036 = vunpack.c.h.b16 %v1439
    %v2037 = vunpack.c.l.b16 %v1440
    %v2038 = vunpack.c.h.b16 %v1440
    %v2039 = vunpack.c.l.b16 %v1441
    %v2040 = vunpack.c.h.b16 %v1441
    %v2041 = vunpack.c.l.b16 %v1442
    %v2042 = vunpack.c.h.b16 %v1442
    %v2043 = vunpack.c.l.b16 %v1443
    %v2044 = vunpack.c.h.b16 %v1443
    %v2045 = vunpack.c.l.b16 %v1444
    %v2046 = vunpack.c.h.b16 %v1444
    %v2047 = vunpack.c.l.b16 %v1445
    %v2048 = vunpack.c.h.b16 %v1445
    %v2049 = vpack.c.b16 %v1669, %v1665
    %v2050 = vpack.c.b16 %v1670, %v1666
    %v2051 = vpack.c.b16 %v1671, %v1667
    %v2052 = vpack.c.b16 %v1672, %v1668
    %v2053 = vpack.c.b16 %v1677, %v1673
    %v2054 = vpack.c.b16 %v1678, %v1674
    %v2055 = vpack.c.b16 %v1679, %v1675
    %v2056 = vpack.c.b16 %v1680, %v1676
    %v2057 = vpack.c.b16 %v1685, %v1681
    %v2058 = vpack.c.b16 %v1686, %v1682
    %v2059 = vpack.c.b16 %v1687, %v1683
    %v2060 = vpack.c.b16 %v1688, %v1684
    %v2061 = vpack.c.b16 %v1693, %v1689
    %v2062 = vpack.c.b16 %v1694, %v1690
    %v2063 = vpack.c.b16 %v1695, %v1691
    %v2064 = vpack.c.b16 %v1696, %v1692
    %v2065 = vpack.c.b16 %v1701, %v1697
    %v2066 = vpack.c.b16 %v1702, %v1698
    %v2067 = vpack.c.b16 %v1703, %v1699
    %v2068 = vpack.c.b16 %v1704, %v1700
    %v2069 = vpack.c.b16 %v1709, %v1705
    %v2070 = vpack.c.b16 %v1710, %v1706
    %v2071 = vpack.c.b16 %v1711, %v1707
    %v2072 = vpack.c.b16 %v1712, %v1708
    %v2073 = vpack.c.b16 %v1717, %v1713
    %v2074 = vpack.c.b16 %v1718, %v1714
    %v2075 = vpack.c.b16 %v1719, %v1715
    %v2076 = vpack.c.b16 %v1720, %v1716
    %v2077 = vpack.c.b16 %v1725, %v1721
    %v2078 = vpack.c.b16 %v1726, %v1722
    %v2079 = vpack.c.b16 %v1727, %v1723
    %v2080 = vpack.c.b16 %v1728, %v1724
    %v2081 = vpack.c.b16 %v1733, %v1729
    %v2082 = vpack.c.b16 %v1734, %v1730
    %v2083 = vpack.c.b16 %v1735, %v1731
    %v2084 = vpack.c.b16 %v1736, %v1732
    %v2085 = vpack.c.b16 %v1741, %v1737
    %v2086 = vpack.c.b16 %v1742, %v1738
    %v2087 = vpack.c.b16 %v1743, %v1739
    %v2088 = vpack.c.b16 %v1744, %v1740
    %v2089 = vpack.c.b16 %v1749, %v1745
    %v2090 = vpack.c.b16 %v1750, %v1746
    %v2091 = vpack.c.b16 %v1751, %v1747
    %v2092 = vpack.c.b16 %v1752, %v1748
    %v2093 = vpack.c.b16 %v1757, %v1753
    %v2094 = vpack.c.b16 %v1758, %v1754
    %v2095 = vpack.c.b16 %v1759, %v1755
    %v2096 = vpack.c.b16 %v1760, %v1756
    %v2097 = vpack.c.b16 %v1765, %v1761
    %v2098 = vpack.c.b16 %v1766, %v1762
    %v2099 = vpack.c.b16 %v1767, %v1763
    %v2100 = vpack.c.b16 %v1768, %v1764
    %v2101 = vpack.c.b16 %v1773, %v1769
    %v2102 = vpack.c.b16 %v1774, %v1770
    %v2103 = vpack.c.b16 %v1775, %v1771
    %v2104 = vpack.c.b16 %v1776, %v1772
    %v2105 = vpack.c.b16 %v1781, %v1777
    %v2106 = vpack.c.b16 %v1782, %v1778
    %v2107 = vpack.c.b16 %v1783, %v1779
    %v2108 = vpack.c.b16 %v1784, %v1780
    %v2109 = vpack.c.b16 %v1789, %v1785
    %v2110 = vpack.c.b16 %v1790, %v1786
    %v2111 = vpack.c.b16 %v1791, %v1787
    %v2112 = vpack.c.b16 %v1792, %v1788
    %v2113 = vpack.c.b16 %v1797, %v1793
    %v2114 = vpack.c.b16 %v1798, %v1794
    %v2115 = vpack.c.b16 %v1799, %v1795
    %v2116 = vpack.c.b16 %v1800, %v1796
    %v2117 = vpack.c.b16 %v1805, %v1801
    %v2118 = vpack.c.b16 %v1806, %v1802
    %v2119 = vpack.c.b16 %v1807, %v1803
    %v2120 = vpack.c.b16 %v1808, %v1804
    %v2121 = vpack.c.b16 %v1813, %v1809
    %v2122 = vpack.c.b16 %v1814, %v1810
    %v2123 = vpack.c.b16 %v1815, %v1811
    %v2124 = vpack.c.b16 %v1816, %v1812
    %v2125 = vpack.c.b16 %v1821, %v1817
    %v2126 = vpack.c.b16 %v1822, %v1818
    %v2127 = vpack.c.b16 %v1823, %v1819
    %v2128 = vpack.c.b16 %v1824, %v1820
    %v2129 = vpack.c.b16 %v1829, %v1825
    %v2130 = vpack.c.b16 %v1830, %v1826
    %v2131 = vpack.c.b16 %v1831, %v1827
    %v2132 = vpack.c.b16 %v1832, %v1828
    %v2133 = vpack.c.b16 %v1837, %v1833
    %v2134 = vpack.c.b16 %v1838, %v1834
    %v2135 = vpack.c.b16 %v1839, %v1835
    %v2136 = vpack.c.b16 %v1840, %v1836
    %v2137 = vpack.c.b16 %v1845, %v1841
    %v2138 = vpack.c.b16 %v1846, %v1842
    %v2139 = vpack.c.b16 %v1847, %v1843
    %v2140 = vpack.c.b16 %v1848, %v1844
    %v2141 = vpack.c.b16 %v1853, %v1849
    %v2142 = vpack.c.b16 %v1854, %v1850
    %v2143 = vpack.c.b16 %v1855, %v1851
    %v2144 = vpack.c.b16 %v1856, %v1852
    %v2145 = vpack.c.b16 %v1861, %v1857
    %v2146 = vpack.c.b16 %v1862, %v1858
    %v2147 = vpack.c.b16 %v1863, %v1859
    %v2148 = vpack.c.b16 %v1864, %v1860
    %v2149 = vpack.c.b16 %v1869, %v1865
    %v2150 = vpack.c.b16 %v1870, %v1866
    %v2151 = vpack.c.b16 %v1871, %v1867
    %v2152 = vpack.c.b16 %v1872, %v1868
    %v2153 = vpack.c.b16 %v1877, %v1873
    %v2154 = vpack.c.b16 %v1878, %v1874
    %v2155 = vpack.c.b16 %v1879, %v1875
    %v2156 = vpack.c.b16 %v1880, %v1876
    %v2157 = vpack.c.b16 %v1885, %v1881
    %v2158 = vpack.c.b16 %v1886, %v1882
    %v2159 = vpack.c.b16 %v1887, %v1883
    %v2160 = vpack.c.b16 %v1888, %v1884
    %v2161 = vpack.c.b16 %v1893, %v1889
    %v2162 = vpack.c.b16 %v1894, %v1890
    %v2163 = vpack.c.b16 %v1895, %v1891
    %v2164 = vpack.c.b16 %v1896, %v1892
    %v2165 = vpack.c.b16 %v1901, %v1897
    %v2166 = vpack.c.b16 %v1902, %v1898
    %v2167 = vpack.c.b16 %v1903, %v1899
    %v2168 = vpack.c.b16 %v1904, %v1900
    %v2169 = vpack.c.b16 %v1909, %v1905
    %v2170 = vpack.c.b16 %v1910, %v1906
    %v2171 = vpack.c.b16 %v1911, %v1907
    %v2172 = vpack.c.b16 %v1912, %v1908
    %v2173 = vpack.c.b16 %v1917, %v1913
    %v2174 = vpack.c.b16 %v1918, %v1914
    %v2175 = vpack.c.b16 %v1919, %v1915
    %v2176 = vpack.c.b16 %v1920, %v1916
    %v2177 = vpack.c.b16 %v1925, %v1921
    %v2178 = vpack.c.b16 %v1926, %v1922
    %v2179 = vpack.c.b16 %v1927, %v1923
    %v2180 = vpack.c.b16 %v1928, %v1924
    %v2181 = vpack.c.b16 %v1933, %v1929
    %v2182 = vpack.c.b16 %v1934, %v1930
    %v2183 = vpack.c.b16 %v1935, %v1931
    %v2184 = vpack.c.b16 %v1936, %v1932
    %v2185 = vpack.c.b16 %v1941, %v1937
    %v2186 = vpack.c.b16 %v1942, %v1938
    %v2187 = vpack.c.b16 %v1943, %v1939
    %v2188 = vpack.c.b16 %v1944, %v1940
    %v2189 = vpack.c.b16 %v1949, %v1945
    %v2190 = vpack.c.b16 %v1950, %v1946
    %v2191 = vpack.c.b16 %v1951, %v1947
    %v2192 = vpack.c.b16 %v1952, %v1948
    %v2193 = vpack.c.b16 %v1957, %v1953
    %v2194 = vpack.c.b16 %v1958, %v1954
    %v2195 = vpack.c.b16 %v1959, %v1955
    %v2196 = vpack.c.b16 %v1960, %v1956
    %v2197 = vpack.c.b16 %v1965, %v1961
    %v2198 = vpack.c.b16 %v1966, %v1962
    %v2199 = vpack.c.b16 %v1967, %v1963
    %v2200 = vpack.c.b16 %v1968, %v1964
    %v2201 = vpack.c.b16 %v1973, %v1969
    %v2202 = vpack.c.b16 %v1974, %v1970
    %v2203 = vpack.c.b16 %v1975, %v1971
    %v2204 = vpack.c.b16 %v1976, %v1972
    %v2205 = vpack.c.b16 %v1981, %v1977
    %v2206 = vpack.c.b16 %v1982, %v1978
    %v2207 = vpack.c.b16 %v1983, %v1979
    %v2208 = vpack.c.b16 %v1984, %v1980
    %v2209 = vpack.c.b16 %v1989, %v1985
    %v2210 = vpack.c.b16 %v1990, %v1986
    %v2211 = vpack.c.b16 %v1991, %v1987
    %v2212 = vpack.c.b16 %v1992, %v1988
    %v2213 = vpack.c.b16 %v1997, %v1993
    %v2214 = vpack.c.b16 %v1998, %v1994
    %v2215 = vpack.c.b16 %v1999, %v1995
    %v2216 = vpack.c.b16 %v2000, %v1996
    %v2217 = vpack.c.b16 %v2005, %v2001
    %v2218 = vpack.c.b16 %v2006, %v2002
    %v2219 = vpack.c.b16 %v2007, %v2003
    %v2220 = vpack.c.b16 %v2008, %v2004
    %v2221 = vpack.c.b16 %v2013, %v2009
    %v2222 = vpack.c.b16 %v2014, %v2010
    %v2223 = vpack.c.b16 %v2015, %v2011
    %v2224 = vpack.c.b16 %v2016, %v2012
    %v2225 = vpack.c.b16 %v2021, %v2017
    %v2226 = vpack.c.b16 %v2022, %v2018
    %v2227 = vpack.c.b16 %v2023, %v2019
    %v2228 = vpack.c.b16 %v2024, %v2020
    %v2229 = vpack.c.b16 %v2029, %v2025
    %v2230 = vpack.c.b16 %v2030, %v2026
    %v2231 = vpack.c.b16 %v2031, %v2027
    %v2232 = vpack.c.b16 %v2032, %v2028
    %v2233 = vpack.c.b16 %v2037, %v2033
    %v2234 = vpack.c.b16 %v2038, %v2034
    %v2235 = vpack.c.b16 %v2039, %v2035
    %v2236 = vpack.c.b16 %v2040, %v2036
    %v2237 = vpack.c.b16 %v2045, %v2041
    %v2238 = vpack.c.b16 %v2046, %v2042
    %v2239 = vpack.c.b16 %v2047, %v2043
    %v2240 = vpack.c.b16 %v2048, %v2044
    %2433 = vmatprep.subr.bf16.mxu0 %v2050
    %2434 = vmatpush1.bf16.msra.mxu0 %v2049
    %2435 = vmatprep.subr.bf16.mxu0 %v2054
    %2436 = vmatpush1.bf16.msra.mxu0 %v2053
    %2437 = vmatprep.subr.bf16.mxu0 %v2058
    %2438 = vmatpush1.bf16.msra.mxu0 %v2057
    %2439 = vmatprep.subr.bf16.mxu0 %v2062
    %2440 = vmatpush1.bf16.msra.mxu0 %v2061
    %2441 = vmatprep.subr.bf16.mxu0 %v2066
    %2442 = vmatpush1.bf16.msra.mxu0 %v2065
    %2443 = vmatprep.subr.bf16.mxu0 %v2070
    %2444 = vmatpush1.bf16.msra.mxu0 %v2069
    %2445 = vmatprep.subr.bf16.mxu0 %v2074
    %2446 = vmatpush1.bf16.msra.mxu0 %v2073
    %2447 = vmatprep.subr.bf16.mxu0 %v2078
    %2448 = vmatpush1.bf16.msra.mxu0 %v2077
    %2449 = vmatprep.subr.bf16.mxu0 %v2082
    %2450 = vmatpush1.bf16.msra.mxu0 %v2081
    %2451 = vmatprep.subr.bf16.mxu0 %v2086
    %2452 = vmatpush1.bf16.msra.mxu0 %v2085
    %2453 = vmatprep.subr.bf16.mxu0 %v2090
    %2454 = vmatpush1.bf16.msra.mxu0 %v2089
    %2455 = vmatprep.subr.bf16.mxu0 %v2094
    %2456 = vmatpush1.bf16.msra.mxu0 %v2093
    %2457 = vmatprep.subr.bf16.mxu0 %v2098
    %2458 = vmatpush1.bf16.msra.mxu0 %v2097
    %2459 = vmatprep.subr.bf16.mxu0 %v2102
    %2460 = vmatpush1.bf16.msra.mxu0 %v2101
    %2461 = vmatprep.subr.bf16.mxu0 %v2106
    %2462 = vmatpush1.bf16.msra.mxu0 %v2105
    %2463 = vmatprep.subr.bf16.mxu0 %v2110
    %2464 = vmatpush1.bf16.msra.mxu0 %v2109
    %2465 = vmatprep.mubr.bf16.mxu0 %v1447
    %2466 = vmatmul.mubr.bf16.gmra.mrb[0].mxu0 %v1446
    %v2467 = vpop.f32.mrb[0].mxu0
    %v2468 = vadd.f32 %v1456, %v2467
    %v2469 = vpop.f32.mrb[0].mxu0
    %v2470 = vadd.f32 %v1460, %v2469
    %v2471 = vpop.f32.mrb[0].mxu0
    %v2472 = vpop.f32.mrb[0].mxu0
    %2473 = vdwg.mxu0
    %2474 = vmatprep.subr.bf16.mxu0 %v2114
    %2475 = vmatpush1.bf16.msra.mxu0 %v2113
    %2476 = vmatprep.subr.bf16.mxu0 %v2118
    %2477 = vmatpush1.bf16.msra.mxu0 %v2117
    %2478 = vmatprep.subr.bf16.mxu0 %v2122
    %2479 = vmatpush1.bf16.msra.mxu0 %v2121
    %2480 = vmatprep.subr.bf16.mxu0 %v2126
    %2481 = vmatpush1.bf16.msra.mxu0 %v2125
    %2482 = vmatprep.subr.bf16.mxu0 %v2130
    %2483 = vmatpush1.bf16.msra.mxu0 %v2129
    %2484 = vmatprep.subr.bf16.mxu0 %v2134
    %2485 = vmatpush1.bf16.msra.mxu0 %v2133
    %2486 = vmatprep.subr.bf16.mxu0 %v2138
    %2487 = vmatpush1.bf16.msra.mxu0 %v2137
    %2488 = vmatprep.subr.bf16.mxu0 %v2142
    %2489 = vmatpush1.bf16.msra.mxu0 %v2141
    %2490 = vmatprep.subr.bf16.mxu0 %v2146
    %2491 = vmatpush1.bf16.msra.mxu0 %v2145
    %2492 = vmatprep.subr.bf16.mxu0 %v2150
    %2493 = vmatpush1.bf16.msra.mxu0 %v2149
    %2494 = vmatprep.subr.bf16.mxu0 %v2154
    %2495 = vmatpush1.bf16.msra.mxu0 %v2153
    %2496 = vmatprep.subr.bf16.mxu0 %v2158
    %2497 = vmatpush1.bf16.msra.mxu0 %v2157
    %2498 = vmatprep.subr.bf16.mxu0 %v2162
    %2499 = vmatpush1.bf16.msra.mxu0 %v2161
    %2500 = vmatprep.subr.bf16.mxu0 %v2166
    %2501 = vmatpush1.bf16.msra.mxu0 %v2165
    %2502 = vmatprep.subr.bf16.mxu0 %v2170
    %2503 = vmatpush1.bf16.msra.mxu0 %v2169
    %2504 = vmatprep.subr.bf16.mxu0 %v2174
    %2505 = vmatpush1.bf16.msra.mxu0 %v2173
    %2506 = vmatprep.mubr.bf16.mxu0 %v1449
    %2507 = vmatmul.mubr.bf16.gmra.mrb[0].mxu0 %v1448
    %v2508 = vpop.f32.mrb[0].mxu0
    %v2509 = vadd.f32 %v2468, %v2508
    %v2510 = vpop.f32.mrb[0].mxu0
    %v2511 = vadd.f32 %v2470, %v2510
    %v2512 = vpop.f32.mrb[0].mxu0
    %v2513 = vpop.f32.mrb[0].mxu0
    %2514 = vdwg.mxu0
    %2515 = vmatprep.subr.bf16.mxu0 %v2178
    %2516 = vmatpush1.bf16.msra.mxu0 %v2177
    %2517 = vmatprep.subr.bf16.mxu0 %v2182
    %2518 = vmatpush1.bf16.msra.mxu0 %v2181
    %2519 = vmatprep.subr.bf16.mxu0 %v2186
    %2520 = vmatpush1.bf16.msra.mxu0 %v2185
    %2521 = vmatprep.subr.bf16.mxu0 %v2190
    %2522 = vmatpush1.bf16.msra.mxu0 %v2189
    %2523 = vmatprep.subr.bf16.mxu0 %v2194
    %2524 = vmatpush1.bf16.msra.mxu0 %v2193
    %2525 = vmatprep.subr.bf16.mxu0 %v2198
    %2526 = vmatpush1.bf16.msra.mxu0 %v2197
    %2527 = vmatprep.subr.bf16.mxu0 %v2202
    %2528 = vmatpush1.bf16.msra.mxu0 %v2201
    %2529 = vmatprep.subr.bf16.mxu0 %v2206
    %2530 = vmatpush1.bf16.msra.mxu0 %v2205
    %2531 = vmatprep.subr.bf16.mxu0 %v2210
    %2532 = vmatpush1.bf16.msra.mxu0 %v2209
    %2533 = vmatprep.subr.bf16.mxu0 %v2214
    %2534 = vmatpush1.bf16.msra.mxu0 %v2213
    %2535 = vmatprep.subr.bf16.mxu0 %v2218
    %2536 = vmatpush1.bf16.msra.mxu0 %v2217
    %2537 = vmatprep.subr.bf16.mxu0 %v2222
    %2538 = vmatpush1.bf16.msra.mxu0 %v2221
    %2539 = vmatprep.subr.bf16.mxu0 %v2226
    %2540 = vmatpush1.bf16.msra.mxu0 %v2225
    %2541 = vmatprep.subr.bf16.mxu0 %v2230
    %2542 = vmatpush1.bf16.msra.mxu0 %v2229
    %2543 = vmatprep.subr.bf16.mxu0 %v2234
    %2544 = vmatpush1.bf16.msra.mxu0 %v2233
    %2545 = vmatprep.subr.bf16.mxu0 %v2238
    %2546 = vmatpush1.bf16.msra.mxu0 %v2237
    %2547 = vmatprep.mubr.bf16.mxu0 %v1451
    %2548 = vmatmul.mubr.bf16.gmra.mrb[0].mxu0 %v1450
    %v2549 = vpop.f32.mrb[0].mxu0
    %v2550 = vadd.f32 %v2509, %v2549
    %v2551 = vpop.f32.mrb[0].mxu0
    %v2552 = vadd.f32 %v2511, %v2551
    %v2553 = vpop.f32.mrb[0].mxu0
    %v2554 = vpop.f32.mrb[0].mxu0
    %2555 = vdwg.mxu0
    %2556 = vmatprep.subr.bf16.mxu0 %v2052
    %2557 = vmatpush1.bf16.msra.mxu0 %v2051
    %2558 = vmatprep.subr.bf16.mxu0 %v2056
    %2559 = vmatpush1.bf16.msra.mxu0 %v2055
    %2560 = vmatprep.subr.bf16.mxu0 %v2060
    %2561 = vmatpush1.bf16.msra.mxu0 %v2059
    %2562 = vmatprep.subr.bf16.mxu0 %v2064
    %2563 = vmatpush1.bf16.msra.mxu0 %v2063
    %2564 = vmatprep.subr.bf16.mxu0 %v2068
    %2565 = vmatpush1.bf16.msra.mxu0 %v2067
    %2566 = vmatprep.subr.bf16.mxu0 %v2072
    %2567 = vmatpush1.bf16.msra.mxu0 %v2071
    %2568 = vmatprep.subr.bf16.mxu0 %v2076
    %2569 = vmatpush1.bf16.msra.mxu0 %v2075
    %2570 = vmatprep.subr.bf16.mxu0 %v2080
    %2571 = vmatpush1.bf16.msra.mxu0 %v2079
    %2572 = vmatprep.subr.bf16.mxu0 %v2084
    %2573 = vmatpush1.bf16.msra.mxu0 %v2083
    %2574 = vmatprep.subr.bf16.mxu0 %v2088
    %2575 = vmatpush1.bf16.msra.mxu0 %v2087
    %2576 = vmatprep.subr.bf16.mxu0 %v2092
    %2577 = vmatpush1.bf16.msra.mxu0 %v2091
    %2578 = vmatprep.subr.bf16.mxu0 %v2096
    %2579 = vmatpush1.bf16.msra.mxu0 %v2095
    %2580 = vmatprep.subr.bf16.mxu0 %v2100
    %2581 = vmatpush1.bf16.msra.mxu0 %v2099
    %2582 = vmatprep.subr.bf16.mxu0 %v2104
    %2583 = vmatpush1.bf16.msra.mxu0 %v2103
    %2584 = vmatprep.subr.bf16.mxu0 %v2108
    %2585 = vmatpush1.bf16.msra.mxu0 %v2107
    %2586 = vmatprep.subr.bf16.mxu0 %v2112
    %2587 = vmatpush1.bf16.msra.mxu0 %v2111
    %2588 = vmatprep.mubr.bf16.mxu0 %v1447
    %2589 = vmatmul.mubr.bf16.gmra.mrb[0].mxu0 %v1446
    %v2590 = vpop.f32.mrb[0].mxu0
    %v2591 = vadd.f32 %v1464, %v2590
    %v2592 = vpop.f32.mrb[0].mxu0
    %v2593 = vadd.f32 %v1468, %v2592
    %v2594 = vpop.f32.mrb[0].mxu0
    %v2595 = vpop.f32.mrb[0].mxu0
    %2596 = vdwg.mxu0
    %2597 = vmatprep.subr.bf16.mxu0 %v2116
    %2598 = vmatpush1.bf16.msra.mxu0 %v2115
    %2599 = vmatprep.subr.bf16.mxu0 %v2120
    %2600 = vmatpush1.bf16.msra.mxu0 %v2119
    %2601 = vmatprep.subr.bf16.mxu0 %v2124
    %2602 = vmatpush1.bf16.msra.mxu0 %v2123
    %2603 = vmatprep.subr.bf16.mxu0 %v2128
    %2604 = vmatpush1.bf16.msra.mxu0 %v2127
    %2605 = vmatprep.subr.bf16.mxu0 %v2132
    %2606 = vmatpush1.bf16.msra.mxu0 %v2131
    %2607 = vmatprep.subr.bf16.mxu0 %v2136
    %2608 = vmatpush1.bf16.msra.mxu0 %v2135
    %2609 = vmatprep.subr.bf16.mxu0 %v2140
    %2610 = vmatpush1.bf16.msra.mxu0 %v2139
    %2611 = vmatprep.subr.bf16.mxu0 %v2144
    %2612 = vmatpush1.bf16.msra.mxu0 %v2143
    %2613 = vmatprep.subr.bf16.mxu0 %v2148
    %2614 = vmatpush1.bf16.msra.mxu0 %v2147
    %2615 = vmatprep.subr.bf16.mxu0 %v2152
    %2616 = vmatpush1.bf16.msra.mxu0 %v2151
    %2617 = vmatprep.subr.bf16.mxu0 %v2156
    %2618 = vmatpush1.bf16.msra.mxu0 %v2155
    %2619 = vmatprep.subr.bf16.mxu0 %v2160
    %2620 = vmatpush1.bf16.msra.mxu0 %v2159
    %2621 = vmatprep.subr.bf16.mxu0 %v2164
    %2622 = vmatpush1.bf16.msra.mxu0 %v2163
    %2623 = vmatprep.subr.bf16.mxu0 %v2168
    %2624 = vmatpush1.bf16.msra.mxu0 %v2167
    %2625 = vmatprep.subr.bf16.mxu0 %v2172
    %2626 = vmatpush1.bf16.msra.mxu0 %v2171
    %2627 = vmatprep.subr.bf16.mxu0 %v2176
    %2628 = vmatpush1.bf16.msra.mxu0 %v2175
    %2629 = vmatprep.mubr.bf16.mxu0 %v1449
    %2630 = vmatmul.mubr.bf16.gmra.mrb[0].mxu0 %v1448
    %v2631 = vpop.f32.mrb[0].mxu0
    %v2632 = vadd.f32 %v2591, %v2631
    %v2633 = vpop.f32.mrb[0].mxu0
    %v2634 = vadd.f32 %v2593, %v2633
    %v2635 = vpop.f32.mrb[0].mxu0
    %v2636 = vpop.f32.mrb[0].mxu0
    %2637 = vdwg.mxu0
    %2638 = vmatprep.subr.bf16.mxu0 %v2180
    %2639 = vmatpush1.bf16.msra.mxu0 %v2179
    %2640 = vmatprep.subr.bf16.mxu0 %v2184
    %2641 = vmatpush1.bf16.msra.mxu0 %v2183
    %2642 = vmatprep.subr.bf16.mxu0 %v2188
    %2643 = vmatpush1.bf16.msra.mxu0 %v2187
    %2644 = vmatprep.subr.bf16.mxu0 %v2192
    %2645 = vmatpush1.bf16.msra.mxu0 %v2191
    %2646 = vmatprep.subr.bf16.mxu0 %v2196
    %2647 = vmatpush1.bf16.msra.mxu0 %v2195
    %2648 = vmatprep.subr.bf16.mxu0 %v2200
    %2649 = vmatpush1.bf16.msra.mxu0 %v2199
    %2650 = vmatprep.subr.bf16.mxu0 %v2204
    %2651 = vmatpush1.bf16.msra.mxu0 %v2203
    %2652 = vmatprep.subr.bf16.mxu0 %v2208
    %2653 = vmatpush1.bf16.msra.mxu0 %v2207
    %2654 = vmatprep.subr.bf16.mxu0 %v2212
    %2655 = vmatpush1.bf16.msra.mxu0 %v2211
    %2656 = vmatprep.subr.bf16.mxu0 %v2216
    %2657 = vmatpush1.bf16.msra.mxu0 %v2215
    %2658 = vmatprep.subr.bf16.mxu0 %v2220
    %2659 = vmatpush1.bf16.msra.mxu0 %v2219
    %2660 = vmatprep.subr.bf16.mxu0 %v2224
    %2661 = vmatpush1.bf16.msra.mxu0 %v2223
    %2662 = vmatprep.subr.bf16.mxu0 %v2228
    %2663 = vmatpush1.bf16.msra.mxu0 %v2227
    %2664 = vmatprep.subr.bf16.mxu0 %v2232
    %2665 = vmatpush1.bf16.msra.mxu0 %v2231
    %2666 = vmatprep.subr.bf16.mxu0 %v2236
    %2667 = vmatpush1.bf16.msra.mxu0 %v2235
    %2668 = vmatprep.subr.bf16.mxu0 %v2240
    %2669 = vmatpush1.bf16.msra.mxu0 %v2239
    %2670 = vmatprep.mubr.bf16.mxu0 %v1451
    %2671 = vmatmul.mubr.bf16.gmra.mrb[0].mxu0 %v1450
    %v2672 = vpop.f32.mrb[0].mxu0
    %v2673 = vadd.f32 %v2632, %v2672
    %v2674 = vpop.f32.mrb[0].mxu0
    %v2675 = vadd.f32 %v2634, %v2674
    %v2676 = vpop.f32.mrb[0].mxu0
    %v2677 = vpop.f32.mrb[0].mxu0
    %2678 = vdwg.mxu0
    %s2679 = smul.u32 4, 64
    %s2680 = smul.u32 %s2679, 2
    %s2681 = sshll.u32 %s2680, 4
    %2682 = dma.done [#allocation8], %s2681
    %v2683 = vld [vmem:[#allocation2] sm:$0xff]
    %v2684 = vld [vmem:[#allocation2 + $0x8] sm:$0xff]
    %v2685 = vld [vmem:[#allocation2 + $0x10] sm:$0xff]
    %v2686 = vld [vmem:[#allocation2 + $0x18] sm:$0xff]
    %v2687 = vld [vmem:[#allocation2 + $0x20] sm:$0xff]
    %v2688 = vld [vmem:[#allocation2 + $0x28] sm:$0xff]
    %v2689 = vld [vmem:[#allocation2 + $0x30] sm:$0xff]
    %v2690 = vld [vmem:[#allocation2 + $0x38] sm:$0xff]
    %v2691 = vld [vmem:[#allocation2 + $0x40] sm:$0xff]
    %v2692 = vld [vmem:[#allocation2 + $0x48] sm:$0xff]
    %v2693 = vld [vmem:[#allocation2 + $0x50] sm:$0xff]
    %v2694 = vld [vmem:[#allocation2 + $0x58] sm:$0xff]
    %v2695 = vld [vmem:[#allocation2 + $0x60] sm:$0xff]
    %v2696 = vld [vmem:[#allocation2 + $0x68] sm:$0xff]
    %v2697 = vld [vmem:[#allocation2 + $0x70] sm:$0xff]
    %v2698 = vld [vmem:[#allocation2 + $0x78] sm:$0xff]
    %v2699 = vld [vmem:[#allocation2 + $0x80] sm:$0xff]
    %v2700 = vld [vmem:[#allocation2 + $0x88] sm:$0xff]
    %v2701 = vld [vmem:[#allocation2 + $0x90] sm:$0xff]
    %v2702 = vld [vmem:[#allocation2 + $0x98] sm:$0xff]
    %v2703 = vld [vmem:[#allocation2 + $0xa0] sm:$0xff]
    %v2704 = vld [vmem:[#allocation2 + $0xa8] sm:$0xff]
    %v2705 = vld [vmem:[#allocation2 + $0xb0] sm:$0xff]
    %v2706 = vld [vmem:[#allocation2 + $0xb8] sm:$0xff]
    %v2707 = vld [vmem:[#allocation2 + $0xc0] sm:$0xff]
    %v2708 = vld [vmem:[#allocation2 + $0xc8] sm:$0xff]
    %v2709 = vld [vmem:[#allocation2 + $0xd0] sm:$0xff]
    %v2710 = vld [vmem:[#allocation2 + $0xd8] sm:$0xff]
    %v2711 = vld [vmem:[#allocation2 + $0xe0] sm:$0xff]
    %v2712 = vld [vmem:[#allocation2 + $0xe8] sm:$0xff]
    %v2713 = vld [vmem:[#allocation2 + $0xf0] sm:$0xff]
    %v2714 = vld [vmem:[#allocation2 + $0xf8] sm:$0xff]
    %v2715 = vld [vmem:[#allocation2 + $0x100] sm:$0xff]
    %v2716 = vld [vmem:[#allocation2 + $0x108] sm:$0xff]
    %v2717 = vld [vmem:[#allocation2 + $0x110] sm:$0xff]
    %v2718 = vld [vmem:[#allocation2 + $0x118] sm:$0xff]
    %v2719 = vld [vmem:[#allocation2 + $0x120] sm:$0xff]
    %v2720 = vld [vmem:[#allocation2 + $0x128] sm:$0xff]
    %v2721 = vld [vmem:[#allocation2 + $0x130] sm:$0xff]
    %v2722 = vld [vmem:[#allocation2 + $0x138] sm:$0xff]
    %v2723 = vld [vmem:[#allocation2 + $0x140] sm:$0xff]
    %v2724 = vld [vmem:[#allocation2 + $0x148] sm:$0xff]
    %v2725 = vld [vmem:[#allocation2 + $0x150] sm:$0xff]
    %v2726 = vld [vmem:[#allocation2 + $0x158] sm:$0xff]
    %v2727 = vld [vmem:[#allocation2 + $0x160] sm:$0xff]
    %v2728 = vld [vmem:[#allocation2 + $0x168] sm:$0xff]
    %v2729 = vld [vmem:[#allocation2 + $0x170] sm:$0xff]
    %v2730 = vld [vmem:[#allocation2 + $0x178] sm:$0xff]
    %v2731 = vld [vmem:[#allocation2 + $0x180] sm:$0xff]
    %v2732 = vld [vmem:[#allocation2 + $0x188] sm:$0xff]
    %v2733 = vld [vmem:[#allocation2 + $0x190] sm:$0xff]
    %v2734 = vld [vmem:[#allocation2 + $0x198] sm:$0xff]
    %v2735 = vld [vmem:[#allocation2 + $0x1a0] sm:$0xff]
    %v2736 = vld [vmem:[#allocation2 + $0x1a8] sm:$0xff]
    %v2737 = vld [vmem:[#allocation2 + $0x1b0] sm:$0xff]
    %v2738 = vld [vmem:[#allocation2 + $0x1b8] sm:$0xff]
    %v2739 = vld [vmem:[#allocation2 + $0x1c0] sm:$0xff]
    %v2740 = vld [vmem:[#allocation2 + $0x1c8] sm:$0xff]
    %v2741 = vld [vmem:[#allocation2 + $0x1d0] sm:$0xff]
    %v2742 = vld [vmem:[#allocation2 + $0x1d8] sm:$0xff]
    %v2743 = vld [vmem:[#allocation2 + $0x1e0] sm:$0xff]
    %v2744 = vld [vmem:[#allocation2 + $0x1e8] sm:$0xff]
    %v2745 = vld [vmem:[#allocation2 + $0x1f0] sm:$0xff]
    %v2746 = vld [vmem:[#allocation2 + $0x1f8] sm:$0xff]
    %v2747 = vpack.c.bf16 %v1166, %v1166
    %v2748 = vpack.c.bf16 %v1168, %v1168
    %v2749 = vpack.c.bf16 %v1248, %v1248
    %v2750 = vpack.c.bf16 %v1250, %v1250
    %2751 = vmatprep.subr.bf16.mxu0 %v2684
    %2752 = vmatpush1.bf16.msra.mxu0 %v2683
    %2753 = vmatprep.subr.bf16.mxu0 %v2686
    %2754 = vmatpush1.bf16.msra.mxu0 %v2685
    %2755 = vmatprep.subr.bf16.mxu0 %v2688
    %2756 = vmatpush1.bf16.msra.mxu0 %v2687
    %2757 = vmatprep.subr.bf16.mxu0 %v2690
    %2758 = vmatpush1.bf16.msra.mxu0 %v2689
    %2759 = vmatprep.subr.bf16.mxu0 %v2692
    %2760 = vmatpush1.bf16.msra.mxu0 %v2691
    %2761 = vmatprep.subr.bf16.mxu0 %v2694
    %2762 = vmatpush1.bf16.msra.mxu0 %v2693
    %2763 = vmatprep.subr.bf16.mxu0 %v2696
    %2764 = vmatpush1.bf16.msra.mxu0 %v2695
    %2765 = vmatprep.subr.bf16.mxu0 %v2698
    %2766 = vmatpush1.bf16.msra.mxu0 %v2697
    %2767 = vmatprep.subr.bf16.mxu0 %v2700
    %2768 = vmatpush1.bf16.msra.mxu0 %v2699
    %2769 = vmatprep.subr.bf16.mxu0 %v2702
    %2770 = vmatpush1.bf16.msra.mxu0 %v2701
    %2771 = vmatprep.subr.bf16.mxu0 %v2704
    %2772 = vmatpush1.bf16.msra.mxu0 %v2703
    %2773 = vmatprep.subr.bf16.mxu0 %v2706
    %2774 = vmatpush1.bf16.msra.mxu0 %v2705
    %2775 = vmatprep.subr.bf16.mxu0 %v2708
    %2776 = vmatpush1.bf16.msra.mxu0 %v2707
    %2777 = vmatprep.subr.bf16.mxu0 %v2710
    %2778 = vmatpush1.bf16.msra.mxu0 %v2709
    %2779 = vmatprep.subr.bf16.mxu0 %v2712
    %2780 = vmatpush1.bf16.msra.mxu0 %v2711
    %2781 = vmatprep.subr.bf16.mxu0 %v2714
    %2782 = vmatpush1.bf16.msra.mxu0 %v2713
    %2783 = vmatprep.mubr.bf16.mxu0 %v2748
    %2784 = vmatmul.mubr.bf16.gmra.mrb[0].mxu0 %v2747
    %v2785 = vpop.f32.mrb[0].mxu0
    %v2786 = vadd.f32 0.0, %v2785
    %v2787 = vpop.f32.mrb[0].mxu0
    %v2788 = vadd.f32 0.0, %v2787
    %v2789 = vpop.f32.mrb[0].mxu0
    %v2790 = vpop.f32.mrb[0].mxu0
    %2791 = vdwg.mxu0
    %2792 = vmatprep.subr.bf16.mxu0 %v2716
    %2793 = vmatpush1.bf16.msra.mxu0 %v2715
    %2794 = vmatprep.subr.bf16.mxu0 %v2718
    %2795 = vmatpush1.bf16.msra.mxu0 %v2717
    %2796 = vmatprep.subr.bf16.mxu0 %v2720
    %2797 = vmatpush1.bf16.msra.mxu0 %v2719
    %2798 = vmatprep.subr.bf16.mxu0 %v2722
    %2799 = vmatpush1.bf16.msra.mxu0 %v2721
    %2800 = vmatprep.subr.bf16.mxu0 %v2724
    %2801 = vmatpush1.bf16.msra.mxu0 %v2723
    %2802 = vmatprep.subr.bf16.mxu0 %v2726
    %2803 = vmatpush1.bf16.msra.mxu0 %v2725
    %2804 = vmatprep.subr.bf16.mxu0 %v2728
    %2805 = vmatpush1.bf16.msra.mxu0 %v2727
    %2806 = vmatprep.subr.bf16.mxu0 %v2730
    %2807 = vmatpush1.bf16.msra.mxu0 %v2729
    %2808 = vmatprep.subr.bf16.mxu0 %v2732
    %2809 = vmatpush1.bf16.msra.mxu0 %v2731
    %2810 = vmatprep.subr.bf16.mxu0 %v2734
    %2811 = vmatpush1.bf16.msra.mxu0 %v2733
    %2812 = vmatprep.subr.bf16.mxu0 %v2736
    %2813 = vmatpush1.bf16.msra.mxu0 %v2735
    %2814 = vmatprep.subr.bf16.mxu0 %v2738
    %2815 = vmatpush1.bf16.msra.mxu0 %v2737
    %2816 = vmatprep.subr.bf16.mxu0 %v2740
    %2817 = vmatpush1.bf16.msra.mxu0 %v2739
    %2818 = vmatprep.subr.bf16.mxu0 %v2742
    %2819 = vmatpush1.bf16.msra.mxu0 %v2741
    %2820 = vmatprep.subr.bf16.mxu0 %v2744
    %2821 = vmatpush1.bf16.msra.mxu0 %v2743
    %2822 = vmatprep.subr.bf16.mxu0 %v2746
    %2823 = vmatpush1.bf16.msra.mxu0 %v2745
    %2824 = vmatprep.mubr.bf16.mxu0 %v2750
    %2825 = vmatmul.mubr.bf16.gmra.mrb[0].mxu0 %v2749
    %v2826 = vpop.f32.mrb[0].mxu0
    %v2827 = vadd.f32 %v2786, %v2826
    %v2828 = vpop.f32.mrb[0].mxu0
    %v2829 = vadd.f32 %v2788, %v2828
    %v2830 = vpop.f32.mrb[0].mxu0
    %v2831 = vpop.f32.mrb[0].mxu0
    %2832 = vdwg.mxu0
    %v2833 = vrot.slane %v2827, 4
    %v2834 = vadd.f32 %v2827, %v2833
    %v2835 = vrot.slane %v2834, 2
    %v2836 = vadd.f32 %v2834, %v2835
    %v2837 = vrot.slane %v2836, 1
    %v2838 = vadd.f32 %v2836, %v2837
    %v2839 = vrot.slane %v2829, 4
    %v2840 = vadd.f32 %v2829, %v2839
    %v2841 = vrot.slane %v2840, 2
    %v2842 = vadd.f32 %v2840, %v2841
    %v2843 = vrot.slane %v2842, 1
    %v2844 = vadd.f32 %v2842, %v2843
    %v2845 = vmul.f32 %v2827, %v2827
    %v2846 = vmul.f32 %v2829, %v2829
    %v2847 = vrot.slane %v2845, 4
    %v2848 = vadd.f32 %v2845, %v2847
    %v2849 = vrot.slane %v2848, 2
    %v2850 = vadd.f32 %v2848, %v2849
    %v2851 = vrot.slane %v2850, 1
    %v2852 = vadd.f32 %v2850, %v2851
    %v2853 = vrot.slane %v2846, 4
    %v2854 = vadd.f32 %v2846, %v2853
    %v2855 = vrot.slane %v2854, 2
    %v2856 = vadd.f32 %v2854, %v2855
    %v2857 = vrot.slane %v2856, 1
    %v2858 = vadd.f32 %v2856, %v2857
    %v2859 = vmul.f32 %v2838, 0.125
    %v2860 = vmul.f32 %v2844, 0.125
    %v2861 = vmul.f32 %v2852, 0.125
    %v2862 = vmul.f32 %v2858, 0.125
    %v2863 = vmul.f32 %v2859, %v2859
    %v2864 = vmul.f32 %v2860, %v2860
    %v2865 = vsub.f32 %v2861, %v2863
    %v2866 = vsub.f32 %v2862, %v2864
    %v2867 = vmax.f32 %v2865, 0.0
    %v2868 = vmax.f32 %v2866, 0.0
    %v2869 = vsub.f32 %v2827, %v2859
    %v2870 = vsub.f32 %v2829, %v2860
    %v2871 = vadd.f32 %v2867, 1e-05
    %v2872 = vadd.f32 %v2868, 1e-05
    %v2873 = vrsqrt.pop %v2871
    %v2874 = vrsqrt.pop %v2872
    %v2875 = vmul.f32 %v2869, %v2873
    %v2876 = vmul.f32 %v2870, %v2874
    %v2877 = vmax.f32 %v2875, 0.0
    %v2878 = vmax.f32 %v2876, 0.0
    %s2879 = sshll.u32 %s2680, 4
    %2880 = dma.done %s121, %s2879
    %v2881 = vld [vmem:[#allocation4] sm:$0xff]
    %v2882 = vld [vmem:[#allocation4 + $0x8] sm:$0xff]
    %v2883 = vld [vmem:[#allocation4 + $0x10] sm:$0xff]
    %v2884 = vld [vmem:[#allocation4 + $0x18] sm:$0xff]
    %v2885 = vld [vmem:[#allocation4 + $0x20] sm:$0xff]
    %v2886 = vld [vmem:[#allocation4 + $0x28] sm:$0xff]
    %v2887 = vld [vmem:[#allocation4 + $0x30] sm:$0xff]
    %v2888 = vld [vmem:[#allocation4 + $0x38] sm:$0xff]
    %v2889 = vld [vmem:[#allocation4 + $0x40] sm:$0xff]
    %v2890 = vld [vmem:[#allocation4 + $0x48] sm:$0xff]
    %v2891 = vld [vmem:[#allocation4 + $0x50] sm:$0xff]
    %v2892 = vld [vmem:[#allocation4 + $0x58] sm:$0xff]
    %v2893 = vld [vmem:[#allocation4 + $0x60] sm:$0xff]
    %v2894 = vld [vmem:[#allocation4 + $0x68] sm:$0xff]
    %v2895 = vld [vmem:[#allocation4 + $0x70] sm:$0xff]
    %v2896 = vld [vmem:[#allocation4 + $0x78] sm:$0xff]
    %v2897 = vld [vmem:[#allocation4 + $0x80] sm:$0xff]
    %v2898 = vld [vmem:[#allocation4 + $0x88] sm:$0xff]
    %v2899 = vld [vmem:[#allocation4 + $0x90] sm:$0xff]
    %v2900 = vld [vmem:[#allocation4 + $0x98] sm:$0xff]
    %v2901 = vld [vmem:[#allocation4 + $0xa0] sm:$0xff]
    %v2902 = vld [vmem:[#allocation4 + $0xa8] sm:$0xff]
    %v2903 = vld [vmem:[#allocation4 + $0xb0] sm:$0xff]
    %v2904 = vld [vmem:[#allocation4 + $0xb8] sm:$0xff]
    %v2905 = vld [vmem:[#allocation4 + $0xc0] sm:$0xff]
    %v2906 = vld [vmem:[#allocation4 + $0xc8] sm:$0xff]
    %v2907 = vld [vmem:[#allocation4 + $0xd0] sm:$0xff]
    %v2908 = vld [vmem:[#allocation4 + $0xd8] sm:$0xff]
    %v2909 = vld [vmem:[#allocation4 + $0xe0] sm:$0xff]
    %v2910 = vld [vmem:[#allocation4 + $0xe8] sm:$0xff]
    %v2911 = vld [vmem:[#allocation4 + $0xf0] sm:$0xff]
    %v2912 = vld [vmem:[#allocation4 + $0xf8] sm:$0xff]
    %v2913 = vld [vmem:[#allocation4 + $0x100] sm:$0xff]
    %v2914 = vld [vmem:[#allocation4 + $0x108] sm:$0xff]
    %v2915 = vld [vmem:[#allocation4 + $0x110] sm:$0xff]
    %v2916 = vld [vmem:[#allocation4 + $0x118] sm:$0xff]
    %v2917 = vld [vmem:[#allocation4 + $0x120] sm:$0xff]
    %v2918 = vld [vmem:[#allocation4 + $0x128] sm:$0xff]
    %v2919 = vld [vmem:[#allocation4 + $0x130] sm:$0xff]
    %v2920 = vld [vmem:[#allocation4 + $0x138] sm:$0xff]
    %v2921 = vld [vmem:[#allocation4 + $0x140] sm:$0xff]
    %v2922 = vld [vmem:[#allocation4 + $0x148] sm:$0xff]
    %v2923 = vld [vmem:[#allocation4 + $0x150] sm:$0xff]
    %v2924 = vld [vmem:[#allocation4 + $0x158] sm:$0xff]
    %v2925 = vld [vmem:[#allocation4 + $0x160] sm:$0xff]
    %v2926 = vld [vmem:[#allocation4 + $0x168] sm:$0xff]
    %v2927 = vld [vmem:[#allocation4 + $0x170] sm:$0xff]
    %v2928 = vld [vmem:[#allocation4 + $0x178] sm:$0xff]
    %v2929 = vld [vmem:[#allocation4 + $0x180] sm:$0xff]
    %v2930 = vld [vmem:[#allocation4 + $0x188] sm:$0xff]
    %v2931 = vld [vmem:[#allocation4 + $0x190] sm:$0xff]
    %v2932 = vld [vmem:[#allocation4 + $0x198] sm:$0xff]
    %v2933 = vld [vmem:[#allocation4 + $0x1a0] sm:$0xff]
    %v2934 = vld [vmem:[#allocation4 + $0x1a8] sm:$0xff]
    %v2935 = vld [vmem:[#allocation4 + $0x1b0] sm:$0xff]
    %v2936 = vld [vmem:[#allocation4 + $0x1b8] sm:$0xff]
    %v2937 = vld [vmem:[#allocation4 + $0x1c0] sm:$0xff]
    %v2938 = vld [vmem:[#allocation4 + $0x1c8] sm:$0xff]
    %v2939 = vld [vmem:[#allocation4 + $0x1d0] sm:$0xff]
    %v2940 = vld [vmem:[#allocation4 + $0x1d8] sm:$0xff]
    %v2941 = vld [vmem:[#allocation4 + $0x1e0] sm:$0xff]
    %v2942 = vld [vmem:[#allocation4 + $0x1e8] sm:$0xff]
    %v2943 = vld [vmem:[#allocation4 + $0x1f0] sm:$0xff]
    %v2944 = vld [vmem:[#allocation4 + $0x1f8] sm:$0xff]
    %v2945 = vpack.c.bf16 %v2550, %v2550
    %v2946 = vpack.c.bf16 %v2552, %v2552
    %v2947 = vpack.c.bf16 %v2673, %v2673
    %v2948 = vpack.c.bf16 %v2675, %v2675
    %2949 = vmatprep.subr.bf16.mxu0 %v2882
    %2950 = vmatpush1.bf16.msra.mxu0 %v2881
    %2951 = vmatprep.subr.bf16.mxu0 %v2884
    %2952 = vmatpush1.bf16.msra.mxu0 %v2883
    %2953 = vmatprep.subr.bf16.mxu0 %v2886
    %2954 = vmatpush1.bf16.msra.mxu0 %v2885
    %2955 = vmatprep.subr.bf16.mxu0 %v2888
    %2956 = vmatpush1.bf16.msra.mxu0 %v2887
    %2957 = vmatprep.subr.bf16.mxu0 %v2890
    %2958 = vmatpush1.bf16.msra.mxu0 %v2889
    %2959 = vmatprep.subr.bf16.mxu0 %v2892
    %2960 = vmatpush1.bf16.msra.mxu0 %v2891
    %2961 = vmatprep.subr.bf16.mxu0 %v2894
    %2962 = vmatpush1.bf16.msra.mxu0 %v2893
    %2963 = vmatprep.subr.bf16.mxu0 %v2896
    %2964 = vmatpush1.bf16.msra.mxu0 %v2895
    %2965 = vmatprep.subr.bf16.mxu0 %v2898
    %2966 = vmatpush1.bf16.msra.mxu0 %v2897
    %2967 = vmatprep.subr.bf16.mxu0 %v2900
    %2968 = vmatpush1.bf16.msra.mxu0 %v2899
    %2969 = vmatprep.subr.bf16.mxu0 %v2902
    %2970 = vmatpush1.bf16.msra.mxu0 %v2901
    %2971 = vmatprep.subr.bf16.mxu0 %v2904
    %2972 = vmatpush1.bf16.msra.mxu0 %v2903
    %2973 = vmatprep.subr.bf16.mxu0 %v2906
    %2974 = vmatpush1.bf16.msra.mxu0 %v2905
    %2975 = vmatprep.subr.bf16.mxu0 %v2908
    %2976 = vmatpush1.bf16.msra.mxu0 %v2907
    %2977 = vmatprep.subr.bf16.mxu0 %v2910
    %2978 = vmatpush1.bf16.msra.mxu0 %v2909
    %2979 = vmatprep.subr.bf16.mxu0 %v2912
    %2980 = vmatpush1.bf16.msra.mxu0 %v2911
    %2981 = vmatprep.mubr.bf16.mxu0 %v2946
    %2982 = vmatmul.mubr.bf16.gmra.mrb[0].mxu0 %v2945
    %v2983 = vpop.f32.mrb[0].mxu0
    %v2984 = vadd.f32 0.0, %v2983
    %v2985 = vpop.f32.mrb[0].mxu0
    %v2986 = vadd.f32 0.0, %v2985
    %v2987 = vpop.f32.mrb[0].mxu0
    %v2988 = vpop.f32.mrb[0].mxu0
    %2989 = vdwg.mxu0
    %2990 = vmatprep.subr.bf16.mxu0 %v2914
    %2991 = vmatpush1.bf16.msra.mxu0 %v2913
    %2992 = vmatprep.subr.bf16.mxu0 %v2916
    %2993 = vmatpush1.bf16.msra.mxu0 %v2915
    %2994 = vmatprep.subr.bf16.mxu0 %v2918
    %2995 = vmatpush1.bf16.msra.mxu0 %v2917
    %2996 = vmatprep.subr.bf16.mxu0 %v2920
    %2997 = vmatpush1.bf16.msra.mxu0 %v2919
    %2998 = vmatprep.subr.bf16.mxu0 %v2922
    %2999 = vmatpush1.bf16.msra.mxu0 %v2921
    %3000 = vmatprep.subr.bf16.mxu0 %v2924
    %3001 = vmatpush1.bf16.msra.mxu0 %v2923
    %3002 = vmatprep.subr.bf16.mxu0 %v2926
    %3003 = vmatpush1.bf16.msra.mxu0 %v2925
    %3004 = vmatprep.subr.bf16.mxu0 %v2928
    %3005 = vmatpush1.bf16.msra.mxu0 %v2927
    %3006 = vmatprep.subr.bf16.mxu0 %v2930
    %3007 = vmatpush1.bf16.msra.mxu0 %v2929
    %3008 = vmatprep.subr.bf16.mxu0 %v2932
    %3009 = vmatpush1.bf16.msra.mxu0 %v2931
    %3010 = vmatprep.subr.bf16.mxu0 %v2934
    %3011 = vmatpush1.bf16.msra.mxu0 %v2933
    %3012 = vmatprep.subr.bf16.mxu0 %v2936
    %3013 = vmatpush1.bf16.msra.mxu0 %v2935
    %3014 = vmatprep.subr.bf16.mxu0 %v2938
    %3015 = vmatpush1.bf16.msra.mxu0 %v2937
    %3016 = vmatprep.subr.bf16.mxu0 %v2940
    %3017 = vmatpush1.bf16.msra.mxu0 %v2939
    %3018 = vmatprep.subr.bf16.mxu0 %v2942
    %3019 = vmatpush1.bf16.msra.mxu0 %v2941
    %3020 = vmatprep.subr.bf16.mxu0 %v2944
    %3021 = vmatpush1.bf16.msra.mxu0 %v2943
    %3022 = vmatprep.mubr.bf16.mxu0 %v2948
    %3023 = vmatmul.mubr.bf16.gmra.mrb[0].mxu0 %v2947
    %v3024 = vpop.f32.mrb[0].mxu0
    %v3025 = vadd.f32 %v2984, %v3024
    %v3026 = vpop.f32.mrb[0].mxu0
    %v3027 = vadd.f32 %v2986, %v3026
    %v3028 = vpop.f32.mrb[0].mxu0
    %v3029 = vpop.f32.mrb[0].mxu0
    %3030 = vdwg.mxu0
    %v3031 = vrot.slane %v3025, 4
    %v3032 = vadd.f32 %v3025, %v3031
    %v3033 = vrot.slane %v3032, 2
    %v3034 = vadd.f32 %v3032, %v3033
    %v3035 = vrot.slane %v3034, 1
    %v3036 = vadd.f32 %v3034, %v3035
    %v3037 = vrot.slane %v3027, 4
    %v3038 = vadd.f32 %v3027, %v3037
    %v3039 = vrot.slane %v3038, 2
    %v3040 = vadd.f32 %v3038, %v3039
    %v3041 = vrot.slane %v3040, 1
    %v3042 = vadd.f32 %v3040, %v3041
    %v3043 = vmul.f32 %v3025, %v3025
    %v3044 = vmul.f32 %v3027, %v3027
    %v3045 = vrot.slane %v3043, 4
    %v3046 = vadd.f32 %v3043, %v3045
    %v3047 = vrot.slane %v3046, 2
    %v3048 = vadd.f32 %v3046, %v3047
    %v3049 = vrot.slane %v3048, 1
    %v3050 = vadd.f32 %v3048, %v3049
    %v3051 = vrot.slane %v3044, 4
    %v3052 = vadd.f32 %v3044, %v3051
    %v3053 = vrot.slane %v3052, 2
    %v3054 = vadd.f32 %v3052, %v3053
    %v3055 = vrot.slane %v3054, 1
    %v3056 = vadd.f32 %v3054, %v3055
    %v3057 = vmul.f32 %v3036, 0.125
    %v3058 = vmul.f32 %v3042, 0.125
    %v3059 = vmul.f32 %v3050, 0.125
    %v3060 = vmul.f32 %v3056, 0.125
    %v3061 = vmul.f32 %v3057, %v3057
    %v3062 = vmul.f32 %v3058, %v3058
    %v3063 = vsub.f32 %v3059, %v3061
    %v3064 = vsub.f32 %v3060, %v3062
    %v3065 = vmax.f32 %v3063, 0.0
    %v3066 = vmax.f32 %v3064, 0.0
    %v3067 = vsub.f32 %v3025, %v3057
    %v3068 = vsub.f32 %v3027, %v3058
    %v3069 = vadd.f32 %v3065, 1e-05
    %v3070 = vadd.f32 %v3066, 1e-05
    %v3071 = vrsqrt.pop %v3069
    %v3072 = vrsqrt.pop %v3070
    %v3073 = vmul.f32 %v3067, %v3071
    %v3074 = vmul.f32 %v3068, %v3072
    %v3075 = vmax.f32 %v3073, 0.0
    %v3076 = vmax.f32 %v3074, 0.0
    %s3077 = smul.u32 4, 32
    %s3078 = smul.u32 %s3077, 4
    %s3079 = sshll.u32 %s3078, 4
    %3080 = dma.done %s156, %s3079
    %v3081 = vld [vmem:[#allocation3] sm:$0xff]
    %v3082 = vld [vmem:[#allocation3 + $0x8] sm:$0xff]
    %v3083 = vld [vmem:[#allocation3 + $0x10] sm:$0xff]
    %v3084 = vld [vmem:[#allocation3 + $0x18] sm:$0xff]
    %v3085 = vld [vmem:[#allocation3 + $0x20] sm:$0xff]
    %v3086 = vld [vmem:[#allocation3 + $0x28] sm:$0xff]
    %v3087 = vld [vmem:[#allocation3 + $0x30] sm:$0xff]
    %v3088 = vld [vmem:[#allocation3 + $0x38] sm:$0xff]
    %v3089 = vld [vmem:[#allocation3 + $0x40] sm:$0xff]
    %v3090 = vld [vmem:[#allocation3 + $0x48] sm:$0xff]
    %v3091 = vld [vmem:[#allocation3 + $0x50] sm:$0xff]
    %v3092 = vld [vmem:[#allocation3 + $0x58] sm:$0xff]
    %v3093 = vld [vmem:[#allocation3 + $0x60] sm:$0xff]
    %v3094 = vld [vmem:[#allocation3 + $0x68] sm:$0xff]
    %v3095 = vld [vmem:[#allocation3 + $0x70] sm:$0xff]
    %v3096 = vld [vmem:[#allocation3 + $0x78] sm:$0xff]
    %v3097 = vld [vmem:[#allocation3 + $0x80] sm:$0xff]
    %v3098 = vld [vmem:[#allocation3 + $0x88] sm:$0xff]
    %v3099 = vld [vmem:[#allocation3 + $0x90] sm:$0xff]
    %v3100 = vld [vmem:[#allocation3 + $0x98] sm:$0xff]
    %v3101 = vld [vmem:[#allocation3 + $0xa0] sm:$0xff]
    %v3102 = vld [vmem:[#allocation3 + $0xa8] sm:$0xff]
    %v3103 = vld [vmem:[#allocation3 + $0xb0] sm:$0xff]
    %v3104 = vld [vmem:[#allocation3 + $0xb8] sm:$0xff]
    %v3105 = vld [vmem:[#allocation3 + $0xc0] sm:$0xff]
    %v3106 = vld [vmem:[#allocation3 + $0xc8] sm:$0xff]
    %v3107 = vld [vmem:[#allocation3 + $0xd0] sm:$0xff]
    %v3108 = vld [vmem:[#allocation3 + $0xd8] sm:$0xff]
    %v3109 = vld [vmem:[#allocation3 + $0xe0] sm:$0xff]
    %v3110 = vld [vmem:[#allocation3 + $0xe8] sm:$0xff]
    %v3111 = vld [vmem:[#allocation3 + $0xf0] sm:$0xff]
    %v3112 = vld [vmem:[#allocation3 + $0xf8] sm:$0xff]
    %v3113 = vld [vmem:[#allocation3 + $0x100] sm:$0xff]
    %v3114 = vld [vmem:[#allocation3 + $0x108] sm:$0xff]
    %v3115 = vld [vmem:[#allocation3 + $0x110] sm:$0xff]
    %v3116 = vld [vmem:[#allocation3 + $0x118] sm:$0xff]
    %v3117 = vld [vmem:[#allocation3 + $0x120] sm:$0xff]
    %v3118 = vld [vmem:[#allocation3 + $0x128] sm:$0xff]
    %v3119 = vld [vmem:[#allocation3 + $0x130] sm:$0xff]
    %v3120 = vld [vmem:[#allocation3 + $0x138] sm:$0xff]
    %v3121 = vld [vmem:[#allocation3 + $0x140] sm:$0xff]
    %v3122 = vld [vmem:[#allocation3 + $0x148] sm:$0xff]
    %v3123 = vld [vmem:[#allocation3 + $0x150] sm:$0xff]
    %v3124 = vld [vmem:[#allocation3 + $0x158] sm:$0xff]
    %v3125 = vld [vmem:[#allocation3 + $0x160] sm:$0xff]
    %v3126 = vld [vmem:[#allocation3 + $0x168] sm:$0xff]
    %v3127 = vld [vmem:[#allocation3 + $0x170] sm:$0xff]
    %v3128 = vld [vmem:[#allocation3 + $0x178] sm:$0xff]
    %v3129 = vld [vmem:[#allocation3 + $0x180] sm:$0xff]
    %v3130 = vld [vmem:[#allocation3 + $0x188] sm:$0xff]
    %v3131 = vld [vmem:[#allocation3 + $0x190] sm:$0xff]
    %v3132 = vld [vmem:[#allocation3 + $0x198] sm:$0xff]
    %v3133 = vld [vmem:[#allocation3 + $0x1a0] sm:$0xff]
    %v3134 = vld [vmem:[#allocation3 + $0x1a8] sm:$0xff]
    %v3135 = vld [vmem:[#allocation3 + $0x1b0] sm:$0xff]
    %v3136 = vld [vmem:[#allocation3 + $0x1b8] sm:$0xff]
    %v3137 = vld [vmem:[#allocation3 + $0x1c0] sm:$0xff]
    %v3138 = vld [vmem:[#allocation3 + $0x1c8] sm:$0xff]
    %v3139 = vld [vmem:[#allocation3 + $0x1d0] sm:$0xff]
    %v3140 = vld [vmem:[#allocation3 + $0x1d8] sm:$0xff]
    %v3141 = vld [vmem:[#allocation3 + $0x1e0] sm:$0xff]
    %v3142 = vld [vmem:[#allocation3 + $0x1e8] sm:$0xff]
    %v3143 = vld [vmem:[#allocation3 + $0x1f0] sm:$0xff]
    %v3144 = vld [vmem:[#allocation3 + $0x1f8] sm:$0xff]
    %v3145 = vpack.c.bf16 %v2877, %v2877
    %v3146 = vpack.c.bf16 %v2878, %v2878
    %v3148 = vlaneseq
    %v3149 = vshrl.u32 %v3148, 7
    %v3150 = vsub.s32 0, %v3149
    %v3151 = vrot.slane %v275, %v3150
    %v3152 = vlaneseq
    %v3153 = vshrl.u32 %v3152, 7
    %v3154 = vsub.s32 1, %v3153
    %v3155 = vrot.slane %v275, %v3154
    %v3156 = vlaneseq
    %v3157 = vshrl.u32 %v3156, 7
    %v3158 = vsub.s32 2, %v3157
    %v3159 = vrot.slane %v275, %v3158
    %v3160 = vlaneseq
    %v3161 = vshrl.u32 %v3160, 7
    %v3162 = vsub.s32 3, %v3161
    %v3163 = vrot.slane %v275, %v3162
    %3168 = vmatprep.subr.bf16.mxu0 %v3082
    %3169 = vmatpush1.bf16.msra.mxu0 %v3081
    %3170 = vmatprep.subr.bf16.mxu0 %v3086
    %3171 = vmatpush1.bf16.msra.mxu0 %v3085
    %3172 = vmatprep.subr.bf16.mxu0 %v3090
    %3173 = vmatpush1.bf16.msra.mxu0 %v3089
    %3174 = vmatprep.subr.bf16.mxu0 %v3094
    %3175 = vmatpush1.bf16.msra.mxu0 %v3093
    %3176 = vmatprep.subr.bf16.mxu0 %v3098
    %3177 = vmatpush1.bf16.msra.mxu0 %v3097
    %3178 = vmatprep.subr.bf16.mxu0 %v3102
    %3179 = vmatpush1.bf16.msra.mxu0 %v3101
    %3180 = vmatprep.subr.bf16.mxu0 %v3106
    %3181 = vmatpush1.bf16.msra.mxu0 %v3105
    %3182 = vmatprep.subr.bf16.mxu0 %v3110
    %3183 = vmatpush1.bf16.msra.mxu0 %v3109
    %3184 = vmatprep.subr.bf16.mxu0 %v3114
    %3185 = vmatpush1.bf16.msra.mxu0 %v3113
    %3186 = vmatprep.subr.bf16.mxu0 %v3118
    %3187 = vmatpush1.bf16.msra.mxu0 %v3117
    %3188 = vmatprep.subr.bf16.mxu0 %v3122
    %3189 = vmatpush1.bf16.msra.mxu0 %v3121
    %3190 = vmatprep.subr.bf16.mxu0 %v3126
    %3191 = vmatpush1.bf16.msra.mxu0 %v3125
    %3192 = vmatprep.subr.bf16.mxu0 %v3130
    %3193 = vmatpush1.bf16.msra.mxu0 %v3129
    %3194 = vmatprep.subr.bf16.mxu0 %v3134
    %3195 = vmatpush1.bf16.msra.mxu0 %v3133
    %3196 = vmatprep.subr.bf16.mxu0 %v3138
    %3197 = vmatpush1.bf16.msra.mxu0 %v3137
    %3198 = vmatprep.subr.bf16.mxu0 %v3142
    %3199 = vmatpush1.bf16.msra.mxu0 %v3141
    %3200 = vmatprep.mubr.bf16.mxu0 %v3146
    %3201 = vmatmul.mubr.bf16.gmra.mrb[0].mxu0 %v3145
    %v3202 = vpop.f32.mrb[0].mxu0
    %v3203 = vadd.f32 %v3151, %v3202
    %v3204 = vpop.f32.mrb[0].mxu0
    %v3205 = vadd.f32 %v3155, %v3204
    %v3206 = vpop.f32.mrb[0].mxu0
    %v3207 = vpop.f32.mrb[0].mxu0
    %3208 = vdwg.mxu0
    %3209 = vmatprep.subr.bf16.mxu0 %v3084
    %3210 = vmatpush1.bf16.msra.mxu0 %v3083
    %3211 = vmatprep.subr.bf16.mxu0 %v3088
    %3212 = vmatpush1.bf16.msra.mxu0 %v3087
    %3213 = vmatprep.subr.bf16.mxu0 %v3092
    %3214 = vmatpush1.bf16.msra.mxu0 %v3091
    %3215 = vmatprep.subr.bf16.mxu0 %v3096
    %3216 = vmatpush1.bf16.msra.mxu0 %v3095
    %3217 = vmatprep.subr.bf16.mxu0 %v3100
    %3218 = vmatpush1.bf16.msra.mxu0 %v3099
    %3219 = vmatprep.subr.bf16.mxu0 %v3104
    %3220 = vmatpush1.bf16.msra.mxu0 %v3103
    %3221 = vmatprep.subr.bf16.mxu0 %v3108
    %3222 = vmatpush1.bf16.msra.mxu0 %v3107
    %3223 = vmatprep.subr.bf16.mxu0 %v3112
    %3224 = vmatpush1.bf16.msra.mxu0 %v3111
    %3225 = vmatprep.subr.bf16.mxu0 %v3116
    %3226 = vmatpush1.bf16.msra.mxu0 %v3115
    %3227 = vmatprep.subr.bf16.mxu0 %v3120
    %3228 = vmatpush1.bf16.msra.mxu0 %v3119
    %3229 = vmatprep.subr.bf16.mxu0 %v3124
    %3230 = vmatpush1.bf16.msra.mxu0 %v3123
    %3231 = vmatprep.subr.bf16.mxu0 %v3128
    %3232 = vmatpush1.bf16.msra.mxu0 %v3127
    %3233 = vmatprep.subr.bf16.mxu0 %v3132
    %3234 = vmatpush1.bf16.msra.mxu0 %v3131
    %3235 = vmatprep.subr.bf16.mxu0 %v3136
    %3236 = vmatpush1.bf16.msra.mxu0 %v3135
    %3237 = vmatprep.subr.bf16.mxu0 %v3140
    %3238 = vmatpush1.bf16.msra.mxu0 %v3139
    %3239 = vmatprep.subr.bf16.mxu0 %v3144
    %3240 = vmatpush1.bf16.msra.mxu0 %v3143
    %3241 = vmatprep.mubr.bf16.mxu0 %v3146
    %3242 = vmatmul.mubr.bf16.gmra.mrb[0].mxu0 %v3145
    %v3243 = vpop.f32.mrb[0].mxu0
    %v3244 = vadd.f32 %v3159, %v3243
    %v3245 = vpop.f32.mrb[0].mxu0
    %v3246 = vadd.f32 %v3163, %v3245
    %v3247 = vpop.f32.mrb[0].mxu0
    %v3248 = vpop.f32.mrb[0].mxu0
    %3249 = vdwg.mxu0
    %s3250 = sshll.u32 %s3078, 4
    %3251 = dma.done %s191, %s3250
    %v3252 = vld [vmem:[#allocation5] sm:$0xff]
    %v3253 = vld [vmem:[#allocation5 + $0x8] sm:$0xff]
    %v3254 = vld [vmem:[#allocation5 + $0x10] sm:$0xff]
    %v3255 = vld [vmem:[#allocation5 + $0x18] sm:$0xff]
    %v3256 = vld [vmem:[#allocation5 + $0x20] sm:$0xff]
    %v3257 = vld [vmem:[#allocation5 + $0x28] sm:$0xff]
    %v3258 = vld [vmem:[#allocation5 + $0x30] sm:$0xff]
    %v3259 = vld [vmem:[#allocation5 + $0x38] sm:$0xff]
    %v3260 = vld [vmem:[#allocation5 + $0x40] sm:$0xff]
    %v3261 = vld [vmem:[#allocation5 + $0x48] sm:$0xff]
    %v3262 = vld [vmem:[#allocation5 + $0x50] sm:$0xff]
    %v3263 = vld [vmem:[#allocation5 + $0x58] sm:$0xff]
    %v3264 = vld [vmem:[#allocation5 + $0x60] sm:$0xff]
    %v3265 = vld [vmem:[#allocation5 + $0x68] sm:$0xff]
    %v3266 = vld [vmem:[#allocation5 + $0x70] sm:$0xff]
    %v3267 = vld [vmem:[#allocation5 + $0x78] sm:$0xff]
    %v3268 = vld [vmem:[#allocation5 + $0x80] sm:$0xff]
    %v3269 = vld [vmem:[#allocation5 + $0x88] sm:$0xff]
    %v3270 = vld [vmem:[#allocation5 + $0x90] sm:$0xff]
    %v3271 = vld [vmem:[#allocation5 + $0x98] sm:$0xff]
    %v3272 = vld [vmem:[#allocation5 + $0xa0] sm:$0xff]
    %v3273 = vld [vmem:[#allocation5 + $0xa8] sm:$0xff]
    %v3274 = vld [vmem:[#allocation5 + $0xb0] sm:$0xff]
    %v3275 = vld [vmem:[#allocation5 + $0xb8] sm:$0xff]
    %v3276 = vld [vmem:[#allocation5 + $0xc0] sm:$0xff]
    %v3277 = vld [vmem:[#allocation5 + $0xc8] sm:$0xff]
    %v3278 = vld [vmem:[#allocation5 + $0xd0] sm:$0xff]
    %v3279 = vld [vmem:[#allocation5 + $0xd8] sm:$0xff]
    %v3280 = vld [vmem:[#allocation5 + $0xe0] sm:$0xff]
    %v3281 = vld [vmem:[#allocation5 + $0xe8] sm:$0xff]
    %v3282 = vld [vmem:[#allocation5 + $0xf0] sm:$0xff]
    %v3283 = vld [vmem:[#allocation5 + $0xf8] sm:$0xff]
    %v3284 = vld [vmem:[#allocation5 + $0x100] sm:$0xff]
    %v3285 = vld [vmem:[#allocation5 + $0x108] sm:$0xff]
    %v3286 = vld [vmem:[#allocation5 + $0x110] sm:$0xff]
    %v3287 = vld [vmem:[#allocation5 + $0x118] sm:$0xff]
    %v3288 = vld [vmem:[#allocation5 + $0x120] sm:$0xff]
    %v3289 = vld [vmem:[#allocation5 + $0x128] sm:$0xff]
    %v3290 = vld [vmem:[#allocation5 + $0x130] sm:$0xff]
    %v3291 = vld [vmem:[#allocation5 + $0x138] sm:$0xff]
    %v3292 = vld [vmem:[#allocation5 + $0x140] sm:$0xff]
    %v3293 = vld [vmem:[#allocation5 + $0x148] sm:$0xff]
    %v3294 = vld [vmem:[#allocation5 + $0x150] sm:$0xff]
    %v3295 = vld [vmem:[#allocation5 + $0x158] sm:$0xff]
    %v3296 = vld [vmem:[#allocation5 + $0x160] sm:$0xff]
    %v3297 = vld [vmem:[#allocation5 + $0x168] sm:$0xff]
    %v3298 = vld [vmem:[#allocation5 + $0x170] sm:$0xff]
    %v3299 = vld [vmem:[#allocation5 + $0x178] sm:$0xff]
    %v3300 = vld [vmem:[#allocation5 + $0x180] sm:$0xff]
    %v3301 = vld [vmem:[#allocation5 + $0x188] sm:$0xff]
    %v3302 = vld [vmem:[#allocation5 + $0x190] sm:$0xff]
    %v3303 = vld [vmem:[#allocation5 + $0x198] sm:$0xff]
    %v3304 = vld [vmem:[#allocation5 + $0x1a0] sm:$0xff]
    %v3305 = vld [vmem:[#allocation5 + $0x1a8] sm:$0xff]
    %v3306 = vld [vmem:[#allocation5 + $0x1b0] sm:$0xff]
    %v3307 = vld [vmem:[#allocation5 + $0x1b8] sm:$0xff]
    %v3308 = vld [vmem:[#allocation5 + $0x1c0] sm:$0xff]
    %v3309 = vld [vmem:[#allocation5 + $0x1c8] sm:$0xff]
    %v3310 = vld [vmem:[#allocation5 + $0x1d0] sm:$0xff]
    %v3311 = vld [vmem:[#allocation5 + $0x1d8] sm:$0xff]
    %v3312 = vld [vmem:[#allocation5 + $0x1e0] sm:$0xff]
    %v3313 = vld [vmem:[#allocation5 + $0x1e8] sm:$0xff]
    %v3314 = vld [vmem:[#allocation5 + $0x1f0] sm:$0xff]
    %v3315 = vld [vmem:[#allocation5 + $0x1f8] sm:$0xff]
    %v3316 = vpack.c.bf16 %v3075, %v3075
    %v3317 = vpack.c.bf16 %v3076, %v3076
    %v3319 = vlaneseq
    %v3320 = vshrl.u32 %v3319, 7
    %v3321 = vsub.s32 0, %v3320
    %v3322 = vrot.slane %v279, %v3321
    %v3323 = vlaneseq
    %v3324 = vshrl.u32 %v3323, 7
    %v3325 = vsub.s32 1, %v3324
    %v3326 = vrot.slane %v279, %v3325
    %v3327 = vlaneseq
    %v3328 = vshrl.u32 %v3327, 7
    %v3329 = vsub.s32 2, %v3328
    %v3330 = vrot.slane %v279, %v3329
    %v3331 = vlaneseq
    %v3332 = vshrl.u32 %v3331, 7
    %v3333 = vsub.s32 3, %v3332
    %v3334 = vrot.slane %v279, %v3333
    %3339 = vmatprep.subr.bf16.mxu0 %v3253
    %3340 = vmatpush1.bf16.msra.mxu0 %v3252
    %3341 = vmatprep.subr.bf16.mxu0 %v3257
    %3342 = vmatpush1.bf16.msra.mxu0 %v3256
    %3343 = vmatprep.subr.bf16.mxu0 %v3261
    %3344 = vmatpush1.bf16.msra.mxu0 %v3260
    %3345 = vmatprep.subr.bf16.mxu0 %v3265
    %3346 = vmatpush1.bf16.msra.mxu0 %v3264
    %3347 = vmatprep.subr.bf16.mxu0 %v3269
    %3348 = vmatpush1.bf16.msra.mxu0 %v3268
    %3349 = vmatprep.subr.bf16.mxu0 %v3273
    %3350 = vmatpush1.bf16.msra.mxu0 %v3272
    %3351 = vmatprep.subr.bf16.mxu0 %v3277
    %3352 = vmatpush1.bf16.msra.mxu0 %v3276
    %3353 = vmatprep.subr.bf16.mxu0 %v3281
    %3354 = vmatpush1.bf16.msra.mxu0 %v3280
    %3355 = vmatprep.subr.bf16.mxu0 %v3285
    %3356 = vmatpush1.bf16.msra.mxu0 %v3284
    %3357 = vmatprep.subr.bf16.mxu0 %v3289
    %3358 = vmatpush1.bf16.msra.mxu0 %v3288
    %3359 = vmatprep.subr.bf16.mxu0 %v3293
    %3360 = vmatpush1.bf16.msra.mxu0 %v3292
    %3361 = vmatprep.subr.bf16.mxu0 %v3297
    %3362 = vmatpush1.bf16.msra.mxu0 %v3296
    %3363 = vmatprep.subr.bf16.mxu0 %v3301
    %3364 = vmatpush1.bf16.msra.mxu0 %v3300
    %3365 = vmatprep.subr.bf16.mxu0 %v3305
    %3366 = vmatpush1.bf16.msra.mxu0 %v3304
    %3367 = vmatprep.subr.bf16.mxu0 %v3309
    %3368 = vmatpush1.bf16.msra.mxu0 %v3308
    %3369 = vmatprep.subr.bf16.mxu0 %v3313
    %3370 = vmatpush1.bf16.msra.mxu0 %v3312
    %3371 = vmatprep.mubr.bf16.mxu0 %v3317
    %3372 = vmatmul.mubr.bf16.gmra.mrb[0].mxu0 %v3316
    %v3373 = vpop.f32.mrb[0].mxu0
    %v3374 = vadd.f32 %v3322, %v3373
    %v3375 = vpop.f32.mrb[0].mxu0
    %v3376 = vadd.f32 %v3326, %v3375
    %v3377 = vpop.f32.mrb[0].mxu0
    %v3378 = vpop.f32.mrb[0].mxu0
    %3379 = vdwg.mxu0
    %3380 = vmatprep.subr.bf16.mxu0 %v3255
    %3381 = vmatpush1.bf16.msra.mxu0 %v3254
    %3382 = vmatprep.subr.bf16.mxu0 %v3259
    %3383 = vmatpush1.bf16.msra.mxu0 %v3258
    %3384 = vmatprep.subr.bf16.mxu0 %v3263
    %3385 = vmatpush1.bf16.msra.mxu0 %v3262
    %3386 = vmatprep.subr.bf16.mxu0 %v3267
    %3387 = vmatpush1.bf16.msra.mxu0 %v3266
    %3388 = vmatprep.subr.bf16.mxu0 %v3271
    %3389 = vmatpush1.bf16.msra.mxu0 %v3270
    %3390 = vmatprep.subr.bf16.mxu0 %v3275
    %3391 = vmatpush1.bf16.msra.mxu0 %v3274
    %3392 = vmatprep.subr.bf16.mxu0 %v3279
    %3393 = vmatpush1.bf16.msra.mxu0 %v3278
    %3394 = vmatprep.subr.bf16.mxu0 %v3283
    %3395 = vmatpush1.bf16.msra.mxu0 %v3282
    %3396 = vmatprep.subr.bf16.mxu0 %v3287
    %3397 = vmatpush1.bf16.msra.mxu0 %v3286
    %3398 = vmatprep.subr.bf16.mxu0 %v3291
    %3399 = vmatpush1.bf16.msra.mxu0 %v3290
    %3400 = vmatprep.subr.bf16.mxu0 %v3295
    %3401 = vmatpush1.bf16.msra.mxu0 %v3294
    %3402 = vmatprep.subr.bf16.mxu0 %v3299
    %3403 = vmatpush1.bf16.msra.mxu0 %v3298
    %3404 = vmatprep.subr.bf16.mxu0 %v3303
    %3405 = vmatpush1.bf16.msra.mxu0 %v3302
    %3406 = vmatprep.subr.bf16.mxu0 %v3307
    %3407 = vmatpush1.bf16.msra.mxu0 %v3306
    %3408 = vmatprep.subr.bf16.mxu0 %v3311
    %3409 = vmatpush1.bf16.msra.mxu0 %v3310
    %3410 = vmatprep.subr.bf16.mxu0 %v3315
    %3411 = vmatpush1.bf16.msra.mxu0 %v3314
    %3412 = vmatprep.mubr.bf16.mxu0 %v3317
    %3413 = vmatmul.mubr.bf16.gmra.mrb[0].mxu0 %v3316
    %v3414 = vpop.f32.mrb[0].mxu0
    %v3415 = vadd.f32 %v3330, %v3414
    %v3416 = vpop.f32.mrb[0].mxu0
    %v3417 = vadd.f32 %v3334, %v3416
    %v3418 = vpop.f32.mrb[0].mxu0
    %v3419 = vpop.f32.mrb[0].mxu0
    %3420 = vdwg.mxu0
    %v3422 = vlaneseq
    %v3423 = vshrl.u32 %v3422, 7
    %v3424 = vsub.s32 0, %v3423
    %v3425 = vrot.slane %v281, %v3424
    %v3426 = vlaneseq
    %v3427 = vshrl.u32 %v3426, 7
    %v3428 = vsub.s32 1, %v3427
    %v3429 = vrot.slane %v281, %v3428
    %v3430 = vlaneseq
    %v3431 = vshrl.u32 %v3430, 7
    %v3432 = vsub.s32 2, %v3431
    %v3433 = vrot.slane %v281, %v3432
    %v3434 = vlaneseq
    %v3435 = vshrl.u32 %v3434, 7
    %v3436 = vsub.s32 3, %v3435
    %v3437 = vrot.slane %v281, %v3436
    %v3442 = vmul.f32 %v3203, %v3425
    %v3443 = vmul.f32 %v3205, %v3429
    %v3444 = vmul.f32 %v3244, %v3433
    %v3445 = vmul.f32 %v3246, %v3437
    %v3446 = vadd.f32 %v3442, %v3443
    %v3447 = vadd.f32 %v3446, %v3444
    %v3448 = vadd.f32 %v3447, %v3445
    %3449 = vadd.xlane.f32.xlu0 %v3448
    %v3450 = vpop.xlane.xlu0 %3449
    %v3451 = vadd.f32 %v3450, %v286
    %v3452 = vsub.f32 0.0, %v3451
    %v3453 = vmul.f32 %v3452, 1.442695
    %v3454 = vpow.pop %v3453
    %v3455 = vadd.f32 %v3454, 1.0
    %v3456 = vrcp.pop %v3455
    %v3457 = vmul.f32 1.0, %v3456
    %v3458 = vmul.f32 %v3374, %v3425
    %v3459 = vmul.f32 %v3376, %v3429
    %v3460 = vmul.f32 %v3415, %v3433
    %v3461 = vmul.f32 %v3417, %v3437
    %v3462 = vadd.f32 %v3458, %v3459
    %v3463 = vadd.f32 %v3462, %v3460
    %v3464 = vadd.f32 %v3463, %v3461
    %3465 = vadd.xlane.f32.xlu0 %v3464
    %v3466 = vpop.xlane.xlu0 %3465
    %v3467 = vadd.f32 %v3466, %v286
    %v3468 = vsub.f32 0.0, %v3467
    %v3469 = vmul.f32 %v3468, 1.442695
    %v3470 = vpow.pop %v3469
    %v3471 = vadd.f32 %v3470, 1.0
    %v3472 = vrcp.pop %v3471
    %v3473 = vmul.f32 1.0, %v3472
    %v3474 = vmax.f32 %v3457, %v3473
    %v3475 = vsub.f32 %v3457, %v3474
    %v3476 = vmul.f32 %v3475, 1.442695
    %v3477 = vpow.pop %v3476
    %v3478 = vsub.f32 %v3473, %v3474
    %v3479 = vmul.f32 %v3478, 1.442695
    %v3480 = vpow.pop %v3479
    %v3481 = vadd.f32 %v3477, %v3480
    %v3482 = vrcp.pop %v3481
    %v3483 = vmul.f32 1.0, %v3482
    %v3484 = vmul.f32 %v3477, %v3483
    %3486 = vset.pattern.permute.xlu0 0
    %3487 = vperm.xlu0 %3486, %v3484
    %v3488 = vpop.permute.xlu0 %3487
    %v3490 = vmul.f32 %v3488, %v3203
    %v3491 = vmul.f32 %v3488, %v3205
    %v3492 = vmul.f32 %v3488, %v3244
    %v3493 = vmul.f32 %v3488, %v3246
    %v3494 = vmul.f32 %v3480, %v3483
    %3496 = vset.pattern.permute.xlu0 0
    %3497 = vperm.xlu0 %3496, %v3494
    %v3498 = vpop.permute.xlu0 %3497
    %v3500 = vmul.f32 %v3498, %v3374
    %v3501 = vmul.f32 %v3498, %v3376
    %v3502 = vmul.f32 %v3498, %v3415
    %v3503 = vmul.f32 %v3498, %v3417
    %v3504 = vadd.f32 %v3490, %v3500
    %v3505 = vadd.f32 %v3491, %v3501
    %v3506 = vadd.f32 %v3492, %v3502
    %v3507 = vadd.f32 %v3493, %v3503
    %s3508 = smul.u32 %s2679, 3
    %s3509 = sshll.u32 %s3508, 4
    %3510 = dma.done %s226, %s3509
    %v3511 = vld [vmem:[#allocation6] sm:$0xff]
    %v3512 = vld [vmem:[#allocation6 + $0x8] sm:$0xff]
    %v3513 = vld [vmem:[#allocation6 + $0x10] sm:$0xff]
    %v3514 = vld [vmem:[#allocation6 + $0x18] sm:$0xff]
    %v3515 = vld [vmem:[#allocation6 + $0x20] sm:$0xff]
    %v3516 = vld [vmem:[#allocation6 + $0x28] sm:$0xff]
    %v3517 = vld [vmem:[#allocation6 + $0x30] sm:$0xff]
    %v3518 = vld [vmem:[#allocation6 + $0x38] sm:$0xff]
    %v3519 = vld [vmem:[#allocation6 + $0x40] sm:$0xff]
    %v3520 = vld [vmem:[#allocation6 + $0x48] sm:$0xff]
    %v3521 = vld [vmem:[#allocation6 + $0x50] sm:$0xff]
    %v3522 = vld [vmem:[#allocation6 + $0x58] sm:$0xff]
    %v3523 = vld [vmem:[#allocation6 + $0x60] sm:$0xff]
    %v3524 = vld [vmem:[#allocation6 + $0x68] sm:$0xff]
    %v3525 = vld [vmem:[#allocation6 + $0x70] sm:$0xff]
    %v3526 = vld [vmem:[#allocation6 + $0x78] sm:$0xff]
    %v3527 = vld [vmem:[#allocation6 + $0x80] sm:$0xff]
    %v3528 = vld [vmem:[#allocation6 + $0x88] sm:$0xff]
    %v3529 = vld [vmem:[#allocation6 + $0x90] sm:$0xff]
    %v3530 = vld [vmem:[#allocation6 + $0x98] sm:$0xff]
    %v3531 = vld [vmem:[#allocation6 + $0xa0] sm:$0xff]
    %v3532 = vld [vmem:[#allocation6 + $0xa8] sm:$0xff]
    %v3533 = vld [vmem:[#allocation6 + $0xb0] sm:$0xff]
    %v3534 = vld [vmem:[#allocation6 + $0xb8] sm:$0xff]
    %v3535 = vld [vmem:[#allocation6 + $0xc0] sm:$0xff]
    %v3536 = vld [vmem:[#allocation6 + $0xc8] sm:$0xff]
    %v3537 = vld [vmem:[#allocation6 + $0xd0] sm:$0xff]
    %v3538 = vld [vmem:[#allocation6 + $0xd8] sm:$0xff]
    %v3539 = vld [vmem:[#allocation6 + $0xe0] sm:$0xff]
    %v3540 = vld [vmem:[#allocation6 + $0xe8] sm:$0xff]
    %v3541 = vld [vmem:[#allocation6 + $0xf0] sm:$0xff]
    %v3542 = vld [vmem:[#allocation6 + $0xf8] sm:$0xff]
    %v3543 = vld [vmem:[#allocation6 + $0x100] sm:$0xff]
    %v3544 = vld [vmem:[#allocation6 + $0x108] sm:$0xff]
    %v3545 = vld [vmem:[#allocation6 + $0x110] sm:$0xff]
    %v3546 = vld [vmem:[#allocation6 + $0x118] sm:$0xff]
    %v3547 = vld [vmem:[#allocation6 + $0x120] sm:$0xff]
    %v3548 = vld [vmem:[#allocation6 + $0x128] sm:$0xff]
    %v3549 = vld [vmem:[#allocation6 + $0x130] sm:$0xff]
    %v3550 = vld [vmem:[#allocation6 + $0x138] sm:$0xff]
    %v3551 = vld [vmem:[#allocation6 + $0x140] sm:$0xff]
    %v3552 = vld [vmem:[#allocation6 + $0x148] sm:$0xff]
    %v3553 = vld [vmem:[#allocation6 + $0x150] sm:$0xff]
    %v3554 = vld [vmem:[#allocation6 + $0x158] sm:$0xff]
    %v3555 = vld [vmem:[#allocation6 + $0x160] sm:$0xff]
    %v3556 = vld [vmem:[#allocation6 + $0x168] sm:$0xff]
    %v3557 = vld [vmem:[#allocation6 + $0x170] sm:$0xff]
    %v3558 = vld [vmem:[#allocation6 + $0x178] sm:$0xff]
    %v3559 = vld [vmem:[#allocation6 + $0x180] sm:$0xff]
    %v3560 = vld [vmem:[#allocation6 + $0x188] sm:$0xff]
    %v3561 = vld [vmem:[#allocation6 + $0x190] sm:$0xff]
    %v3562 = vld [vmem:[#allocation6 + $0x198] sm:$0xff]
    %v3563 = vld [vmem:[#allocation6 + $0x1a0] sm:$0xff]
    %v3564 = vld [vmem:[#allocation6 + $0x1a8] sm:$0xff]
    %v3565 = vld [vmem:[#allocation6 + $0x1b0] sm:$0xff]
    %v3566 = vld [vmem:[#allocation6 + $0x1b8] sm:$0xff]
    %v3567 = vld [vmem:[#allocation6 + $0x1c0] sm:$0xff]
    %v3568 = vld [vmem:[#allocation6 + $0x1c8] sm:$0xff]
    %v3569 = vld [vmem:[#allocation6 + $0x1d0] sm:$0xff]
    %v3570 = vld [vmem:[#allocation6 + $0x1d8] sm:$0xff]
    %v3571 = vld [vmem:[#allocation6 + $0x1e0] sm:$0xff]
    %v3572 = vld [vmem:[#allocation6 + $0x1e8] sm:$0xff]
    %v3573 = vld [vmem:[#allocation6 + $0x1f0] sm:$0xff]
    %v3574 = vld [vmem:[#allocation6 + $0x1f8] sm:$0xff]
    %v3575 = vld [vmem:[#allocation6 + $0x200] sm:$0xff]
    %v3576 = vld [vmem:[#allocation6 + $0x208] sm:$0xff]
    %v3577 = vld [vmem:[#allocation6 + $0x210] sm:$0xff]
    %v3578 = vld [vmem:[#allocation6 + $0x218] sm:$0xff]
    %v3579 = vld [vmem:[#allocation6 + $0x220] sm:$0xff]
    %v3580 = vld [vmem:[#allocation6 + $0x228] sm:$0xff]
    %v3581 = vld [vmem:[#allocation6 + $0x230] sm:$0xff]
    %v3582 = vld [vmem:[#allocation6 + $0x238] sm:$0xff]
    %v3583 = vld [vmem:[#allocation6 + $0x240] sm:$0xff]
    %v3584 = vld [vmem:[#allocation6 + $0x248] sm:$0xff]
    %v3585 = vld [vmem:[#allocation6 + $0x250] sm:$0xff]
    %v3586 = vld [vmem:[#allocation6 + $0x258] sm:$0xff]
    %v3587 = vld [vmem:[#allocation6 + $0x260] sm:$0xff]
    %v3588 = vld [vmem:[#allocation6 + $0x268] sm:$0xff]
    %v3589 = vld [vmem:[#allocation6 + $0x270] sm:$0xff]
    %v3590 = vld [vmem:[#allocation6 + $0x278] sm:$0xff]
    %v3591 = vld [vmem:[#allocation6 + $0x280] sm:$0xff]
    %v3592 = vld [vmem:[#allocation6 + $0x288] sm:$0xff]
    %v3593 = vld [vmem:[#allocation6 + $0x290] sm:$0xff]
    %v3594 = vld [vmem:[#allocation6 + $0x298] sm:$0xff]
    %v3595 = vld [vmem:[#allocation6 + $0x2a0] sm:$0xff]
    %v3596 = vld [vmem:[#allocation6 + $0x2a8] sm:$0xff]
    %v3597 = vld [vmem:[#allocation6 + $0x2b0] sm:$0xff]
    %v3598 = vld [vmem:[#allocation6 + $0x2b8] sm:$0xff]
    %v3599 = vld [vmem:[#allocation6 + $0x2c0] sm:$0xff]
    %v3600 = vld [vmem:[#allocation6 + $0x2c8] sm:$0xff]
    %v3601 = vld [vmem:[#allocation6 + $0x2d0] sm:$0xff]
    %v3602 = vld [vmem:[#allocation6 + $0x2d8] sm:$0xff]
    %v3603 = vld [vmem:[#allocation6 + $0x2e0] sm:$0xff]
    %v3604 = vld [vmem:[#allocation6 + $0x2e8] sm:$0xff]
    %v3605 = vld [vmem:[#allocation6 + $0x2f0] sm:$0xff]
    %v3606 = vld [vmem:[#allocation6 + $0x2f8] sm:$0xff]
    %v3607 = vpack.c.bf16 %v3504, %v3504
    %v3608 = vpack.c.bf16 %v3505, %v3505
    %v3609 = vpack.c.bf16 %v3506, %v3506
    %v3610 = vpack.c.bf16 %v3507, %v3507
    %3611 = vmatprep.subr.bf16.mxu0 %v3512
    %3612 = vmatpush1.bf16.msra.mxu0 %v3511
    %3613 = vmatprep.subr.bf16.mxu0 %v3515
    %3614 = vmatpush1.bf16.msra.mxu0 %v3514
    %3615 = vmatprep.subr.bf16.mxu0 %v3518
    %3616 = vmatpush1.bf16.msra.mxu0 %v3517
    %3617 = vmatprep.subr.bf16.mxu0 %v3521
    %3618 = vmatpush1.bf16.msra.mxu0 %v3520
    %3619 = vmatprep.subr.bf16.mxu0 %v3524
    %3620 = vmatpush1.bf16.msra.mxu0 %v3523
    %3621 = vmatprep.subr.bf16.mxu0 %v3527
    %3622 = vmatpush1.bf16.msra.mxu0 %v3526
    %3623 = vmatprep.subr.bf16.mxu0 %v3530
    %3624 = vmatpush1.bf16.msra.mxu0 %v3529
    %3625 = vmatprep.subr.bf16.mxu0 %v3533
    %3626 = vmatpush1.bf16.msra.mxu0 %v3532
    %3627 = vmatprep.subr.bf16.mxu0 %v3536
    %3628 = vmatpush1.bf16.msra.mxu0 %v3535
    %3629 = vmatprep.subr.bf16.mxu0 %v3539
    %3630 = vmatpush1.bf16.msra.mxu0 %v3538
    %3631 = vmatprep.subr.bf16.mxu0 %v3542
    %3632 = vmatpush1.bf16.msra.mxu0 %v3541
    %3633 = vmatprep.subr.bf16.mxu0 %v3545
    %3634 = vmatpush1.bf16.msra.mxu0 %v3544
    %3635 = vmatprep.subr.bf16.mxu0 %v3548
    %3636 = vmatpush1.bf16.msra.mxu0 %v3547
    %3637 = vmatprep.subr.bf16.mxu0 %v3551
    %3638 = vmatpush1.bf16.msra.mxu0 %v3550
    %3639 = vmatprep.subr.bf16.mxu0 %v3554
    %3640 = vmatpush1.bf16.msra.mxu0 %v3553
    %3641 = vmatprep.subr.bf16.mxu0 %v3557
    %3642 = vmatpush1.bf16.msra.mxu0 %v3556
    %3643 = vmatprep.mubr.bf16.mxu0 %v3608
    %3644 = vmatmul.mubr.bf16.gmra.mrb[0].mxu0 %v3607
    %v3645 = vpop.f32.mrb[0].mxu0
    %v3646 = vadd.f32 0.0, %v3645
    %v3647 = vpop.f32.mrb[0].mxu0
    %v3648 = vadd.f32 0.0, %v3647
    %v3649 = vpop.f32.mrb[0].mxu0
    %v3650 = vpop.f32.mrb[0].mxu0
    %3651 = vdwg.mxu0
    %3652 = vmatprep.subr.bf16.mxu0 %v3560
    %3653 = vmatpush1.bf16.msra.mxu0 %v3559
    %3654 = vmatprep.subr.bf16.mxu0 %v3563
    %3655 = vmatpush1.bf16.msra.mxu0 %v3562
    %3656 = vmatprep.subr.bf16.mxu0 %v3566
    %3657 = vmatpush1.bf16.msra.mxu0 %v3565
    %3658 = vmatprep.subr.bf16.mxu0 %v3569
    %3659 = vmatpush1.bf16.msra.mxu0 %v3568
    %3660 = vmatprep.subr.bf16.mxu0 %v3572
    %3661 = vmatpush1.bf16.msra.mxu0 %v3571
    %3662 = vmatprep.subr.bf16.mxu0 %v3575
    %3663 = vmatpush1.bf16.msra.mxu0 %v3574
    %3664 = vmatprep.subr.bf16.mxu0 %v3578
    %3665 = vmatpush1.bf16.msra.mxu0 %v3577
    %3666 = vmatprep.subr.bf16.mxu0 %v3581
    %3667 = vmatpush1.bf16.msra.mxu0 %v3580
    %3668 = vmatprep.subr.bf16.mxu0 %v3584
    %3669 = vmatpush1.bf16.msra.mxu0 %v3583
    %3670 = vmatprep.subr.bf16.mxu0 %v3587
    %3671 = vmatpush1.bf16.msra.mxu0 %v3586
    %3672 = vmatprep.subr.bf16.mxu0 %v3590
    %3673 = vmatpush1.bf16.msra.mxu0 %v3589
    %3674 = vmatprep.subr.bf16.mxu0 %v3593
    %3675 = vmatpush1.bf16.msra.mxu0 %v3592
    %3676 = vmatprep.subr.bf16.mxu0 %v3596
    %3677 = vmatpush1.bf16.msra.mxu0 %v3595
    %3678 = vmatprep.subr.bf16.mxu0 %v3599
    %3679 = vmatpush1.bf16.msra.mxu0 %v3598
    %3680 = vmatprep.subr.bf16.mxu0 %v3602
    %3681 = vmatpush1.bf16.msra.mxu0 %v3601
    %3682 = vmatprep.subr.bf16.mxu0 %v3605
    %3683 = vmatpush1.bf16.msra.mxu0 %v3604
    %3684 = vmatprep.mubr.bf16.mxu0 %v3610
    %3685 = vmatmul.mubr.bf16.gmra.mrb[0].mxu0 %v3609
    %v3686 = vpop.f32.mrb[0].mxu0
    %v3687 = vadd.f32 %v3646, %v3686
    %v3688 = vpop.f32.mrb[0].mxu0
    %v3689 = vadd.f32 %v3648, %v3688
    %v3690 = vpop.f32.mrb[0].mxu0
    %v3691 = vpop.f32.mrb[0].mxu0
    %3692 = vdwg.mxu0
    %3693 = vmatprep.subr.bf16.mxu0 0
    %3694 = vmatpush1.bf16.msra.mxu0 %v3513
    %3695 = vmatprep.subr.bf16.mxu0 0
    %3696 = vmatpush1.bf16.msra.mxu0 %v3516
    %3697 = vmatprep.subr.bf16.mxu0 0
    %3698 = vmatpush1.bf16.msra.mxu0 %v3519
    %3699 = vmatprep.subr.bf16.mxu0 0
    %3700 = vmatpush1.bf16.msra.mxu0 %v3522
    %3701 = vmatprep.subr.bf16.mxu0 0
    %3702 = vmatpush1.bf16.msra.mxu0 %v3525
    %3703 = vmatprep.subr.bf16.mxu0 0
    %3704 = vmatpush1.bf16.msra.mxu0 %v3528
    %3705 = vmatprep.subr.bf16.mxu0 0
    %3706 = vmatpush1.bf16.msra.mxu0 %v3531
    %3707 = vmatprep.subr.bf16.mxu0 0
    %3708 = vmatpush1.bf16.msra.mxu0 %v3534
    %3709 = vmatprep.subr.bf16.mxu0 0
    %3710 = vmatpush1.bf16.msra.mxu0 %v3537
    %3711 = vmatprep.subr.bf16.mxu0 0
    %3712 = vmatpush1.bf16.msra.mxu0 %v3540
    %3713 = vmatprep.subr.bf16.mxu0 0
    %3714 = vmatpush1.bf16.msra.mxu0 %v3543
    %3715 = vmatprep.subr.bf16.mxu0 0
    %3716 = vmatpush1.bf16.msra.mxu0 %v3546
    %3717 = vmatprep.subr.bf16.mxu0 0
    %3718 = vmatpush1.bf16.msra.mxu0 %v3549
    %3719 = vmatprep.subr.bf16.mxu0 0
    %3720 = vmatpush1.bf16.msra.mxu0 %v3552
    %3721 = vmatprep.subr.bf16.mxu0 0
    %3722 = vmatpush1.bf16.msra.mxu0 %v3555
    %3723 = vmatprep.subr.bf16.mxu0 0
    %3724 = vmatpush1.bf16.msra.mxu0 %v3558
    %3725 = vmatprep.mubr.bf16.mxu0 %v3608
    %3726 = vmatmul.mubr.bf16.gmra.mrb[0].mxu0 %v3607
    %v3727 = vpop.f32.mrb[0].mxu0
    %v3728 = vadd.f32 0.0, %v3727
    %v3729 = vpop.f32.mrb[0].mxu0
    %v3730 = vpop.f32.mrb[0].mxu0
    %v3731 = vpop.f32.mrb[0].mxu0
    %3732 = vdwg.mxu0
    %3733 = vmatprep.subr.bf16.mxu0 0
    %3734 = vmatpush1.bf16.msra.mxu0 %v3561
    %3735 = vmatprep.subr.bf16.mxu0 0
    %3736 = vmatpush1.bf16.msra.mxu0 %v3564
    %3737 = vmatprep.subr.bf16.mxu0 0
    %3738 = vmatpush1.bf16.msra.mxu0 %v3567
    %3739 = vmatprep.subr.bf16.mxu0 0
    %3740 = vmatpush1.bf16.msra.mxu0 %v3570
    %3741 = vmatprep.subr.bf16.mxu0 0
    %3742 = vmatpush1.bf16.msra.mxu0 %v3573
    %3743 = vmatprep.subr.bf16.mxu0 0
    %3744 = vmatpush1.bf16.msra.mxu0 %v3576
    %3745 = vmatprep.subr.bf16.mxu0 0
    %3746 = vmatpush1.bf16.msra.mxu0 %v3579
    %3747 = vmatprep.subr.bf16.mxu0 0
    %3748 = vmatpush1.bf16.msra.mxu0 %v3582
    %3749 = vmatprep.subr.bf16.mxu0 0
    %3750 = vmatpush1.bf16.msra.mxu0 %v3585
    %3751 = vmatprep.subr.bf16.mxu0 0
    %3752 = vmatpush1.bf16.msra.mxu0 %v3588
    %3753 = vmatprep.subr.bf16.mxu0 0
    %3754 = vmatpush1.bf16.msra.mxu0 %v3591
    %3755 = vmatprep.subr.bf16.mxu0 0
    %3756 = vmatpush1.bf16.msra.mxu0 %v3594
    %3757 = vmatprep.subr.bf16.mxu0 0
    %3758 = vmatpush1.bf16.msra.mxu0 %v3597
    %3759 = vmatprep.subr.bf16.mxu0 0
    %3760 = vmatpush1.bf16.msra.mxu0 %v3600
    %3761 = vmatprep.subr.bf16.mxu0 0
    %3762 = vmatpush1.bf16.msra.mxu0 %v3603
    %3763 = vmatprep.subr.bf16.mxu0 0
    %3764 = vmatpush1.bf16.msra.mxu0 %v3606
    %3765 = vmatprep.mubr.bf16.mxu0 %v3610
    %3766 = vmatmul.mubr.bf16.gmra.mrb[0].mxu0 %v3609
    %v3767 = vpop.f32.mrb[0].mxu0
    %v3768 = vadd.f32 %v3728, %v3767
    %v3769 = vpop.f32.mrb[0].mxu0
    %v3770 = vpop.f32.mrb[0].mxu0
    %v3771 = vpop.f32.mrb[0].mxu0
    %3772 = vdwg.mxu0
    %v3773 = vrot.slane %v3687, 4
    %v3774 = vadd.f32 %v3687, %v3773
    %v3775 = vrot.slane %v3774, 2
    %v3776 = vadd.f32 %v3774, %v3775
    %v3777 = vrot.slane %v3776, 1
    %v3778 = vadd.f32 %v3776, %v3777
    %v3779 = vmul.f32 %v3687, %v3687
    %v3780 = vrot.slane %v3779, 4
    %v3781 = vadd.f32 %v3779, %v3780
    %v3782 = vrot.slane %v3781, 2
    %v3783 = vadd.f32 %v3781, %v3782
    %v3784 = vrot.slane %v3783, 1
    %v3785 = vadd.f32 %v3783, %v3784
    %v3786 = vmul.f32 %v3778, 0.125
    %v3787 = vmul.f32 %v3785, 0.125
    %v3788 = vmul.f32 %v3786, %v3786
    %v3789 = vsub.f32 %v3787, %v3788
    %v3790 = vmax.f32 %v3789, 0.0
    %v3791 = vsub.f32 %v3687, %v3786
    %v3792 = vadd.f32 %v3790, 1e-05
    %v3793 = vrsqrt.pop %v3792
    %v3794 = vmul.f32 %v3791, %v3793
    %v3795 = vmax.f32 %v3794, 0.0
    %v3797 = vlaneseq
    %v3798 = vshrl.u32 %v3797, 7
    %v3799 = vsub.s32 0, %v3798
    %v3800 = vrot.slane %v283, %v3799
    %v3801 = vlaneseq
    %v3802 = vshrl.u32 %v3801, 7
    %v3803 = vsub.s32 1, %v3802
    %v3804 = vrot.slane %v283, %v3803
    %v3807 = vadd.f32 %v3689, %v3800
    %v3808 = vadd.f32 %v3768, %v3804
    %vm3809 = vcmp.gt.f32.partialorder %v3807, 0.0
    %vm3810 = vcmp.gt.f32.partialorder %v3808, 0.0
    %v3811 = vmul.f32 %v3807, 0.01
    %v3812 = vmul.f32 %v3808, 0.01
    %v3813 = vsel %vm3809, %v3807, %v3811
    %v3814 = vsel %vm3810, %v3808, %v3812
    %s3815 = smul.u32 %s2679, 1
    %s3816 = sshll.u32 %s3815, 4
    %3817 = dma.done %s261, %s3816
    %v3818 = vld [vmem:[#allocation7] sm:$0xff]
    %v3819 = vld [vmem:[#allocation7 + $0x8] sm:$0xff]
    %v3820 = vld [vmem:[#allocation7 + $0x10] sm:$0xff]
    %v3821 = vld [vmem:[#allocation7 + $0x18] sm:$0xff]
    %v3822 = vld [vmem:[#allocation7 + $0x20] sm:$0xff]
    %v3823 = vld [vmem:[#allocation7 + $0x28] sm:$0xff]
    %v3824 = vld [vmem:[#allocation7 + $0x30] sm:$0xff]
    %v3825 = vld [vmem:[#allocation7 + $0x38] sm:$0xff]
    %v3826 = vpack.c.bf16 %v3795, %v3795
    %3827 = vmatprep.subr.bf16.mxu0 0
    %3828 = vmatpush1.bf16.msra.mxu0 %v3818
    %3829 = vmatprep.subr.bf16.mxu0 0
    %3830 = vmatpush1.bf16.msra.mxu0 %v3819
    %3831 = vmatprep.subr.bf16.mxu0 0
    %3832 = vmatpush1.bf16.msra.mxu0 %v3820
    %3833 = vmatprep.subr.bf16.mxu0 0
    %3834 = vmatpush1.bf16.msra.mxu0 %v3821
    %3835 = vmatprep.subr.bf16.mxu0 0
    %3836 = vmatpush1.bf16.msra.mxu0 %v3822
    %3837 = vmatprep.subr.bf16.mxu0 0
    %3838 = vmatpush1.bf16.msra.mxu0 %v3823
    %3839 = vmatprep.subr.bf16.mxu0 0
    %3840 = vmatpush1.bf16.msra.mxu0 %v3824
    %3841 = vmatprep.subr.bf16.mxu0 0
    %3842 = vmatpush1.bf16.msra.mxu0 %v3825
    %3843 = vmatprep.subr.bf16.mxu0 0
    %3844 = vmatpush1.bf16.msra.mxu0 0
    %3845 = vmatprep.subr.bf16.mxu0 0
    %3846 = vmatpush1.bf16.msra.mxu0 0
    %3847 = vmatprep.subr.bf16.mxu0 0
    %3848 = vmatpush1.bf16.msra.mxu0 0
    %3849 = vmatprep.subr.bf16.mxu0 0
    %3850 = vmatpush1.bf16.msra.mxu0 0
    %3851 = vmatprep.subr.bf16.mxu0 0
    %3852 = vmatpush1.bf16.msra.mxu0 0
    %3853 = vmatprep.subr.bf16.mxu0 0
    %3854 = vmatpush1.bf16.msra.mxu0 0
    %3855 = vmatprep.subr.bf16.mxu0 0
    %3856 = vmatpush1.bf16.msra.mxu0 0
    %3857 = vmatprep.subr.bf16.mxu0 0
    %3858 = vmatpush1.bf16.msra.mxu0 0
    %3859 = vmatprep.mubr.bf16.mxu0 0
    %3860 = vmatmul.mubr.bf16.gmra.mrb[0].mxu0 %v3826
    %v3861 = vpop.f32.mrb[0].mxu0
    %v3862 = vadd.f32 0.0, %v3861
    %v3863 = vpop.f32.mrb[0].mxu0
    %v3864 = vpop.f32.mrb[0].mxu0
    %v3865 = vpop.f32.mrb[0].mxu0
    %3866 = vdwg.mxu0
    %v3867 = vrot.slane %v3862, 4
    %v3868 = vadd.f32 %v3862, %v3867
    %v3869 = vrot.slane %v3868, 2
    %v3870 = vadd.f32 %v3868, %v3869
    %v3871 = vrot.slane %v3870, 1
    %v3872 = vadd.f32 %v3870, %v3871
    %v3873 = vmul.f32 %v3862, %v3862
    %v3874 = vrot.slane %v3873, 4
    %v3875 = vadd.f32 %v3873, %v3874
    %v3876 = vrot.slane %v3875, 2
    %v3877 = vadd.f32 %v3875, %v3876
    %v3878 = vrot.slane %v3877, 1
    %v3879 = vadd.f32 %v3877, %v3878
    %v3880 = vmul.f32 %v3872, 0.125
    %v3881 = vmul.f32 %v3879, 0.125
    %v3882 = vmul.f32 %v3880, %v3880
    %v3883 = vsub.f32 %v3881, %v3882
    %v3884 = vmax.f32 %v3883, 0.0
    %v3885 = vsub.f32 %v3862, %v3880
    %v3886 = vadd.f32 %v3884, 1e-05
    %v3887 = vrsqrt.pop %v3886
    %v3888 = vmul.f32 %v3885, %v3887
    %v3889 = vmax.f32 %v3888, 0.0
    %v3890 = vld [vmem:[#allocation7 + $0x40] sm:$0xff]
    %v3891 = vld [vmem:[#allocation7 + $0x48] sm:$0xff]
    %v3892 = vld [vmem:[#allocation7 + $0x50] sm:$0xff]
    %v3893 = vld [vmem:[#allocation7 + $0x58] sm:$0xff]
    %v3894 = vld [vmem:[#allocation7 + $0x60] sm:$0xff]
    %v3895 = vld [vmem:[#allocation7 + $0x68] sm:$0xff]
    %v3896 = vld [vmem:[#allocation7 + $0x70] sm:$0xff]
    %v3897 = vld [vmem:[#allocation7 + $0x78] sm:$0xff]
    %v3898 = vpack.c.bf16 %v3889, %v3889
    %3899 = vmatprep.subr.bf16.mxu0 0
    %3900 = vmatpush1.bf16.msra.mxu0 %v3890
    %3901 = vmatprep.subr.bf16.mxu0 0
    %3902 = vmatpush1.bf16.msra.mxu0 %v3891
    %3903 = vmatprep.subr.bf16.mxu0 0
    %3904 = vmatpush1.bf16.msra.mxu0 %v3892
    %3905 = vmatprep.subr.bf16.mxu0 0
    %3906 = vmatpush1.bf16.msra.mxu0 %v3893
    %3907 = vmatprep.subr.bf16.mxu0 0
    %3908 = vmatpush1.bf16.msra.mxu0 %v3894
    %3909 = vmatprep.subr.bf16.mxu0 0
    %3910 = vmatpush1.bf16.msra.mxu0 %v3895
    %3911 = vmatprep.subr.bf16.mxu0 0
    %3912 = vmatpush1.bf16.msra.mxu0 %v3896
    %3913 = vmatprep.subr.bf16.mxu0 0
    %3914 = vmatpush1.bf16.msra.mxu0 %v3897
    %3915 = vmatprep.subr.bf16.mxu0 0
    %3916 = vmatpush1.bf16.msra.mxu0 0
    %3917 = vmatprep.subr.bf16.mxu0 0
    %3918 = vmatpush1.bf16.msra.mxu0 0
    %3919 = vmatprep.subr.bf16.mxu0 0
    %3920 = vmatpush1.bf16.msra.mxu0 0
    %3921 = vmatprep.subr.bf16.mxu0 0
    %3922 = vmatpush1.bf16.msra.mxu0 0
    %3923 = vmatprep.subr.bf16.mxu0 0
    %3924 = vmatpush1.bf16.msra.mxu0 0
    %3925 = vmatprep.subr.bf16.mxu0 0
    %3926 = vmatpush1.bf16.msra.mxu0 0
    %3927 = vmatprep.subr.bf16.mxu0 0
    %3928 = vmatpush1.bf16.msra.mxu0 0
    %3929 = vmatprep.subr.bf16.mxu0 0
    %3930 = vmatpush1.bf16.msra.mxu0 0
    %3931 = vmatprep.mubr.bf16.mxu0 0
    %3932 = vmatmul.mubr.bf16.gmra.mrb[0].mxu0 %v3898
    %v3933 = vpop.f32.mrb[0].mxu0
    %v3934 = vadd.f32 %v284, %v3933
    %v3935 = vpop.f32.mrb[0].mxu0
    %v3936 = vpop.f32.mrb[0].mxu0
    %v3937 = vpop.f32.mrb[0].mxu0
    %3938 = vdwg.mxu0
    %v3939 = vld [vmem:[#allocation7 + $0x80] sm:$0xff]
    %v3940 = vld [vmem:[#allocation7 + $0x88] sm:$0xff]
    %v3941 = vld [vmem:[#allocation7 + $0x90] sm:$0xff]
    %v3942 = vld [vmem:[#allocation7 + $0x98] sm:$0xff]
    %v3943 = vld [vmem:[#allocation7 + $0xa0] sm:$0xff]
    %v3944 = vld [vmem:[#allocation7 + $0xa8] sm:$0xff]
    %v3945 = vld [vmem:[#allocation7 + $0xb0] sm:$0xff]
    %v3946 = vld [vmem:[#allocation7 + $0xb8] sm:$0xff]
    %v3947 = vld [vmem:[#allocation7 + $0xc0] sm:$0xff]
    %v3948 = vld [vmem:[#allocation7 + $0xc8] sm:$0xff]
    %v3949 = vld [vmem:[#allocation7 + $0xd0] sm:$0xff]
    %v3950 = vld [vmem:[#allocation7 + $0xd8] sm:$0xff]
    %v3951 = vld [vmem:[#allocation7 + $0xe0] sm:$0xff]
    %v3952 = vld [vmem:[#allocation7 + $0xe8] sm:$0xff]
    %v3953 = vld [vmem:[#allocation7 + $0xf0] sm:$0xff]
    %v3954 = vld [vmem:[#allocation7 + $0xf8] sm:$0xff]
    %v3955 = vpack.c.bf16 %v3813, %v3813
    %v3956 = vpack.c.bf16 %v3814, %v3814
    %3957 = vmatprep.subr.bf16.mxu0 0
    %3958 = vmatpush1.bf16.msra.mxu0 %v3939
    %3959 = vmatprep.subr.bf16.mxu0 0
    %3960 = vmatpush1.bf16.msra.mxu0 %v3940
    %3961 = vmatprep.subr.bf16.mxu0 0
    %3962 = vmatpush1.bf16.msra.mxu0 %v3941
    %3963 = vmatprep.subr.bf16.mxu0 0
    %3964 = vmatpush1.bf16.msra.mxu0 %v3942
    %3965 = vmatprep.subr.bf16.mxu0 0
    %3966 = vmatpush1.bf16.msra.mxu0 %v3943
    %3967 = vmatprep.subr.bf16.mxu0 0
    %3968 = vmatpush1.bf16.msra.mxu0 %v3944
    %3969 = vmatprep.subr.bf16.mxu0 0
    %3970 = vmatpush1.bf16.msra.mxu0 %v3945
    %3971 = vmatprep.subr.bf16.mxu0 0
    %3972 = vmatpush1.bf16.msra.mxu0 %v3946
    %3973 = vmatprep.subr.bf16.mxu0 0
    %3974 = vmatpush1.bf16.msra.mxu0 %v3947
    %3975 = vmatprep.subr.bf16.mxu0 0
    %3976 = vmatpush1.bf16.msra.mxu0 %v3948
    %3977 = vmatprep.subr.bf16.mxu0 0
    %3978 = vmatpush1.bf16.msra.mxu0 %v3949
    %3979 = vmatprep.subr.bf16.mxu0 0
    %3980 = vmatpush1.bf16.msra.mxu0 %v3950
    %3981 = vmatprep.subr.bf16.mxu0 0
    %3982 = vmatpush1.bf16.msra.mxu0 %v3951
    %3983 = vmatprep.subr.bf16.mxu0 0
    %3984 = vmatpush1.bf16.msra.mxu0 %v3952
    %3985 = vmatprep.subr.bf16.mxu0 0
    %3986 = vmatpush1.bf16.msra.mxu0 %v3953
    %3987 = vmatprep.subr.bf16.mxu0 0
    %3988 = vmatpush1.bf16.msra.mxu0 %v3954
    %3989 = vmatprep.mubr.bf16.mxu0 %v3956
    %3990 = vmatmul.mubr.bf16.gmra.mrb[0].mxu0 %v3955
    %v3991 = vpop.f32.mrb[0].mxu0
    %v3992 = vadd.f32 %v285, %v3991
    %v3993 = vpop.f32.mrb[0].mxu0
    %v3994 = vpop.f32.mrb[0].mxu0
    %v3995 = vpop.f32.mrb[0].mxu0
    %3996 = vdwg.mxu0
    %3997 = vmax.xlane.f32.xlu0 %v3992
    %v3998 = vpop.xlane.xlu0 %3997
    %v3999 = vsub.f32 %v3992, %v3998
    %v4000 = vmul.f32 %v3999, 1.442695
    %v4001 = vpow.pop %v4000
    %4002 = vadd.xlane.f32.xlu0 %v4001
    %v4003 = vpop.xlane.xlu0 %4002
    %v4004 = vrcp.pop %v4003
    %v4005 = vmul.f32 %v4001, %v4004
    %4006 = vst [vmem:[%s11] sm:$0xff] %v3934
    %4007 = vst [vmem:[#allocation17] sm:$0xff] %v4005
    %4008 = vst [vmem:[#allocation18] sm:$0xff] %v3504
    %4009 = vst [vmem:[#allocation18 + $0x8] sm:$0xff] %v3505
    %4010 = vst [vmem:[#allocation18 + $0x10] sm:$0xff] %v3506
    %4011 = vst [vmem:[#allocation18 + $0x18] sm:$0xff] %v3507
    %4012 = vst [vmem:[#allocation20] sm:$0xff] %v3203
    %4013 = vst [vmem:[#allocation20 + $0x8] sm:$0xff] %v3205
    %4014 = vst [vmem:[#allocation20 + $0x10] sm:$0xff] %v3244
    %4015 = vst [vmem:[#allocation20 + $0x18] sm:$0xff] %v3246
    %4016 = vst [vmem:[#allocation21] sm:$0xff] %v3374
    %4017 = vst [vmem:[#allocation21 + $0x8] sm:$0xff] %v3376
    %4018 = vst [vmem:[#allocation21 + $0x10] sm:$0xff] %v3415
    %4019 = vst [vmem:[#allocation21 + $0x18] sm:$0xff] %v3417
    // Predicated region
    $region42: #{teacher_forward.1} parent=1 // pred_check
      _
    $region43: #{teacher_forward.1} parent=1 // pred_check_branch
      %4021 = sbr.rel (0) target = $region45
    $region44: #{teacher_forward.1} parent=1 // pred_region
      _
    $region45: #{teacher_forward.1} parent=1 // pred_fallthru
      _
    // Predicated region
    $region46: #{teacher_forward.1} parent=1 // pred_check
      _
    $region47: #{teacher_forward.1} parent=1 // pred_check_branch
      %4023 = sbr.rel (0) target = $region49
    $region48: #{teacher_forward.1} parent=1 // pred_region
      %s4025 = ssub.s32 128, 128
      %4026 = vsyncadd [#allocation11], %s4025
      %s4028 = sshll.u32 [#allocation17], 4
      %s4029 = int_to_ptr.vmem [resolvable:$true] %s4028
      %4031 = dma.vmem_to_hbm [thread:$0]  %s4029, 128, %s12, [#allocation11]
    $region49: #{teacher_forward.1} parent=1 // pred_fallthru
      _
    // Predicated region
    $region50: #{teacher_forward.1} parent=1 // pred_check
      _
    $region51: #{teacher_forward.1} parent=1 // pred_check_branch
      %4033 = sbr.rel (0) target = $region53
    $region52: #{teacher_forward.1} parent=1 // pred_region
      %s4035 = ssub.s32 512, 512
      %4036 = vsyncadd [#allocation19], %s4035
      %s4038 = sshll.u32 [#allocation18], 4
      %s4039 = int_to_ptr.vmem [resolvable:$true] %s4038
      %4041 = dma.vmem_to_hbm [thread:$0]  %s4039, 512, %s13, [#allocation19]
    $region53: #{teacher_forward.1} parent=1 // pred_fallthru
      _
    // Predicated region
    $region54: #{teacher_forward.1} parent=1 // pred_check
      _
    $region55: #{teacher_forward.1} parent=1 // pred_check_branch
      %4043 = sbr.rel (0) target = $region57
    $region56: #{teacher_forward.1} parent=1 // pred_region
      %s4045 = ssub.s32 512, 512
      %4046 = vsyncadd [#allocation19], %s4045
      %s4048 = sshll.u32 [#allocation20], 4
      %s4049 = int_to_ptr.vmem [resolvable:$true] %s4048
      %4051 = dma.vmem_to_hbm [thread:$0]  %s4049, 512, %s14, [#allocation19]
    $region57: #{teacher_forward.1} parent=1 // pred_fallthru
      _
    // Predicated region
    $region58: #{teacher_forward.1} parent=1 // pred_check
      _
    $region59: #{teacher_forward.1} parent=1 // pred_check_branch
      %4053 = sbr.rel (0) target = $region61
    $region60: #{teacher_forward.1} parent=1 // pred_region
      %s4055 = ssub.s32 512, 512
      %4056 = vsyncadd [#allocation22], %s4055
      %s4058 = sshll.u32 [#allocation21], 4
      %s4059 = int_to_ptr.vmem [resolvable:$true] %s4058
      %4061 = dma.vmem_to_hbm [thread:$0]  %s4059, 512, %s15, [#allocation22]
    $region61: #{teacher_forward.1} parent=1 // pred_fallthru
      _
    // Predicated region
    $region62: #{teacher_forward.1} parent=1 // pred_check
      _
    $region63: #{teacher_forward.1} parent=1 // pred_check_branch
      %4063 = sbr.rel (0) target = $region65
    $region64: #{teacher_forward.1} parent=1 // pred_region
      _
    $region65: #{teacher_forward.1} parent=1 // pred_fallthru
      _
    // Predicated region
    $region66: #{teacher_forward.1} parent=1 // pred_check
      _
    $region67: #{teacher_forward.1} parent=1 // pred_check_branch
      %4065 = sbr.rel (0) target = $region69
    $region68: #{teacher_forward.1} parent=1 // pred_region
      %4066 = dma.done [#allocation11], 128
    $region69: #{teacher_forward.1} parent=1 // pred_fallthru
      _
    // Predicated region
    $region70: #{teacher_forward.1} parent=1 // pred_check
      _
    $region71: #{teacher_forward.1} parent=1 // pred_check_branch
      %4068 = sbr.rel (0) target = $region73
    $region72: #{teacher_forward.1} parent=1 // pred_region
      %4069 = dma.done [#allocation19], 512
    $region73: #{teacher_forward.1} parent=1 // pred_fallthru
      _
    // Predicated region
    $region74: #{teacher_forward.1} parent=1 // pred_check
      _
    $region75: #{teacher_forward.1} parent=1 // pred_check_branch
      %4071 = sbr.rel (0) target = $region77
    $region76: #{teacher_forward.1} parent=1 // pred_region
      %4072 = dma.done [#allocation19], 512
    $region77: #{teacher_forward.1} parent=1 // pred_fallthru
      _
    // Predicated region
    $region78: #{teacher_forward.1} parent=1 // pred_check
      _
    $region79: #{teacher_forward.1} parent=1 // pred_check_branch
      %4074 = sbr.rel (0) target = $region81
    $region80: #{teacher_forward.1} parent=1 // pred_region
      %4075 = dma.done [#allocation22], 512
    $region81: #{teacher_forward.1} parent=1 // pred_fallthru
      _
    %4076 = vsyncpa [#allocation10], 1
    %4077 = vsyncpa [#allocation13], 1
    %4078 = vsyncpa [#allocation16], 1
    %4079 = vsyncpa [#allocation11], 1
    %4080 = vsyncpa [#allocation19], 1
    %4081 = vsyncpa [#allocation22], 1
  %4082 = vsyncmov [#allocation8]
  %s4083 = vpop.sfrf %4082
  %p4084 = scmp.eq.s32.totalorder %s4083, 0
  %p4085 = pneg %p4084
  %4087 = shalt.err (%p4085)
  %s4088 = scalar_lea.sflag [#allocation8], 1
  %4089 = vsyncmov %s4088
  %s4090 = vpop.sfrf %4089
  %p4091 = scmp.eq.s32.totalorder %s4090, 0
  %p4092 = pneg %p4091
  %4094 = shalt.err (%p4092)
  %s4095 = scalar_lea.sflag [#allocation8], 2
  %4096 = vsyncmov %s4095
  %s4097 = vpop.sfrf %4096
  %p4098 = scmp.eq.s32.totalorder %s4097, 0
  %p4099 = pneg %p4098
  %4101 = shalt.err (%p4099)
  %s4102 = scalar_lea.sflag [#allocation8], 3
  %4103 = vsyncmov %s4102
  %s4104 = vpop.sfrf %4103
  %p4105 = scmp.eq.s32.totalorder %s4104, 0
  %p4106 = pneg %p4105
  %4108 = shalt.err (%p4106)
  %s4109 = scalar_lea.sflag [#allocation8], 4
  %4110 = vsyncmov %s4109
  %s4111 = vpop.sfrf %4110
  %p4112 = scmp.eq.s32.totalorder %s4111, 0
  %p4113 = pneg %p4112
  %4115 = shalt.err (%p4113)
  %s4116 = scalar_lea.sflag [#allocation8], 5
  %4117 = vsyncmov %s4116
  %s4118 = vpop.sfrf %4117
  %p4119 = scmp.eq.s32.totalorder %s4118, 0
  %p4120 = pneg %p4119
  %4122 = shalt.err (%p4120)

</llo_original>
